<compile_context>
chip_gen: v7x
topology: tpu7x:2x2x1
jax: 0.10.0
libtpu: 0.0.40
codegen_flags: <defaults>
</compile_context>

<pallas_src>
import numpy as np

import jax
import jax.numpy as jnp
from jax.experimental import pallas as pl
from jax.experimental.pallas import tpu as pltpu

_IMG = 28                     # input spatial size, 1 channel
_K = 5                        # conv kernel size
_C1, _C2 = 6, 16              # conv channel counts
_C1_W = _IMG - _K + 1         # 24: conv1 output H/W
_P1_W = _C1_W // 2            # 12: pooled-1 H/W
_C2_W = _P1_W - _K + 1        # 8 : conv2 output H/W
_P2_W = _C2_W // 2            # 4 : pooled-2 H/W
_LANE = 128
_BAND_ROWS = _K + 1           # 6 input rows feed one pooled output row
_K1 = _BAND_ROWS * _IMG       # 168: conv1 band width (lanes)
_K2 = _BAND_ROWS * _LANE      # 768: conv2 band width (lanes, 128-padded rows)
_N_FUSED = 4 * _LANE          # 512: 4 pool variants x 128 lanes
_P1_COLS = _P1_W * _LANE      # 1536: pooled-1 VMEM scratch width
_OUT_PAD = _LANE              # fc3 output padded 10 -> 128 (lane-dense store)

_COMPUTE_DTYPE = jnp.bfloat16  # MXU-native input/weight dtype; f32 accumulate


# ---------------------------------------------------------------------------
# Fused Pallas kernel: whole LeNet forward for one batch tile.
# ---------------------------------------------------------------------------
def _lenet_fused_kernel(x_ref, w1_ref, b1_ref, w2_ref, b2_ref,
                        fw1_ref, fb1_ref, fw2_ref, fb2_ref, fw3_ref, fb3_ref,
                        o_ref, p1_ref):
    f32 = jnp.float32
    cdt = p1_ref.dtype            # compute dtype (bf16) for MXU operands
    tb = o_ref.shape[0]

    def dot(a, b):
        return jnp.dot(a, b, preferred_element_type=f32)

    def pool4(y):
        # y: (tb, 512).  The four 128-lane groups are the (dy, parity) pool
        # variants, so the 2x2 max-pool is a VPU max over vreg-aligned slices.
        return jnp.maximum(
            jnp.maximum(y[:, 0:_LANE], y[:, _LANE:2 * _LANE]),
            jnp.maximum(y[:, 2 * _LANE:3 * _LANE], y[:, 3 * _LANE:4 * _LANE]))

    # ---- conv1 (1->6, 5x5) + 2x2 max-pool + relu --------------------------
    # Pooled row `oh` needs input rows 2*oh .. 2*oh+5, i.e. the contiguous
    # lane band x[:, 56*oh : 56*oh+168].  One fused matmul per pooled row;
    # result goes to a 128-padded VMEM scratch row (no live-value spills).
    w1 = w1_ref[...]
    b1 = b1_ref[...]
    for oh in range(_P1_W):                                   # 12 pooled rows
        start = 2 * oh * _IMG
        band = x_ref[:, start:start + _K1]                    # (tb, 168)
        y = dot(band, w1)                                     # (tb, 512) f32
        p1_ref[:, oh * _LANE:(oh + 1) * _LANE] = (
            jnp.maximum(pool4(y) + b1, 0.0).astype(cdt))

    # ---- conv2 (6->16, 5x5) + 2x2 max-pool + relu + fc1 accumulation ------
    # Pooled-2 row `oh` needs pooled-1 rows 2*oh .. 2*oh+5 = aligned scratch
    # slice of 6*128 lanes.  Each pooled-2 row is fed straight into fc1
    # (accumulated), so it never needs to be concatenated or kept live.
    w2 = w2_ref[...]
    b2 = b2_ref[...]
    h1 = jnp.zeros((tb, _LANE), f32)
    for oh in range(_P2_W):                                   # 4 pooled rows
        start = 2 * oh * _LANE
        band = p1_ref[:, start:start + _K2]                   # (tb, 768)
        y = dot(band, w2)                                     # (tb, 512) f32
        p2 = jnp.maximum(pool4(y) + b2, 0.0).astype(cdt)      # (tb, 128)
        h1 = h1 + dot(p2, fw1_ref[oh * _LANE:(oh + 1) * _LANE, :])

    # ---- fc1 -> relu -> fc2 -> relu -> fc3 (all exact (K,128) MXU tiles) --
    h1 = jnp.maximum(h1 + fb1_ref[...], 0.0).astype(cdt)           # (tb, 128)
    h2 = jnp.maximum(dot(h1, fw2_ref[...]) + fb2_ref[...], 0.0).astype(cdt)
    o_ref[...] = (dot(h2, fw3_ref[...]) + fb3_ref[...]).astype(o_ref.dtype)


# ---------------------------------------------------------------------------
# One-time parameter packing (im2col / pool-variant grouping / NCHW flatten
# permutation / fc transposes / 128-lane padding all folded into the weights).
# ---------------------------------------------------------------------------
def _pack_conv1(w):
    """(6,1,5,5) torch conv1 weight -> (168, 512) packed band matrix.

    Band rows: (input_row_in_band * 28 + col).  Columns: group g = dy*2+parity
    occupies lanes [g*128, g*128+72) laid out (pooled_col j, cout) cout-minor.
    """
    w_np = np.asarray(w, np.float32)
    m = np.zeros((_K1, _N_FUSED), np.float32)
    for dy in (0, 1):
        for parity in (0, 1):
            g = dy * 2 + parity
            for j in range(_P1_W):
                w0 = 2 * j + parity
                for kh in range(_K):
                    for kw in range(_K):
                        row = (dy + kh) * _IMG + (w0 + kw)
                        col = g * _LANE + j * _C1
                        m[row, col:col + _C1] = w_np[:, 0, kh, kw]
    return m


def _pack_conv2(w):
    """(16,6,5,5) torch conv2 weight -> (768, 512) packed band matrix.

    Band rows follow the 128-padded pooled-1 scratch layout:
    row = band_row*128 + pooled1_col*6 + cin.  Columns as in _pack_conv1 with
    (pooled2_col j, cout) cout-minor, 64 used lanes per 128-lane group.
    """
    w_np = np.asarray(w, np.float32)
    m = np.zeros((_K2, _N_FUSED), np.float32)
    for dy in (0, 1):
        for parity in (0, 1):
            g = dy * 2 + parity
            for j in range(_P2_W):
                w0 = 2 * j + parity
                for kh in range(_K):
                    for kw in range(_K):
                        for ci in range(_C1):
                            row = (dy + kh) * _LANE + (w0 + kw) * _C1 + ci
                            col = g * _LANE + j * _C2
                            m[row, col:col + _C2] = w_np[:, ci, kh, kw]
    return m


def _pack_fc1(fw1):
    """(120,256) torch fc1 weight -> (512, 128) packed, pre-transposed.

    PyTorch flatten is NCHW: feature = c*16 + r*4 + j.  The kernel's pooled-2
    row r has layout lane = j*16 + c (zero-padded to 128); rows stack by r.
    """
    fw1_np = np.asarray(fw1, np.float32)
    m = np.zeros((_P2_W * _LANE, _LANE), np.float32)
    for r in range(_P2_W):
        for j in range(_P2_W):
            for c in range(_C2):
                src = c * _P2_W * _P2_W + r * _P2_W + j
                m[r * _LANE + j * _C2 + c, :120] = fw1_np[:, src]
    return m


def _pack_bias_tiled(b, reps):
    b_np = np.asarray(b, np.float32)
    out = np.zeros((1, _LANE), np.float32)
    n = b_np.shape[0]
    for r in range(reps):
        out[0, r * n:(r + 1) * n] = b_np
    return out


def _pad_2d(a, rows, cols):
    a_np = np.asarray(a, np.float32)
    out = np.zeros((rows, cols), np.float32)
    out[:a_np.shape[0], :a_np.shape[1]] = a_np
    return out


def pack_params(params, compute_dtype=_COMPUTE_DTYPE):
    """Build kernel-ready effective weights once (outside the hot path)."""
    cdt = compute_dtype
    f32 = jnp.float32

    w1 = jnp.asarray(_pack_conv1(params["w1"]), cdt)                # (168,512)
    b1 = jnp.asarray(_pack_bias_tiled(params["b1"], _P1_W), f32)    # (1,128)
    w2 = jnp.asarray(_pack_conv2(params["w2"]), cdt)                # (768,512)
    b2 = jnp.asarray(_pack_bias_tiled(params["b2"], _P2_W), f32)    # (1,128)

    fw1 = jnp.asarray(_pack_fc1(params["fw1"]), cdt)                # (512,128)
    fb1 = jnp.asarray(_pad_2d(np.asarray(params["fb1"]).reshape(1, -1),
                              1, _LANE), f32)
    fw2 = jnp.asarray(_pad_2d(np.asarray(params["fw2"]).T, _LANE, _LANE), cdt)
    fb2 = jnp.asarray(_pad_2d(np.asarray(params["fb2"]).reshape(1, -1),
                              1, _LANE), f32)
    fw3 = jnp.asarray(_pad_2d(np.asarray(params["fw3"]).T, _LANE, _LANE), cdt)
    fb3 = jnp.asarray(_pad_2d(np.asarray(params["fb3"]).reshape(1, -1),
                              1, _LANE), f32)

    return (w1, b1, w2, b2, fw1, fb1, fw2, fb2, fw3, fb3)


# ---------------------------------------------------------------------------
# Forward wrapper
# ---------------------------------------------------------------------------
def _round_up(v, m):
    return (v + m - 1) // m * m


def _cdiv(a, b):
    return -(-a // b)


def _min_grid_steps():
    # v7x has 2 TensorCores per chip; give the "parallel" batch axis >= 2
    # grid steps so both cores get work.  Other generations: 1.
    try:
        kind = jax.devices()[0].device_kind.lower()
    except Exception:
        return 1
    return 2 if "v7" in kind else 1


def _choose_batch_tile(b, max_tile=512, min_steps=1):
    # Adaptive tile: minimize zero-row padding for ragged batches while
    # staying sublane-pack aligned (16 rows covers bf16 packing).
    # tb <= 512 keeps the per-step footprint ~5 MB (bf16), safe on v5e/v6e/v7x.
    b_al = _round_up(max(int(b), 1), 16)
    n_steps = max(_cdiv(b_al, max_tile), min_steps)
    return _round_up(_cdiv(b_al, n_steps), 16)


def lenet_forward(packed, x_nchw):
    """x_nchw: (B, 1, 28, 28) float32 (PyTorch NCHW) -> (B, 10) logits f32."""
    b = x_nchw.shape[0]
    cdt = packed[0].dtype
    # C=1, so NCHW flatten == (h, w) flatten.  Cast before pallas_call so the
    # input DMA (the dominant HBM stream) shrinks too.
    x = x_nchw.reshape(b, _IMG * _IMG).astype(cdt)

    tb = _choose_batch_tile(b, max_tile=512, min_steps=_min_grid_steps())
    b_pad = _round_up(b, tb)
    if b_pad != b:
        x = jnp.pad(x, ((0, b_pad - b), (0, 0)))

    batch_spec = lambda n: pl.BlockSpec((tb, n), lambda i: (i, 0))
    const_spec = lambda a: pl.BlockSpec(a.shape, lambda i: (0, 0))

    out = pl.pallas_call(
        _lenet_fused_kernel,
        out_shape=jax.ShapeDtypeStruct((b_pad, _OUT_PAD), jnp.float32),
        grid=(b_pad // tb,),
        in_specs=[batch_spec(_IMG * _IMG)] + [const_spec(a) for a in packed],
        out_specs=batch_spec(_OUT_PAD),
        scratch_shapes=[pltpu.VMEM((tb, _P1_COLS), cdt)],   # pooled-1 rows
        compiler_params=pltpu.CompilerParams(
            dimension_semantics=("parallel",),               # 2-TC on v7x
            vmem_limit_bytes=32 * 1024 * 1024,               # ~5 MB actual
        ),
    )(x, *packed)
    return out[:b, :10]


# ---------------------------------------------------------------------------
# Parameters (PyTorch-default-style init, same layout as the nn.Module)
# ---------------------------------------------------------------------------
def init_params(key):
    ks = jax.random.split(key, 10)

    def u(k, shape, fan_in):
        bound = 1.0 / jnp.sqrt(jnp.float32(fan_in))
        return jax.random.uniform(k, shape, jnp.float32, -bound, bound)

    return dict(
        w1=u(ks[0], (6, 1, 5, 5), 1 * 5 * 5),   b1=u(ks[1], (6,), 1 * 5 * 5),
        w2=u(ks[2], (16, 6, 5, 5), 6 * 5 * 5),  b2=u(ks[3], (16,), 6 * 5 * 5),
        fw1=u(ks[4], (120, 256), 256),          fb1=u(ks[5], (120,), 256),
        fw2=u(ks[6], (84, 120), 120),           fb2=u(ks[7], (84,), 120),
        fw3=u(ks[8], (10, 84), 84),             fb3=u(ks[9], (10,), 84),
    )


# ---------------------------------------------------------------------------
# Plain-JAX reference (no Pallas).  `compute_dtype` mirrors the kernel's
# input/weight/activation rounding points (accumulation stays f32 both ways),
# so the comparison against the Pallas kernel can be tight.
# ---------------------------------------------------------------------------
def _reference_forward(params, x_nchw, compute_dtype=jnp.float32):
    f32 = jnp.float32
    hp = jax.lax.Precision.HIGHEST
    dn = ("NCHW", "OIHW", "NCHW")

    def q(a):   # emulate the kernel's bf16 rounding of MXU operands
        return jnp.asarray(a, f32).astype(compute_dtype).astype(f32)

    def conv(x, w, b):
        y = jax.lax.conv_general_dilated(q(x), q(w), (1, 1), "VALID",
                                         dimension_numbers=dn, precision=hp)
        return y + jnp.asarray(b, f32)[None, :, None, None]

    def pool2(x):
        return jax.lax.reduce_window(x, -jnp.inf, jax.lax.max,
                                     (1, 1, 2, 2), (1, 1, 2, 2), "VALID")

    x = x_nchw.astype(f32)
    x = jnp.maximum(pool2(conv(x, params["w1"], params["b1"])), 0.0)
    x = jnp.maximum(pool2(conv(x, params["w2"], params["b2"])), 0.0)
    x = x.reshape(x.shape[0], -1)                      # NCHW flatten (c, h, w)
    x = jnp.maximum(jnp.dot(q(x), q(params["fw1"]).T, precision=hp)
                    + params["fb1"], 0.0)
    x = jnp.maximum(jnp.dot(q(x), q(params["fw2"]).T, precision=hp)
                    + params["fb2"], 0.0)
    return jnp.dot(q(x), q(params["fw3"]).T, precision=hp) + params["fb3"]


if __name__ == "__main__":
    key = jax.random.PRNGKey(0)
    pkey, xkey = jax.random.split(key)
    params = init_params(pkey)
    packed = pack_params(params)

    # LeNet's fc1 (16*4*4 features) implies 28x28 single-channel inputs.
    x = jax.random.normal(xkey, (2, 1, 28, 28), jnp.float32)

    fwd = jax.jit(lenet_forward)
    out = jax.block_until_ready(fwd(packed, x))
    assert out.shape == (2, 10) and out.dtype == jnp.float32

    # Tight check vs a reference that applies the same bf16 operand rounding
    # (remaining differences are f32 accumulation order only).
    ref_q = jax.block_until_ready(
        _reference_forward(params, x, compute_dtype=_COMPUTE_DTYPE))
    err_q = float(jnp.max(jnp.abs(out - ref_q)))
    assert err_q < 5e-3, f"mismatch vs cast-matched reference: {err_q}"

    # Loose sanity bound on bf16-compute drift vs the pure-f32 PyTorch spec.
    ref_f = jax.block_until_ready(
        _reference_forward(params, x, compute_dtype=jnp.float32))
    err_f = float(jnp.max(jnp.abs(out - ref_f)))
    assert err_f < 2.5e-1, f"bf16 drift vs f32 reference too large: {err_f}"

    print("KERNEL_OK")
</pallas_src>

<mosaic_0001>
module attributes {stable_mosaic.version = 11 : i64} {
  func.func @_lenet_fused_kernel(%arg0: i32, %arg1: memref<16x784xbf16, #tpu.memory_space<vmem>>, %arg2: memref<168x512xbf16, #tpu.memory_space<vmem>>, %arg3: memref<1x128xf32, #tpu.memory_space<vmem>>, %arg4: memref<768x512xbf16, #tpu.memory_space<vmem>>, %arg5: memref<1x128xf32, #tpu.memory_space<vmem>>, %arg6: memref<512x128xbf16, #tpu.memory_space<vmem>>, %arg7: memref<1x128xf32, #tpu.memory_space<vmem>>, %arg8: memref<128x128xbf16, #tpu.memory_space<vmem>>, %arg9: memref<1x128xf32, #tpu.memory_space<vmem>>, %arg10: memref<128x128xbf16, #tpu.memory_space<vmem>>, %arg11: memref<1x128xf32, #tpu.memory_space<vmem>>, %arg12: memref<16x128xf32, #tpu.memory_space<vmem>>, %arg13: memref<16x1536xbf16, #tpu.memory_space<vmem>>) attributes {dimension_semantics = [#tpu.dimension_semantics<parallel>], iteration_bounds = array<i64: 1>, scalar_prefetch = 0 : i64, scratch_operands = 1 : i64, tpu.core_type = #tpu.core_type<tc>, window_params = [{transform_indices = @transform_0, window_bounds = array<i64: 16, 784>}, {pipeline_mode = #tpu.pipeline_mode<synchronous>, transform_indices = @transform_1, window_bounds = array<i64: 168, 512>}, {pipeline_mode = #tpu.pipeline_mode<synchronous>, transform_indices = @transform_2, window_bounds = array<i64: 1, 128>}, {pipeline_mode = #tpu.pipeline_mode<synchronous>, transform_indices = @transform_3, window_bounds = array<i64: 768, 512>}, {pipeline_mode = #tpu.pipeline_mode<synchronous>, transform_indices = @transform_4, window_bounds = array<i64: 1, 128>}, {pipeline_mode = #tpu.pipeline_mode<synchronous>, transform_indices = @transform_5, window_bounds = array<i64: 512, 128>}, {pipeline_mode = #tpu.pipeline_mode<synchronous>, transform_indices = @transform_6, window_bounds = array<i64: 1, 128>}, {pipeline_mode = #tpu.pipeline_mode<synchronous>, transform_indices = @transform_7, window_bounds = array<i64: 128, 128>}, {pipeline_mode = #tpu.pipeline_mode<synchronous>, transform_indices = @transform_8, window_bounds = array<i64: 1, 128>}, {pipeline_mode = #tpu.pipeline_mode<synchronous>, transform_indices = @transform_9, window_bounds = array<i64: 128, 128>}, {pipeline_mode = #tpu.pipeline_mode<synchronous>, transform_indices = @transform_10, window_bounds = array<i64: 1, 128>}, {transform_indices = @transform_11, window_bounds = array<i64: 16, 128>}]} {
    %c0 = arith.constant 0 : index
    %c0_0 = arith.constant 0 : index
    %0 = vector.load %arg2[%c0, %c0_0] : memref<168x512xbf16, #tpu.memory_space<vmem>>, vector<168x512xbf16>
    %c0_1 = arith.constant 0 : index
    %c0_2 = arith.constant 0 : index
    %1 = vector.load %arg3[%c0_1, %c0_2] : memref<1x128xf32, #tpu.memory_space<vmem>>, vector<1x128xf32>
    %c0_3 = arith.constant 0 : index
    %c0_4 = arith.constant 0 : index
    %2 = vector.load %arg1[%c0_3, %c0_4] : memref<16x784xbf16, #tpu.memory_space<vmem>>, vector<16x168xbf16>
    %cst = arith.constant dense<0.000000e+00> : vector<16x512xf32>
    %3 = tpu.matmul %2, %0, %cst {dimension_numbers = #tpu.dot_dimension_numbers<[1], [0], [0], [1], [0, 0, 1, 1], [], []>} : vector<16x168xbf16>, vector<168x512xbf16>, vector<16x512xf32> -> vector<16x512xf32>
    %4 = vector.extract_strided_slice %3 {offsets = [0, 0], sizes = [16, 128], strides = [1, 1]} : vector<16x512xf32> to vector<16x128xf32>
    %5 = vector.extract_strided_slice %3 {offsets = [0, 128], sizes = [16, 128], strides = [1, 1]} : vector<16x512xf32> to vector<16x128xf32>
    %6 = arith.maximumf %4, %5 : vector<16x128xf32>
    %7 = vector.extract_strided_slice %3 {offsets = [0, 256], sizes = [16, 128], strides = [1, 1]} : vector<16x512xf32> to vector<16x128xf32>
    %8 = vector.extract_strided_slice %3 {offsets = [0, 384], sizes = [16, 128], strides = [1, 1]} : vector<16x512xf32> to vector<16x128xf32>
    %9 = arith.maximumf %7, %8 : vector<16x128xf32>
    %10 = arith.maximumf %6, %9 : vector<16x128xf32>
    %11 = vector.broadcast %1 : vector<1x128xf32> to vector<16x128xf32>
    %12 = arith.addf %10, %11 : vector<16x128xf32>
    %cst_5 = arith.constant 0.000000e+00 : f32
    %13 = vector.broadcast %cst_5 : f32 to vector<16x128xf32>
    %14 = arith.maximumf %12, %13 : vector<16x128xf32>
    %15 = arith.truncf %14 : vector<16x128xf32> to vector<16x128xbf16>
    %c0_6 = arith.constant 0 : index
    %c0_7 = arith.constant 0 : index
    %16 = vector.load %arg13[%c0_6, %c0_7] : memref<16x1536xbf16, #tpu.memory_space<vmem>>, vector<16x128xbf16>
    tpu.vector_store %arg13[%c0_6, %c0_7], %15 {strides = array<i32>} : memref<16x1536xbf16, #tpu.memory_space<vmem>>, vector<16x128xbf16>,
    %c0_8 = arith.constant 0 : index
    %c56 = arith.constant 56 : index
    %17 = vector.load %arg1[%c0_8, %c56] : memref<16x784xbf16, #tpu.memory_space<vmem>>, vector<16x168xbf16>
    %cst_9 = arith.constant dense<0.000000e+00> : vector<16x512xf32>
    %18 = tpu.matmul %17, %0, %cst_9 {dimension_numbers = #tpu.dot_dimension_numbers<[1], [0], [0], [1], [0, 0, 1, 1], [], []>} : vector<16x168xbf16>, vector<168x512xbf16>, vector<16x512xf32> -> vector<16x512xf32>
    %19 = vector.extract_strided_slice %18 {offsets = [0, 0], sizes = [16, 128], strides = [1, 1]} : vector<16x512xf32> to vector<16x128xf32>
    %20 = vector.extract_strided_slice %18 {offsets = [0, 128], sizes = [16, 128], strides = [1, 1]} : vector<16x512xf32> to vector<16x128xf32>
    %21 = arith.maximumf %19, %20 : vector<16x128xf32>
    %22 = vector.extract_strided_slice %18 {offsets = [0, 256], sizes = [16, 128], strides = [1, 1]} : vector<16x512xf32> to vector<16x128xf32>
    %23 = vector.extract_strided_slice %18 {offsets = [0, 384], sizes = [16, 128], strides = [1, 1]} : vector<16x512xf32> to vector<16x128xf32>
    %24 = arith.maximumf %22, %23 : vector<16x128xf32>
    %25 = arith.maximumf %21, %24 : vector<16x128xf32>
    %26 = vector.broadcast %1 : vector<1x128xf32> to vector<16x128xf32>
    %27 = arith.addf %25, %26 : vector<16x128xf32>
    %cst_10 = arith.constant 0.000000e+00 : f32
    %28 = vector.broadcast %cst_10 : f32 to vector<16x128xf32>
    %29 = arith.maximumf %27, %28 : vector<16x128xf32>
    %30 = arith.truncf %29 : vector<16x128xf32> to vector<16x128xbf16>
    %c0_11 = arith.constant 0 : index
    %c128 = arith.constant 128 : index
    %31 = vector.load %arg13[%c0_11, %c128] : memref<16x1536xbf16, #tpu.memory_space<vmem>>, vector<16x128xbf16>
    tpu.vector_store %arg13[%c0_11, %c128], %30 {strides = array<i32>} : memref<16x1536xbf16, #tpu.memory_space<vmem>>, vector<16x128xbf16>,
    %c0_12 = arith.constant 0 : index
    %c112 = arith.constant 112 : index
    %32 = vector.load %arg1[%c0_12, %c112] : memref<16x784xbf16, #tpu.memory_space<vmem>>, vector<16x168xbf16>
    %cst_13 = arith.constant dense<0.000000e+00> : vector<16x512xf32>
    %33 = tpu.matmul %32, %0, %cst_13 {dimension_numbers = #tpu.dot_dimension_numbers<[1], [0], [0], [1], [0, 0, 1, 1], [], []>} : vector<16x168xbf16>, vector<168x512xbf16>, vector<16x512xf32> -> vector<16x512xf32>
    %34 = vector.extract_strided_slice %33 {offsets = [0, 0], sizes = [16, 128], strides = [1, 1]} : vector<16x512xf32> to vector<16x128xf32>
    %35 = vector.extract_strided_slice %33 {offsets = [0, 128], sizes = [16, 128], strides = [1, 1]} : vector<16x512xf32> to vector<16x128xf32>
    %36 = arith.maximumf %34, %35 : vector<16x128xf32>
    %37 = vector.extract_strided_slice %33 {offsets = [0, 256], sizes = [16, 128], strides = [1, 1]} : vector<16x512xf32> to vector<16x128xf32>
    %38 = vector.extract_strided_slice %33 {offsets = [0, 384], sizes = [16, 128], strides = [1, 1]} : vector<16x512xf32> to vector<16x128xf32>
    %39 = arith.maximumf %37, %38 : vector<16x128xf32>
    %40 = arith.maximumf %36, %39 : vector<16x128xf32>
    %41 = vector.broadcast %1 : vector<1x128xf32> to vector<16x128xf32>
    %42 = arith.addf %40, %41 : vector<16x128xf32>
    %cst_14 = arith.constant 0.000000e+00 : f32
    %43 = vector.broadcast %cst_14 : f32 to vector<16x128xf32>
    %44 = arith.maximumf %42, %43 : vector<16x128xf32>
    %45 = arith.truncf %44 : vector<16x128xf32> to vector<16x128xbf16>
    %c0_15 = arith.constant 0 : index
    %c256 = arith.constant 256 : index
    %46 = vector.load %arg13[%c0_15, %c256] : memref<16x1536xbf16, #tpu.memory_space<vmem>>, vector<16x128xbf16>
    tpu.vector_store %arg13[%c0_15, %c256], %45 {strides = array<i32>} : memref<16x1536xbf16, #tpu.memory_space<vmem>>, vector<16x128xbf16>,
    %c0_16 = arith.constant 0 : index
    %c168 = arith.constant 168 : index
    %47 = vector.load %arg1[%c0_16, %c168] : memref<16x784xbf16, #tpu.memory_space<vmem>>, vector<16x168xbf16>
    %cst_17 = arith.constant dense<0.000000e+00> : vector<16x512xf32>
    %48 = tpu.matmul %47, %0, %cst_17 {dimension_numbers = #tpu.dot_dimension_numbers<[1], [0], [0], [1], [0, 0, 1, 1], [], []>} : vector<16x168xbf16>, vector<168x512xbf16>, vector<16x512xf32> -> vector<16x512xf32>
    %49 = vector.extract_strided_slice %48 {offsets = [0, 0], sizes = [16, 128], strides = [1, 1]} : vector<16x512xf32> to vector<16x128xf32>
    %50 = vector.extract_strided_slice %48 {offsets = [0, 128], sizes = [16, 128], strides = [1, 1]} : vector<16x512xf32> to vector<16x128xf32>
    %51 = arith.maximumf %49, %50 : vector<16x128xf32>
    %52 = vector.extract_strided_slice %48 {offsets = [0, 256], sizes = [16, 128], strides = [1, 1]} : vector<16x512xf32> to vector<16x128xf32>
    %53 = vector.extract_strided_slice %48 {offsets = [0, 384], sizes = [16, 128], strides = [1, 1]} : vector<16x512xf32> to vector<16x128xf32>
    %54 = arith.maximumf %52, %53 : vector<16x128xf32>
    %55 = arith.maximumf %51, %54 : vector<16x128xf32>
    %56 = vector.broadcast %1 : vector<1x128xf32> to vector<16x128xf32>
    %57 = arith.addf %55, %56 : vector<16x128xf32>
    %cst_18 = arith.constant 0.000000e+00 : f32
    %58 = vector.broadcast %cst_18 : f32 to vector<16x128xf32>
    %59 = arith.maximumf %57, %58 : vector<16x128xf32>
    %60 = arith.truncf %59 : vector<16x128xf32> to vector<16x128xbf16>
    %c0_19 = arith.constant 0 : index
    %c384 = arith.constant 384 : index
    %61 = vector.load %arg13[%c0_19, %c384] : memref<16x1536xbf16, #tpu.memory_space<vmem>>, vector<16x128xbf16>
    tpu.vector_store %arg13[%c0_19, %c384], %60 {strides = array<i32>} : memref<16x1536xbf16, #tpu.memory_space<vmem>>, vector<16x128xbf16>,
    %c0_20 = arith.constant 0 : index
    %c224 = arith.constant 224 : index
    %62 = vector.load %arg1[%c0_20, %c224] : memref<16x784xbf16, #tpu.memory_space<vmem>>, vector<16x168xbf16>
    %cst_21 = arith.constant dense<0.000000e+00> : vector<16x512xf32>
    %63 = tpu.matmul %62, %0, %cst_21 {dimension_numbers = #tpu.dot_dimension_numbers<[1], [0], [0], [1], [0, 0, 1, 1], [], []>} : vector<16x168xbf16>, vector<168x512xbf16>, vector<16x512xf32> -> vector<16x512xf32>
    %64 = vector.extract_strided_slice %63 {offsets = [0, 0], sizes = [16, 128], strides = [1, 1]} : vector<16x512xf32> to vector<16x128xf32>
    %65 = vector.extract_strided_slice %63 {offsets = [0, 128], sizes = [16, 128], strides = [1, 1]} : vector<16x512xf32> to vector<16x128xf32>
    %66 = arith.maximumf %64, %65 : vector<16x128xf32>
    %67 = vector.extract_strided_slice %63 {offsets = [0, 256], sizes = [16, 128], strides = [1, 1]} : vector<16x512xf32> to vector<16x128xf32>
    %68 = vector.extract_strided_slice %63 {offsets = [0, 384], sizes = [16, 128], strides = [1, 1]} : vector<16x512xf32> to vector<16x128xf32>
    %69 = arith.maximumf %67, %68 : vector<16x128xf32>
    %70 = arith.maximumf %66, %69 : vector<16x128xf32>
    %71 = vector.broadcast %1 : vector<1x128xf32> to vector<16x128xf32>
    %72 = arith.addf %70, %71 : vector<16x128xf32>
    %cst_22 = arith.constant 0.000000e+00 : f32
    %73 = vector.broadcast %cst_22 : f32 to vector<16x128xf32>
    %74 = arith.maximumf %72, %73 : vector<16x128xf32>
    %75 = arith.truncf %74 : vector<16x128xf32> to vector<16x128xbf16>
    %c0_23 = arith.constant 0 : index
    %c512 = arith.constant 512 : index
    %76 = vector.load %arg13[%c0_23, %c512] : memref<16x1536xbf16, #tpu.memory_space<vmem>>, vector<16x128xbf16>
    tpu.vector_store %arg13[%c0_23, %c512], %75 {strides = array<i32>} : memref<16x1536xbf16, #tpu.memory_space<vmem>>, vector<16x128xbf16>,
    %c0_24 = arith.constant 0 : index
    %c280 = arith.constant 280 : index
    %77 = vector.load %arg1[%c0_24, %c280] : memref<16x784xbf16, #tpu.memory_space<vmem>>, vector<16x168xbf16>
    %cst_25 = arith.constant dense<0.000000e+00> : vector<16x512xf32>
    %78 = tpu.matmul %77, %0, %cst_25 {dimension_numbers = #tpu.dot_dimension_numbers<[1], [0], [0], [1], [0, 0, 1, 1], [], []>} : vector<16x168xbf16>, vector<168x512xbf16>, vector<16x512xf32> -> vector<16x512xf32>
    %79 = vector.extract_strided_slice %78 {offsets = [0, 0], sizes = [16, 128], strides = [1, 1]} : vector<16x512xf32> to vector<16x128xf32>
    %80 = vector.extract_strided_slice %78 {offsets = [0, 128], sizes = [16, 128], strides = [1, 1]} : vector<16x512xf32> to vector<16x128xf32>
    %81 = arith.maximumf %79, %80 : vector<16x128xf32>
    %82 = vector.extract_strided_slice %78 {offsets = [0, 256], sizes = [16, 128], strides = [1, 1]} : vector<16x512xf32> to vector<16x128xf32>
    %83 = vector.extract_strided_slice %78 {offsets = [0, 384], sizes = [16, 128], strides = [1, 1]} : vector<16x512xf32> to vector<16x128xf32>
    %84 = arith.maximumf %82, %83 : vector<16x128xf32>
    %85 = arith.maximumf %81, %84 : vector<16x128xf32>
    %86 = vector.broadcast %1 : vector<1x128xf32> to vector<16x128xf32>
    %87 = arith.addf %85, %86 : vector<16x128xf32>
    %cst_26 = arith.constant 0.000000e+00 : f32
    %88 = vector.broadcast %cst_26 : f32 to vector<16x128xf32>
    %89 = arith.maximumf %87, %88 : vector<16x128xf32>
    %90 = arith.truncf %89 : vector<16x128xf32> to vector<16x128xbf16>
    %c0_27 = arith.constant 0 : index
    %c640 = arith.constant 640 : index
    %91 = vector.load %arg13[%c0_27, %c640] : memref<16x1536xbf16, #tpu.memory_space<vmem>>, vector<16x128xbf16>
    tpu.vector_store %arg13[%c0_27, %c640], %90 {strides = array<i32>} : memref<16x1536xbf16, #tpu.memory_space<vmem>>, vector<16x128xbf16>,
    %c0_28 = arith.constant 0 : index
    %c336 = arith.constant 336 : index
    %92 = vector.load %arg1[%c0_28, %c336] : memref<16x784xbf16, #tpu.memory_space<vmem>>, vector<16x168xbf16>
    %cst_29 = arith.constant dense<0.000000e+00> : vector<16x512xf32>
    %93 = tpu.matmul %92, %0, %cst_29 {dimension_numbers = #tpu.dot_dimension_numbers<[1], [0], [0], [1], [0, 0, 1, 1], [], []>} : vector<16x168xbf16>, vector<168x512xbf16>, vector<16x512xf32> -> vector<16x512xf32>
    %94 = vector.extract_strided_slice %93 {offsets = [0, 0], sizes = [16, 128], strides = [1, 1]} : vector<16x512xf32> to vector<16x128xf32>
    %95 = vector.extract_strided_slice %93 {offsets = [0, 128], sizes = [16, 128], strides = [1, 1]} : vector<16x512xf32> to vector<16x128xf32>
    %96 = arith.maximumf %94, %95 : vector<16x128xf32>
    %97 = vector.extract_strided_slice %93 {offsets = [0, 256], sizes = [16, 128], strides = [1, 1]} : vector<16x512xf32> to vector<16x128xf32>
    %98 = vector.extract_strided_slice %93 {offsets = [0, 384], sizes = [16, 128], strides = [1, 1]} : vector<16x512xf32> to vector<16x128xf32>
    %99 = arith.maximumf %97, %98 : vector<16x128xf32>
    %100 = arith.maximumf %96, %99 : vector<16x128xf32>
    %101 = vector.broadcast %1 : vector<1x128xf32> to vector<16x128xf32>
    %102 = arith.addf %100, %101 : vector<16x128xf32>
    %cst_30 = arith.constant 0.000000e+00 : f32
    %103 = vector.broadcast %cst_30 : f32 to vector<16x128xf32>
    %104 = arith.maximumf %102, %103 : vector<16x128xf32>
    %105 = arith.truncf %104 : vector<16x128xf32> to vector<16x128xbf16>
    %c0_31 = arith.constant 0 : index
    %c768 = arith.constant 768 : index
    %106 = vector.load %arg13[%c0_31, %c768] : memref<16x1536xbf16, #tpu.memory_space<vmem>>, vector<16x128xbf16>
    tpu.vector_store %arg13[%c0_31, %c768], %105 {strides = array<i32>} : memref<16x1536xbf16, #tpu.memory_space<vmem>>, vector<16x128xbf16>,
    %c0_32 = arith.constant 0 : index
    %c392 = arith.constant 392 : index
    %107 = vector.load %arg1[%c0_32, %c392] : memref<16x784xbf16, #tpu.memory_space<vmem>>, vector<16x168xbf16>
    %cst_33 = arith.constant dense<0.000000e+00> : vector<16x512xf32>
    %108 = tpu.matmul %107, %0, %cst_33 {dimension_numbers = #tpu.dot_dimension_numbers<[1], [0], [0], [1], [0, 0, 1, 1], [], []>} : vector<16x168xbf16>, vector<168x512xbf16>, vector<16x512xf32> -> vector<16x512xf32>
    %109 = vector.extract_strided_slice %108 {offsets = [0, 0], sizes = [16, 128], strides = [1, 1]} : vector<16x512xf32> to vector<16x128xf32>
    %110 = vector.extract_strided_slice %108 {offsets = [0, 128], sizes = [16, 128], strides = [1, 1]} : vector<16x512xf32> to vector<16x128xf32>
    %111 = arith.maximumf %109, %110 : vector<16x128xf32>
    %112 = vector.extract_strided_slice %108 {offsets = [0, 256], sizes = [16, 128], strides = [1, 1]} : vector<16x512xf32> to vector<16x128xf32>
    %113 = vector.extract_strided_slice %108 {offsets = [0, 384], sizes = [16, 128], strides = [1, 1]} : vector<16x512xf32> to vector<16x128xf32>
    %114 = arith.maximumf %112, %113 : vector<16x128xf32>
    %115 = arith.maximumf %111, %114 : vector<16x128xf32>
    %116 = vector.broadcast %1 : vector<1x128xf32> to vector<16x128xf32>
    %117 = arith.addf %115, %116 : vector<16x128xf32>
    %cst_34 = arith.constant 0.000000e+00 : f32
    %118 = vector.broadcast %cst_34 : f32 to vector<16x128xf32>
    %119 = arith.maximumf %117, %118 : vector<16x128xf32>
    %120 = arith.truncf %119 : vector<16x128xf32> to vector<16x128xbf16>
    %c0_35 = arith.constant 0 : index
    %c896 = arith.constant 896 : index
    %121 = vector.load %arg13[%c0_35, %c896] : memref<16x1536xbf16, #tpu.memory_space<vmem>>, vector<16x128xbf16>
    tpu.vector_store %arg13[%c0_35, %c896], %120 {strides = array<i32>} : memref<16x1536xbf16, #tpu.memory_space<vmem>>, vector<16x128xbf16>,
    %c0_36 = arith.constant 0 : index
    %c448 = arith.constant 448 : index
    %122 = vector.load %arg1[%c0_36, %c448] : memref<16x784xbf16, #tpu.memory_space<vmem>>, vector<16x168xbf16>
    %cst_37 = arith.constant dense<0.000000e+00> : vector<16x512xf32>
    %123 = tpu.matmul %122, %0, %cst_37 {dimension_numbers = #tpu.dot_dimension_numbers<[1], [0], [0], [1], [0, 0, 1, 1], [], []>} : vector<16x168xbf16>, vector<168x512xbf16>, vector<16x512xf32> -> vector<16x512xf32>
    %124 = vector.extract_strided_slice %123 {offsets = [0, 0], sizes = [16, 128], strides = [1, 1]} : vector<16x512xf32> to vector<16x128xf32>
    %125 = vector.extract_strided_slice %123 {offsets = [0, 128], sizes = [16, 128], strides = [1, 1]} : vector<16x512xf32> to vector<16x128xf32>
    %126 = arith.maximumf %124, %125 : vector<16x128xf32>
    %127 = vector.extract_strided_slice %123 {offsets = [0, 256], sizes = [16, 128], strides = [1, 1]} : vector<16x512xf32> to vector<16x128xf32>
    %128 = vector.extract_strided_slice %123 {offsets = [0, 384], sizes = [16, 128], strides = [1, 1]} : vector<16x512xf32> to vector<16x128xf32>
    %129 = arith.maximumf %127, %128 : vector<16x128xf32>
    %130 = arith.maximumf %126, %129 : vector<16x128xf32>
    %131 = vector.broadcast %1 : vector<1x128xf32> to vector<16x128xf32>
    %132 = arith.addf %130, %131 : vector<16x128xf32>
    %cst_38 = arith.constant 0.000000e+00 : f32
    %133 = vector.broadcast %cst_38 : f32 to vector<16x128xf32>
    %134 = arith.maximumf %132, %133 : vector<16x128xf32>
    %135 = arith.truncf %134 : vector<16x128xf32> to vector<16x128xbf16>
    %c0_39 = arith.constant 0 : index
    %c1024 = arith.constant 1024 : index
    %136 = vector.load %arg13[%c0_39, %c1024] : memref<16x1536xbf16, #tpu.memory_space<vmem>>, vector<16x128xbf16>
    tpu.vector_store %arg13[%c0_39, %c1024], %135 {strides = array<i32>} : memref<16x1536xbf16, #tpu.memory_space<vmem>>, vector<16x128xbf16>,
    %c0_40 = arith.constant 0 : index
    %c504 = arith.constant 504 : index
    %137 = vector.load %arg1[%c0_40, %c504] : memref<16x784xbf16, #tpu.memory_space<vmem>>, vector<16x168xbf16>
    %cst_41 = arith.constant dense<0.000000e+00> : vector<16x512xf32>
    %138 = tpu.matmul %137, %0, %cst_41 {dimension_numbers = #tpu.dot_dimension_numbers<[1], [0], [0], [1], [0, 0, 1, 1], [], []>} : vector<16x168xbf16>, vector<168x512xbf16>, vector<16x512xf32> -> vector<16x512xf32>
    %139 = vector.extract_strided_slice %138 {offsets = [0, 0], sizes = [16, 128], strides = [1, 1]} : vector<16x512xf32> to vector<16x128xf32>
    %140 = vector.extract_strided_slice %138 {offsets = [0, 128], sizes = [16, 128], strides = [1, 1]} : vector<16x512xf32> to vector<16x128xf32>
    %141 = arith.maximumf %139, %140 : vector<16x128xf32>
    %142 = vector.extract_strided_slice %138 {offsets = [0, 256], sizes = [16, 128], strides = [1, 1]} : vector<16x512xf32> to vector<16x128xf32>
    %143 = vector.extract_strided_slice %138 {offsets = [0, 384], sizes = [16, 128], strides = [1, 1]} : vector<16x512xf32> to vector<16x128xf32>
    %144 = arith.maximumf %142, %143 : vector<16x128xf32>
    %145 = arith.maximumf %141, %144 : vector<16x128xf32>
    %146 = vector.broadcast %1 : vector<1x128xf32> to vector<16x128xf32>
    %147 = arith.addf %145, %146 : vector<16x128xf32>
    %cst_42 = arith.constant 0.000000e+00 : f32
    %148 = vector.broadcast %cst_42 : f32 to vector<16x128xf32>
    %149 = arith.maximumf %147, %148 : vector<16x128xf32>
    %150 = arith.truncf %149 : vector<16x128xf32> to vector<16x128xbf16>
    %c0_43 = arith.constant 0 : index
    %c1152 = arith.constant 1152 : index
    %151 = vector.load %arg13[%c0_43, %c1152] : memref<16x1536xbf16, #tpu.memory_space<vmem>>, vector<16x128xbf16>
    tpu.vector_store %arg13[%c0_43, %c1152], %150 {strides = array<i32>} : memref<16x1536xbf16, #tpu.memory_space<vmem>>, vector<16x128xbf16>,
    %c0_44 = arith.constant 0 : index
    %c560 = arith.constant 560 : index
    %152 = vector.load %arg1[%c0_44, %c560] : memref<16x784xbf16, #tpu.memory_space<vmem>>, vector<16x168xbf16>
    %cst_45 = arith.constant dense<0.000000e+00> : vector<16x512xf32>
    %153 = tpu.matmul %152, %0, %cst_45 {dimension_numbers = #tpu.dot_dimension_numbers<[1], [0], [0], [1], [0, 0, 1, 1], [], []>} : vector<16x168xbf16>, vector<168x512xbf16>, vector<16x512xf32> -> vector<16x512xf32>
    %154 = vector.extract_strided_slice %153 {offsets = [0, 0], sizes = [16, 128], strides = [1, 1]} : vector<16x512xf32> to vector<16x128xf32>
    %155 = vector.extract_strided_slice %153 {offsets = [0, 128], sizes = [16, 128], strides = [1, 1]} : vector<16x512xf32> to vector<16x128xf32>
    %156 = arith.maximumf %154, %155 : vector<16x128xf32>
    %157 = vector.extract_strided_slice %153 {offsets = [0, 256], sizes = [16, 128], strides = [1, 1]} : vector<16x512xf32> to vector<16x128xf32>
    %158 = vector.extract_strided_slice %153 {offsets = [0, 384], sizes = [16, 128], strides = [1, 1]} : vector<16x512xf32> to vector<16x128xf32>
    %159 = arith.maximumf %157, %158 : vector<16x128xf32>
    %160 = arith.maximumf %156, %159 : vector<16x128xf32>
    %161 = vector.broadcast %1 : vector<1x128xf32> to vector<16x128xf32>
    %162 = arith.addf %160, %161 : vector<16x128xf32>
    %cst_46 = arith.constant 0.000000e+00 : f32
    %163 = vector.broadcast %cst_46 : f32 to vector<16x128xf32>
    %164 = arith.maximumf %162, %163 : vector<16x128xf32>
    %165 = arith.truncf %164 : vector<16x128xf32> to vector<16x128xbf16>
    %c0_47 = arith.constant 0 : index
    %c1280 = arith.constant 1280 : index
    %166 = vector.load %arg13[%c0_47, %c1280] : memref<16x1536xbf16, #tpu.memory_space<vmem>>, vector<16x128xbf16>
    tpu.vector_store %arg13[%c0_47, %c1280], %165 {strides = array<i32>} : memref<16x1536xbf16, #tpu.memory_space<vmem>>, vector<16x128xbf16>,
    %c0_48 = arith.constant 0 : index
    %c616 = arith.constant 616 : index
    %167 = vector.load %arg1[%c0_48, %c616] : memref<16x784xbf16, #tpu.memory_space<vmem>>, vector<16x168xbf16>
    %cst_49 = arith.constant dense<0.000000e+00> : vector<16x512xf32>
    %168 = tpu.matmul %167, %0, %cst_49 {dimension_numbers = #tpu.dot_dimension_numbers<[1], [0], [0], [1], [0, 0, 1, 1], [], []>} : vector<16x168xbf16>, vector<168x512xbf16>, vector<16x512xf32> -> vector<16x512xf32>
    %169 = vector.extract_strided_slice %168 {offsets = [0, 0], sizes = [16, 128], strides = [1, 1]} : vector<16x512xf32> to vector<16x128xf32>
    %170 = vector.extract_strided_slice %168 {offsets = [0, 128], sizes = [16, 128], strides = [1, 1]} : vector<16x512xf32> to vector<16x128xf32>
    %171 = arith.maximumf %169, %170 : vector<16x128xf32>
    %172 = vector.extract_strided_slice %168 {offsets = [0, 256], sizes = [16, 128], strides = [1, 1]} : vector<16x512xf32> to vector<16x128xf32>
    %173 = vector.extract_strided_slice %168 {offsets = [0, 384], sizes = [16, 128], strides = [1, 1]} : vector<16x512xf32> to vector<16x128xf32>
    %174 = arith.maximumf %172, %173 : vector<16x128xf32>
    %175 = arith.maximumf %171, %174 : vector<16x128xf32>
    %176 = vector.broadcast %1 : vector<1x128xf32> to vector<16x128xf32>
    %177 = arith.addf %175, %176 : vector<16x128xf32>
    %cst_50 = arith.constant 0.000000e+00 : f32
    %178 = vector.broadcast %cst_50 : f32 to vector<16x128xf32>
    %179 = arith.maximumf %177, %178 : vector<16x128xf32>
    %180 = arith.truncf %179 : vector<16x128xf32> to vector<16x128xbf16>
    %c0_51 = arith.constant 0 : index
    %c1408 = arith.constant 1408 : index
    %181 = vector.load %arg13[%c0_51, %c1408] : memref<16x1536xbf16, #tpu.memory_space<vmem>>, vector<16x128xbf16>
    tpu.vector_store %arg13[%c0_51, %c1408], %180 {strides = array<i32>} : memref<16x1536xbf16, #tpu.memory_space<vmem>>, vector<16x128xbf16>,
    %c0_52 = arith.constant 0 : index
    %c0_53 = arith.constant 0 : index
    %182 = vector.load %arg4[%c0_52, %c0_53] : memref<768x512xbf16, #tpu.memory_space<vmem>>, vector<768x512xbf16>
    %c0_54 = arith.constant 0 : index
    %c0_55 = arith.constant 0 : index
    %183 = vector.load %arg5[%c0_54, %c0_55] : memref<1x128xf32, #tpu.memory_space<vmem>>, vector<1x128xf32>
    %cst_56 = arith.constant 0.000000e+00 : f32
    %184 = vector.broadcast %cst_56 : f32 to vector<16x128xf32>
    %c0_57 = arith.constant 0 : index
    %c0_58 = arith.constant 0 : index
    %185 = vector.load %arg13[%c0_57, %c0_58] : memref<16x1536xbf16, #tpu.memory_space<vmem>>, vector<16x768xbf16>
    %cst_59 = arith.constant dense<0.000000e+00> : vector<16x512xf32>
    %186 = tpu.matmul %185, %182, %cst_59 {dimension_numbers = #tpu.dot_dimension_numbers<[1], [0], [0], [1], [0, 0, 1, 1], [], []>} : vector<16x768xbf16>, vector<768x512xbf16>, vector<16x512xf32> -> vector<16x512xf32>
    %187 = vector.extract_strided_slice %186 {offsets = [0, 0], sizes = [16, 128], strides = [1, 1]} : vector<16x512xf32> to vector<16x128xf32>
    %188 = vector.extract_strided_slice %186 {offsets = [0, 128], sizes = [16, 128], strides = [1, 1]} : vector<16x512xf32> to vector<16x128xf32>
    %189 = arith.maximumf %187, %188 : vector<16x128xf32>
    %190 = vector.extract_strided_slice %186 {offsets = [0, 256], sizes = [16, 128], strides = [1, 1]} : vector<16x512xf32> to vector<16x128xf32>
    %191 = vector.extract_strided_slice %186 {offsets = [0, 384], sizes = [16, 128], strides = [1, 1]} : vector<16x512xf32> to vector<16x128xf32>
    %192 = arith.maximumf %190, %191 : vector<16x128xf32>
    %193 = arith.maximumf %189, %192 : vector<16x128xf32>
    %194 = vector.broadcast %183 : vector<1x128xf32> to vector<16x128xf32>
    %195 = arith.addf %193, %194 : vector<16x128xf32>
    %cst_60 = arith.constant 0.000000e+00 : f32
    %196 = vector.broadcast %cst_60 : f32 to vector<16x128xf32>
    %197 = arith.maximumf %195, %196 : vector<16x128xf32>
    %198 = arith.truncf %197 : vector<16x128xf32> to vector<16x128xbf16>
    %c0_61 = arith.constant 0 : index
    %c0_62 = arith.constant 0 : index
    %199 = vector.load %arg6[%c0_61, %c0_62] : memref<512x128xbf16, #tpu.memory_space<vmem>>, vector<128x128xbf16>
    %cst_63 = arith.constant dense<0.000000e+00> : vector<16x128xf32>
    %200 = tpu.matmul %198, %199, %cst_63 {dimension_numbers = #tpu.dot_dimension_numbers<[1], [0], [0], [1], [0, 0, 1, 1], [], []>} : vector<16x128xbf16>, vector<128x128xbf16>, vector<16x128xf32> -> vector<16x128xf32>
    %201 = arith.addf %184, %200 : vector<16x128xf32>
    %c0_64 = arith.constant 0 : index
    %c256_65 = arith.constant 256 : index
    %202 = vector.load %arg13[%c0_64, %c256_65] : memref<16x1536xbf16, #tpu.memory_space<vmem>>, vector<16x768xbf16>
    %cst_66 = arith.constant dense<0.000000e+00> : vector<16x512xf32>
    %203 = tpu.matmul %202, %182, %cst_66 {dimension_numbers = #tpu.dot_dimension_numbers<[1], [0], [0], [1], [0, 0, 1, 1], [], []>} : vector<16x768xbf16>, vector<768x512xbf16>, vector<16x512xf32> -> vector<16x512xf32>
    %204 = vector.extract_strided_slice %203 {offsets = [0, 0], sizes = [16, 128], strides = [1, 1]} : vector<16x512xf32> to vector<16x128xf32>
    %205 = vector.extract_strided_slice %203 {offsets = [0, 128], sizes = [16, 128], strides = [1, 1]} : vector<16x512xf32> to vector<16x128xf32>
    %206 = arith.maximumf %204, %205 : vector<16x128xf32>
    %207 = vector.extract_strided_slice %203 {offsets = [0, 256], sizes = [16, 128], strides = [1, 1]} : vector<16x512xf32> to vector<16x128xf32>
    %208 = vector.extract_strided_slice %203 {offsets = [0, 384], sizes = [16, 128], strides = [1, 1]} : vector<16x512xf32> to vector<16x128xf32>
    %209 = arith.maximumf %207, %208 : vector<16x128xf32>
    %210 = arith.maximumf %206, %209 : vector<16x128xf32>
    %211 = vector.broadcast %183 : vector<1x128xf32> to vector<16x128xf32>
    %212 = arith.addf %210, %211 : vector<16x128xf32>
    %cst_67 = arith.constant 0.000000e+00 : f32
    %213 = vector.broadcast %cst_67 : f32 to vector<16x128xf32>
    %214 = arith.maximumf %212, %213 : vector<16x128xf32>
    %215 = arith.truncf %214 : vector<16x128xf32> to vector<16x128xbf16>
    %c128_68 = arith.constant 128 : index
    %c0_69 = arith.constant 0 : index
    %216 = vector.load %arg6[%c128_68, %c0_69] : memref<512x128xbf16, #tpu.memory_space<vmem>>, vector<128x128xbf16>
    %cst_70 = arith.constant dense<0.000000e+00> : vector<16x128xf32>
    %217 = tpu.matmul %215, %216, %cst_70 {dimension_numbers = #tpu.dot_dimension_numbers<[1], [0], [0], [1], [0, 0, 1, 1], [], []>} : vector<16x128xbf16>, vector<128x128xbf16>, vector<16x128xf32> -> vector<16x128xf32>
    %218 = arith.addf %201, %217 : vector<16x128xf32>
    %c0_71 = arith.constant 0 : index
    %c512_72 = arith.constant 512 : index
    %219 = vector.load %arg13[%c0_71, %c512_72] : memref<16x1536xbf16, #tpu.memory_space<vmem>>, vector<16x768xbf16>
    %cst_73 = arith.constant dense<0.000000e+00> : vector<16x512xf32>
    %220 = tpu.matmul %219, %182, %cst_73 {dimension_numbers = #tpu.dot_dimension_numbers<[1], [0], [0], [1], [0, 0, 1, 1], [], []>} : vector<16x768xbf16>, vector<768x512xbf16>, vector<16x512xf32> -> vector<16x512xf32>
    %221 = vector.extract_strided_slice %220 {offsets = [0, 0], sizes = [16, 128], strides = [1, 1]} : vector<16x512xf32> to vector<16x128xf32>
    %222 = vector.extract_strided_slice %220 {offsets = [0, 128], sizes = [16, 128], strides = [1, 1]} : vector<16x512xf32> to vector<16x128xf32>
    %223 = arith.maximumf %221, %222 : vector<16x128xf32>
    %224 = vector.extract_strided_slice %220 {offsets = [0, 256], sizes = [16, 128], strides = [1, 1]} : vector<16x512xf32> to vector<16x128xf32>
    %225 = vector.extract_strided_slice %220 {offsets = [0, 384], sizes = [16, 128], strides = [1, 1]} : vector<16x512xf32> to vector<16x128xf32>
    %226 = arith.maximumf %224, %225 : vector<16x128xf32>
    %227 = arith.maximumf %223, %226 : vector<16x128xf32>
    %228 = vector.broadcast %183 : vector<1x128xf32> to vector<16x128xf32>
    %229 = arith.addf %227, %228 : vector<16x128xf32>
    %cst_74 = arith.constant 0.000000e+00 : f32
    %230 = vector.broadcast %cst_74 : f32 to vector<16x128xf32>
    %231 = arith.maximumf %229, %230 : vector<16x128xf32>
    %232 = arith.truncf %231 : vector<16x128xf32> to vector<16x128xbf16>
    %c256_75 = arith.constant 256 : index
    %c0_76 = arith.constant 0 : index
    %233 = vector.load %arg6[%c256_75, %c0_76] : memref<512x128xbf16, #tpu.memory_space<vmem>>, vector<128x128xbf16>
    %cst_77 = arith.constant dense<0.000000e+00> : vector<16x128xf32>
    %234 = tpu.matmul %232, %233, %cst_77 {dimension_numbers = #tpu.dot_dimension_numbers<[1], [0], [0], [1], [0, 0, 1, 1], [], []>} : vector<16x128xbf16>, vector<128x128xbf16>, vector<16x128xf32> -> vector<16x128xf32>
    %235 = arith.addf %218, %234 : vector<16x128xf32>
    %c0_78 = arith.constant 0 : index
    %c768_79 = arith.constant 768 : index
    %236 = vector.load %arg13[%c0_78, %c768_79] : memref<16x1536xbf16, #tpu.memory_space<vmem>>, vector<16x768xbf16>
    %cst_80 = arith.constant dense<0.000000e+00> : vector<16x512xf32>
    %237 = tpu.matmul %236, %182, %cst_80 {dimension_numbers = #tpu.dot_dimension_numbers<[1], [0], [0], [1], [0, 0, 1, 1], [], []>} : vector<16x768xbf16>, vector<768x512xbf16>, vector<16x512xf32> -> vector<16x512xf32>
    %238 = vector.extract_strided_slice %237 {offsets = [0, 0], sizes = [16, 128], strides = [1, 1]} : vector<16x512xf32> to vector<16x128xf32>
    %239 = vector.extract_strided_slice %237 {offsets = [0, 128], sizes = [16, 128], strides = [1, 1]} : vector<16x512xf32> to vector<16x128xf32>
    %240 = arith.maximumf %238, %239 : vector<16x128xf32>
    %241 = vector.extract_strided_slice %237 {offsets = [0, 256], sizes = [16, 128], strides = [1, 1]} : vector<16x512xf32> to vector<16x128xf32>
    %242 = vector.extract_strided_slice %237 {offsets = [0, 384], sizes = [16, 128], strides = [1, 1]} : vector<16x512xf32> to vector<16x128xf32>
    %243 = arith.maximumf %241, %242 : vector<16x128xf32>
    %244 = arith.maximumf %240, %243 : vector<16x128xf32>
    %245 = vector.broadcast %183 : vector<1x128xf32> to vector<16x128xf32>
    %246 = arith.addf %244, %245 : vector<16x128xf32>
    %cst_81 = arith.constant 0.000000e+00 : f32
    %247 = vector.broadcast %cst_81 : f32 to vector<16x128xf32>
    %248 = arith.maximumf %246, %247 : vector<16x128xf32>
    %249 = arith.truncf %248 : vector<16x128xf32> to vector<16x128xbf16>
    %c384_82 = arith.constant 384 : index
    %c0_83 = arith.constant 0 : index
    %250 = vector.load %arg6[%c384_82, %c0_83] : memref<512x128xbf16, #tpu.memory_space<vmem>>, vector<128x128xbf16>
    %cst_84 = arith.constant dense<0.000000e+00> : vector<16x128xf32>
    %251 = tpu.matmul %249, %250, %cst_84 {dimension_numbers = #tpu.dot_dimension_numbers<[1], [0], [0], [1], [0, 0, 1, 1], [], []>} : vector<16x128xbf16>, vector<128x128xbf16>, vector<16x128xf32> -> vector<16x128xf32>
    %252 = arith.addf %235, %251 : vector<16x128xf32>
    %c0_85 = arith.constant 0 : index
    %c0_86 = arith.constant 0 : index
    %253 = vector.load %arg7[%c0_85, %c0_86] : memref<1x128xf32, #tpu.memory_space<vmem>>, vector<1x128xf32>
    %254 = vector.broadcast %253 : vector<1x128xf32> to vector<16x128xf32>
    %255 = arith.addf %252, %254 : vector<16x128xf32>
    %cst_87 = arith.constant 0.000000e+00 : f32
    %256 = vector.broadcast %cst_87 : f32 to vector<16x128xf32>
    %257 = arith.maximumf %255, %256 : vector<16x128xf32>
    %258 = arith.truncf %257 : vector<16x128xf32> to vector<16x128xbf16>
    %c0_88 = arith.constant 0 : index
    %c0_89 = arith.constant 0 : index
    %259 = vector.load %arg8[%c0_88, %c0_89] : memref<128x128xbf16, #tpu.memory_space<vmem>>, vector<128x128xbf16>
    %cst_90 = arith.constant dense<0.000000e+00> : vector<16x128xf32>
    %260 = tpu.matmul %258, %259, %cst_90 {dimension_numbers = #tpu.dot_dimension_numbers<[1], [0], [0], [1], [0, 0, 1, 1], [], []>} : vector<16x128xbf16>, vector<128x128xbf16>, vector<16x128xf32> -> vector<16x128xf32>
    %c0_91 = arith.constant 0 : index
    %c0_92 = arith.constant 0 : index
    %261 = vector.load %arg9[%c0_91, %c0_92] : memref<1x128xf32, #tpu.memory_space<vmem>>, vector<1x128xf32>
    %262 = vector.broadcast %261 : vector<1x128xf32> to vector<16x128xf32>
    %263 = arith.addf %260, %262 : vector<16x128xf32>
    %cst_93 = arith.constant 0.000000e+00 : f32
    %264 = vector.broadcast %cst_93 : f32 to vector<16x128xf32>
    %265 = arith.maximumf %263, %264 : vector<16x128xf32>
    %266 = arith.truncf %265 : vector<16x128xf32> to vector<16x128xbf16>
    %c0_94 = arith.constant 0 : index
    %c0_95 = arith.constant 0 : index
    %267 = vector.load %arg10[%c0_94, %c0_95] : memref<128x128xbf16, #tpu.memory_space<vmem>>, vector<128x128xbf16>
    %cst_96 = arith.constant dense<0.000000e+00> : vector<16x128xf32>
    %268 = tpu.matmul %266, %267, %cst_96 {dimension_numbers = #tpu.dot_dimension_numbers<[1], [0], [0], [1], [0, 0, 1, 1], [], []>} : vector<16x128xbf16>, vector<128x128xbf16>, vector<16x128xf32> -> vector<16x128xf32>
    %c0_97 = arith.constant 0 : index
    %c0_98 = arith.constant 0 : index
    %269 = vector.load %arg11[%c0_97, %c0_98] : memref<1x128xf32, #tpu.memory_space<vmem>>, vector<1x128xf32>
    %270 = vector.broadcast %269 : vector<1x128xf32> to vector<16x128xf32>
    %271 = arith.addf %268, %270 : vector<16x128xf32>
    %c0_99 = arith.constant 0 : index
    %c0_100 = arith.constant 0 : index
    %272 = vector.load %arg12[%c0_99, %c0_100] : memref<16x128xf32, #tpu.memory_space<vmem>>, vector<16x128xf32>
    tpu.vector_store %arg12[%c0_99, %c0_100], %271 {strides = array<i32>} : memref<16x128xf32, #tpu.memory_space<vmem>>, vector<16x128xf32>,
    return
  }
  func.func @transform_0(%arg0: i32) -> (i32, i32) {
    %c0_i32 = arith.constant 0 : i32
    %c0_i32_0 = arith.constant 0 : i32
    return %arg0, %c0_i32 : i32, i32
  }
  func.func @transform_1(%arg0: i32) -> (i32, i32) {
    %c0_i32 = arith.constant 0 : i32
    %c0_i32_0 = arith.constant 0 : i32
    %c0_i32_1 = arith.constant 0 : i32
    return %c0_i32, %c0_i32_0 : i32, i32
  }
  func.func @transform_2(%arg0: i32) -> (i32, i32) {
    %c0_i32 = arith.constant 0 : i32
    %c0_i32_0 = arith.constant 0 : i32
    %c0_i32_1 = arith.constant 0 : i32
    return %c0_i32, %c0_i32_0 : i32, i32
  }
  func.func @transform_3(%arg0: i32) -> (i32, i32) {
    %c0_i32 = arith.constant 0 : i32
    %c0_i32_0 = arith.constant 0 : i32
    %c0_i32_1 = arith.constant 0 : i32
    return %c0_i32, %c0_i32_0 : i32, i32
  }
  func.func @transform_4(%arg0: i32) -> (i32, i32) {
    %c0_i32 = arith.constant 0 : i32
    %c0_i32_0 = arith.constant 0 : i32
    %c0_i32_1 = arith.constant 0 : i32
    return %c0_i32, %c0_i32_0 : i32, i32
  }
  func.func @transform_5(%arg0: i32) -> (i32, i32) {
    %c0_i32 = arith.constant 0 : i32
    %c0_i32_0 = arith.constant 0 : i32
    %c0_i32_1 = arith.constant 0 : i32
    return %c0_i32, %c0_i32_0 : i32, i32
  }
  func.func @transform_6(%arg0: i32) -> (i32, i32) {
    %c0_i32 = arith.constant 0 : i32
    %c0_i32_0 = arith.constant 0 : i32
    %c0_i32_1 = arith.constant 0 : i32
    return %c0_i32, %c0_i32_0 : i32, i32
  }
  func.func @transform_7(%arg0: i32) -> (i32, i32) {
    %c0_i32 = arith.constant 0 : i32
    %c0_i32_0 = arith.constant 0 : i32
    %c0_i32_1 = arith.constant 0 : i32
    return %c0_i32, %c0_i32_0 : i32, i32
  }
  func.func @transform_8(%arg0: i32) -> (i32, i32) {
    %c0_i32 = arith.constant 0 : i32
    %c0_i32_0 = arith.constant 0 : i32
    %c0_i32_1 = arith.constant 0 : i32
    return %c0_i32, %c0_i32_0 : i32, i32
  }
  func.func @transform_9(%arg0: i32) -> (i32, i32) {
    %c0_i32 = arith.constant 0 : i32
    %c0_i32_0 = arith.constant 0 : i32
    %c0_i32_1 = arith.constant 0 : i32
    return %c0_i32, %c0_i32_0 : i32, i32
  }
  func.func @transform_10(%arg0: i32) -> (i32, i32) {
    %c0_i32 = arith.constant 0 : i32
    %c0_i32_0 = arith.constant 0 : i32
    %c0_i32_1 = arith.constant 0 : i32
    return %c0_i32, %c0_i32_0 : i32, i32
  }
  func.func @transform_11(%arg0: i32) -> (i32, i32) {
    %c0_i32 = arith.constant 0 : i32
    %c0_i32_0 = arith.constant 0 : i32
    return %arg0, %c0_i32 : i32, i32
  }
}

</mosaic_0001>

<llo_original>
// kernel: lenet_forward.1
$region0: #{lenet_forward.1}
  #allocation0 [shape = 'u32[]', space=smem, size = 0x4, offset = 0x4, fixed_abs, tag = 'smem constant byte address 0x4 - core index']
  #allocation1 [shape = 'u32[144,128]{1,0:T(1,128)}', space=vmem, size = 0x12000, scoped, tag = 'internal scratch']
  #allocation2 [shape = 'bf16[16,1536]{1,0:T(16,128)(2,1)}', space=vmem, size = 0xc000, scoped, tag = 'scratch operand']
  %s0 = inlined_call_operand.vmem [shape: bf16[16,784], index: 0, kind: input, shape index: {}]
  %s1 = inlined_call_operand.hbm [shape: bf16[168,512], index: 1, kind: input, shape index: {}]
  %s2 = inlined_call_operand.vmem [shape: f32[1,128], index: 2, kind: input, shape index: {}]
  %s3 = inlined_call_operand.hbm [shape: bf16[768,512], index: 3, kind: input, shape index: {}]
  %s4 = inlined_call_operand.vmem [shape: f32[1,128], index: 4, kind: input, shape index: {}]
  %s5 = inlined_call_operand.hbm [shape: bf16[512,128], index: 5, kind: input, shape index: {}]
  %s6 = inlined_call_operand.vmem [shape: f32[1,128], index: 6, kind: input, shape index: {}]
  %s7 = inlined_call_operand.vmem [shape: bf16[128,128], index: 7, kind: input, shape index: {}]
  %s8 = inlined_call_operand.vmem [shape: f32[1,128], index: 8, kind: input, shape index: {}]
  %s9 = inlined_call_operand.vmem [shape: bf16[128,128], index: 9, kind: input, shape index: {}]
  %s10 = inlined_call_operand.vmem [shape: f32[1,128], index: 10, kind: input, shape index: {}]
  %s11 = inlined_call_operand.vmem [shape: f32[16,128], index: 11, kind: output, shape index: {}]
  %s12 = sld [smem:[#allocation0]]
  $region66: #{lenet_forward.1} parent=0
    _
  %s14 = ssub.s32 1, %s12
  %s15 = scalar_select 0, %s14, %s12
  $region1: #{lenet_forward.1} parent=0
    #allocation3 [shape = 'u8[172032]{0}', space=vmem, size = 0x2a000, scoped, tag = 'input window, operand 1, single buffered']
    #allocation4 [shape = 's32[1]{0}', space=sflag, size = 0x4, scoped, tag = 'scoped memory for lenet_forward.1']
    #allocation5 [shape = 'u8[786432]{0}', space=vmem, size = 0xc0000, scoped, tag = 'input window, operand 3, single buffered']
    #allocation6 [shape = 's32[1]{0}', space=sflag, size = 0x4, scoped, tag = 'scoped memory for lenet_forward.1']
    #allocation7 [shape = 'u8[131072]{0}', space=vmem, size = 0x20000, scoped, tag = 'input window, operand 5, single buffered']
    %16 = vsyncpa [#allocation4], 0
    %17 = vsyncpa [#allocation6], 0
    // Predicated region
    $region2: #{lenet_forward.1} parent=1 // pred_check
      _
    $region3: #{lenet_forward.1} parent=1 // pred_check_branch
      %19 = sbr.rel (0) target = $region5
    $region4: #{lenet_forward.1} parent=1 // pred_region
      _
    $region5: #{lenet_forward.1} parent=1 // pred_fallthru
      _
    // Predicated region
    $region6: #{lenet_forward.1} parent=1 // pred_check
      _
    $region7: #{lenet_forward.1} parent=1 // pred_check_branch
      %21 = sbr.rel (0) target = $region9
    $region8: #{lenet_forward.1} parent=1 // pred_region
      %s23 = ssub.s32 5376, 5376
      %24 = vsyncadd [#allocation4], %s23
      %s25 = sshll.u32 [#allocation3], 4
      %s26 = int_to_ptr.vmem [resolvable:$true] %s25
      %31 = dma.hbm_to_vmem [thread:$0]  %s1, 5376, %s26, [#allocation4], 256, 256, 16
    $region9: #{lenet_forward.1} parent=1 // pred_fallthru
      _
    // Predicated region
    $region10: #{lenet_forward.1} parent=1 // pred_check
      _
    $region11: #{lenet_forward.1} parent=1 // pred_check_branch
      %33 = sbr.rel (0) target = $region13
    $region12: #{lenet_forward.1} parent=1 // pred_region
      _
    $region13: #{lenet_forward.1} parent=1 // pred_fallthru
      _
    // Predicated region
    $region14: #{lenet_forward.1} parent=1 // pred_check
      _
    $region15: #{lenet_forward.1} parent=1 // pred_check_branch
      %35 = sbr.rel (0) target = $region17
    $region16: #{lenet_forward.1} parent=1 // pred_region
      %s37 = ssub.s32 24576, 24576
      %38 = vsyncadd [#allocation6], %s37
      %s39 = sshll.u32 [#allocation5], 4
      %s40 = int_to_ptr.vmem [resolvable:$true] %s39
      %45 = dma.hbm_to_vmem [thread:$0]  %s3, 24576, %s40, [#allocation6], 256, 256, 16
    $region17: #{lenet_forward.1} parent=1 // pred_fallthru
      _
    // Predicated region
    $region18: #{lenet_forward.1} parent=1 // pred_check
      _
    $region19: #{lenet_forward.1} parent=1 // pred_check_branch
      %47 = sbr.rel (0) target = $region21
    $region20: #{lenet_forward.1} parent=1 // pred_region
      _
    $region21: #{lenet_forward.1} parent=1 // pred_fallthru
      _
    // Predicated region
    $region22: #{lenet_forward.1} parent=1 // pred_check
      _
    $region23: #{lenet_forward.1} parent=1 // pred_check_branch
      %49 = sbr.rel (0) target = $region25
    $region24: #{lenet_forward.1} parent=1 // pred_region
      %s51 = ssub.s32 4096, 4096
      %52 = vsyncadd [#allocation6], %s51
      %s53 = sshll.u32 [#allocation7], 4
      %s54 = int_to_ptr.vmem [resolvable:$true] %s53
      %59 = dma.hbm_to_vmem [thread:$0]  %s5, 4096, %s54, [#allocation6], 64, 64, 4
    $region25: #{lenet_forward.1} parent=1 // pred_fallthru
      _
    // Predicated region
    $region26: #{lenet_forward.1} parent=1 // pred_check
      _
    $region27: #{lenet_forward.1} parent=1 // pred_check_branch
      %61 = sbr.rel (0) target = $region29
    $region28: #{lenet_forward.1} parent=1 // pred_region
      _
    $region29: #{lenet_forward.1} parent=1 // pred_fallthru
      _
    // Predicated region
    $region30: #{lenet_forward.1} parent=1 // pred_check
      _
    $region31: #{lenet_forward.1} parent=1 // pred_check_branch
      %63 = sbr.rel (0) target = $region33
    $region32: #{lenet_forward.1} parent=1 // pred_region
      _
    $region33: #{lenet_forward.1} parent=1 // pred_fallthru
      _
    // Predicated region
    $region34: #{lenet_forward.1} parent=1 // pred_check
      _
    $region35: #{lenet_forward.1} parent=1 // pred_check_branch
      %65 = sbr.rel (0) target = $region37
    $region36: #{lenet_forward.1} parent=1 // pred_region
      _
    $region37: #{lenet_forward.1} parent=1 // pred_fallthru
      _
    // Predicated region
    $region38: #{lenet_forward.1} parent=1 // pred_check
      _
    $region39: #{lenet_forward.1} parent=1 // pred_check_branch
      %67 = sbr.rel (0) target = $region41
    $region40: #{lenet_forward.1} parent=1 // pred_region
      _
    $region41: #{lenet_forward.1} parent=1 // pred_fallthru
      _
    // Predicated region
    $region42: #{lenet_forward.1} parent=1 // pred_check
      _
    $region43: #{lenet_forward.1} parent=1 // pred_check_branch
      %69 = sbr.rel (0) target = $region45
    $region44: #{lenet_forward.1} parent=1 // pred_region
      _
    $region45: #{lenet_forward.1} parent=1 // pred_fallthru
      _
    // Predicated region
    $region46: #{lenet_forward.1} parent=1 // pred_check
      _
    $region47: #{lenet_forward.1} parent=1 // pred_check_branch
      %71 = sbr.rel (0) target = $region49
    $region48: #{lenet_forward.1} parent=1 // pred_region
      %72 = dma.done [#allocation4], 5376
    $region49: #{lenet_forward.1} parent=1 // pred_fallthru
      _
    // Predicated region
    $region50: #{lenet_forward.1} parent=1 // pred_check
      _
    $region51: #{lenet_forward.1} parent=1 // pred_check_branch
      %74 = sbr.rel (0) target = $region53
    $region52: #{lenet_forward.1} parent=1 // pred_region
      %75 = dma.done [#allocation6], 24576
    $region53: #{lenet_forward.1} parent=1 // pred_fallthru
      _
    // Predicated region
    $region54: #{lenet_forward.1} parent=1 // pred_check
      _
    $region55: #{lenet_forward.1} parent=1 // pred_check_branch
      %77 = sbr.rel (0) target = $region57
    $region56: #{lenet_forward.1} parent=1 // pred_region
      %78 = dma.done [#allocation6], 4096
    $region57: #{lenet_forward.1} parent=1 // pred_fallthru
      _
    %v80 = vld [vmem:[#allocation3] sm:$0xff]
    %v81 = vld [vmem:[#allocation3 + $0x8] sm:$0xff]
    %v82 = vld [vmem:[#allocation3 + $0x10] sm:$0xff]
    %v83 = vld [vmem:[#allocation3 + $0x18] sm:$0xff]
    %v84 = vld [vmem:[#allocation3 + $0x20] sm:$0xff]
    %v85 = vld [vmem:[#allocation3 + $0x28] sm:$0xff]
    %v86 = vld [vmem:[#allocation3 + $0x30] sm:$0xff]
    %v87 = vld [vmem:[#allocation3 + $0x38] sm:$0xff]
    %v88 = vld [vmem:[#allocation3 + $0x40] sm:$0xff]
    %v89 = vld [vmem:[#allocation3 + $0x48] sm:$0xff]
    %v90 = vld [vmem:[#allocation3 + $0x50] sm:$0xff]
    %v91 = vld [vmem:[#allocation3 + $0x58] sm:$0xff]
    %v92 = vld [vmem:[#allocation3 + $0x60] sm:$0xff]
    %v93 = vld [vmem:[#allocation3 + $0x68] sm:$0xff]
    %v94 = vld [vmem:[#allocation3 + $0x70] sm:$0xff]
    %v95 = vld [vmem:[#allocation3 + $0x78] sm:$0xff]
    %v96 = vld [vmem:[#allocation3 + $0x80] sm:$0xff]
    %v97 = vld [vmem:[#allocation3 + $0x88] sm:$0xff]
    %v98 = vld [vmem:[#allocation3 + $0x90] sm:$0xff]
    %v99 = vld [vmem:[#allocation3 + $0x98] sm:$0xff]
    %v100 = vld [vmem:[#allocation3 + $0xa0] sm:$0xff]
    %v101 = vld [vmem:[#allocation3 + $0xa8] sm:$0xff]
    %v102 = vld [vmem:[#allocation3 + $0xb0] sm:$0xff]
    %v103 = vld [vmem:[#allocation3 + $0xb8] sm:$0xff]
    %v104 = vld [vmem:[#allocation3 + $0xc0] sm:$0xff]
    %v105 = vld [vmem:[#allocation3 + $0xc8] sm:$0xff]
    %v106 = vld [vmem:[#allocation3 + $0xd0] sm:$0xff]
    %v107 = vld [vmem:[#allocation3 + $0xd8] sm:$0xff]
    %v108 = vld [vmem:[#allocation3 + $0xe0] sm:$0xff]
    %v109 = vld [vmem:[#allocation3 + $0xe8] sm:$0xff]
    %v110 = vld [vmem:[#allocation3 + $0xf0] sm:$0xff]
    %v111 = vld [vmem:[#allocation3 + $0xf8] sm:$0xff]
    %v112 = vld [vmem:[#allocation3 + $0x100] sm:$0xff]
    %v113 = vld [vmem:[#allocation3 + $0x108] sm:$0xff]
    %v114 = vld [vmem:[#allocation3 + $0x110] sm:$0xff]
    %v115 = vld [vmem:[#allocation3 + $0x118] sm:$0xff]
    %v116 = vld [vmem:[#allocation3 + $0x120] sm:$0xff]
    %v117 = vld [vmem:[#allocation3 + $0x128] sm:$0xff]
    %v118 = vld [vmem:[#allocation3 + $0x130] sm:$0xff]
    %v119 = vld [vmem:[#allocation3 + $0x138] sm:$0xff]
    %v120 = vld [vmem:[#allocation3 + $0x140] sm:$0xff]
    %v121 = vld [vmem:[#allocation3 + $0x148] sm:$0xff]
    %v122 = vld [vmem:[%s2] sm:$0x1]
    %v123 = vld [vmem:[%s0] sm:$0xff]
    %v124 = vld [vmem:[%s0 + $0x1c] sm:$0xff]
    %v127 = vunpack.c.l.b16 %v123
    %v128 = vunpack.c.h.b16 %v123
    %v129 = vunpack.c.l.b16 %v124
    %v130 = vunpack.c.h.b16 %v124
    %v131 = vpack.c.b16 %v129, %v127
    %v132 = vpack.c.b16 %v130, %v128
    %v176 = vunpack.c.l.b16 %v80
    %v177 = vunpack.c.h.b16 %v80
    %v178 = vunpack.c.l.b16 %v81
    %v179 = vunpack.c.h.b16 %v81
    %v180 = vunpack.c.l.b16 %v82
    %v181 = vunpack.c.h.b16 %v82
    %v182 = vunpack.c.l.b16 %v83
    %v183 = vunpack.c.h.b16 %v83
    %v184 = vunpack.c.l.b16 %v84
    %v185 = vunpack.c.h.b16 %v84
    %v186 = vunpack.c.l.b16 %v85
    %v187 = vunpack.c.h.b16 %v85
    %v188 = vunpack.c.l.b16 %v86
    %v189 = vunpack.c.h.b16 %v86
    %v190 = vunpack.c.l.b16 %v87
    %v191 = vunpack.c.h.b16 %v87
    %v192 = vunpack.c.l.b16 %v88
    %v193 = vunpack.c.h.b16 %v88
    %v194 = vunpack.c.l.b16 %v89
    %v195 = vunpack.c.h.b16 %v89
    %v196 = vunpack.c.l.b16 %v90
    %v197 = vunpack.c.h.b16 %v90
    %v198 = vunpack.c.l.b16 %v91
    %v199 = vunpack.c.h.b16 %v91
    %v200 = vunpack.c.l.b16 %v92
    %v201 = vunpack.c.h.b16 %v92
    %v202 = vunpack.c.l.b16 %v93
    %v203 = vunpack.c.h.b16 %v93
    %v204 = vunpack.c.l.b16 %v94
    %v205 = vunpack.c.h.b16 %v94
    %v206 = vunpack.c.l.b16 %v95
    %v207 = vunpack.c.h.b16 %v95
    %v208 = vunpack.c.l.b16 %v96
    %v209 = vunpack.c.h.b16 %v96
    %v210 = vunpack.c.l.b16 %v97
    %v211 = vunpack.c.h.b16 %v97
    %v212 = vunpack.c.l.b16 %v98
    %v213 = vunpack.c.h.b16 %v98
    %v214 = vunpack.c.l.b16 %v99
    %v215 = vunpack.c.h.b16 %v99
    %v216 = vunpack.c.l.b16 %v100
    %v217 = vunpack.c.h.b16 %v100
    %v218 = vunpack.c.l.b16 %v101
    %v219 = vunpack.c.h.b16 %v101
    %v220 = vunpack.c.l.b16 %v102
    %v221 = vunpack.c.h.b16 %v102
    %v222 = vunpack.c.l.b16 %v103
    %v223 = vunpack.c.h.b16 %v103
    %v224 = vunpack.c.l.b16 %v104
    %v225 = vunpack.c.h.b16 %v104
    %v226 = vunpack.c.l.b16 %v105
    %v227 = vunpack.c.h.b16 %v105
    %v228 = vunpack.c.l.b16 %v106
    %v229 = vunpack.c.h.b16 %v106
    %v230 = vunpack.c.l.b16 %v107
    %v231 = vunpack.c.h.b16 %v107
    %v232 = vunpack.c.l.b16 %v108
    %v233 = vunpack.c.h.b16 %v108
    %v234 = vunpack.c.l.b16 %v109
    %v235 = vunpack.c.h.b16 %v109
    %v236 = vunpack.c.l.b16 %v110
    %v237 = vunpack.c.h.b16 %v110
    %v238 = vunpack.c.l.b16 %v111
    %v239 = vunpack.c.h.b16 %v111
    %v240 = vunpack.c.l.b16 %v112
    %v241 = vunpack.c.h.b16 %v112
    %v242 = vunpack.c.l.b16 %v113
    %v243 = vunpack.c.h.b16 %v113
    %v244 = vunpack.c.l.b16 %v114
    %v245 = vunpack.c.h.b16 %v114
    %v246 = vunpack.c.l.b16 %v115
    %v247 = vunpack.c.h.b16 %v115
    %v248 = vunpack.c.l.b16 %v116
    %v249 = vunpack.c.h.b16 %v116
    %v250 = vunpack.c.l.b16 %v117
    %v251 = vunpack.c.h.b16 %v117
    %v252 = vunpack.c.l.b16 %v118
    %v253 = vunpack.c.h.b16 %v118
    %v254 = vunpack.c.l.b16 %v119
    %v255 = vunpack.c.h.b16 %v119
    %v256 = vunpack.c.l.b16 %v120
    %v257 = vunpack.c.h.b16 %v120
    %v258 = vunpack.c.l.b16 %v121
    %v259 = vunpack.c.h.b16 %v121
    %v260 = vpack.c.b16 %v180, %v176
    %v261 = vpack.c.b16 %v181, %v177
    %v262 = vpack.c.b16 %v182, %v178
    %v263 = vpack.c.b16 %v183, %v179
    %v264 = vpack.c.b16 %v188, %v184
    %v265 = vpack.c.b16 %v189, %v185
    %v266 = vpack.c.b16 %v190, %v186
    %v267 = vpack.c.b16 %v191, %v187
    %v268 = vpack.c.b16 %v196, %v192
    %v269 = vpack.c.b16 %v197, %v193
    %v270 = vpack.c.b16 %v198, %v194
    %v271 = vpack.c.b16 %v199, %v195
    %v272 = vpack.c.b16 %v204, %v200
    %v273 = vpack.c.b16 %v205, %v201
    %v274 = vpack.c.b16 %v206, %v202
    %v275 = vpack.c.b16 %v207, %v203
    %v276 = vpack.c.b16 %v212, %v208
    %v277 = vpack.c.b16 %v213, %v209
    %v278 = vpack.c.b16 %v214, %v210
    %v279 = vpack.c.b16 %v215, %v211
    %v280 = vpack.c.b16 %v220, %v216
    %v281 = vpack.c.b16 %v221, %v217
    %v282 = vpack.c.b16 %v222, %v218
    %v283 = vpack.c.b16 %v223, %v219
    %v284 = vpack.c.b16 %v228, %v224
    %v285 = vpack.c.b16 %v229, %v225
    %v286 = vpack.c.b16 %v230, %v226
    %v287 = vpack.c.b16 %v231, %v227
    %v288 = vpack.c.b16 %v236, %v232
    %v289 = vpack.c.b16 %v237, %v233
    %v290 = vpack.c.b16 %v238, %v234
    %v291 = vpack.c.b16 %v239, %v235
    %v292 = vpack.c.b16 %v244, %v240
    %v293 = vpack.c.b16 %v245, %v241
    %v294 = vpack.c.b16 %v246, %v242
    %v295 = vpack.c.b16 %v247, %v243
    %v296 = vpack.c.b16 %v252, %v248
    %v297 = vpack.c.b16 %v253, %v249
    %v298 = vpack.c.b16 %v254, %v250
    %v299 = vpack.c.b16 %v255, %v251
    %v300 = vpack.c.b16 %v256, %v256
    %v301 = vpack.c.b16 %v257, %v257
    %v302 = vpack.c.b16 %v258, %v258
    %v303 = vpack.c.b16 %v259, %v259
    %vm344 = vcmask 326656
    %v346 = vsel %vm344, %v132, 0
    %vm348 = vcmask 1043456
    %v350 = vsel %vm348, %v300, 0
    %v353 = vsel %vm348, %v301, 0
    %v356 = vsel %vm348, %v302, 0
    %v359 = vsel %vm348, %v303, 0
    %361 = vmatprep.subr.bf16.mxu0 %v261
    %362 = vmatpush1.bf16.msra.mxu0 %v260
    %363 = vmatprep.subr.bf16.mxu0 %v265
    %364 = vmatpush1.bf16.msra.mxu0 %v264
    %365 = vmatprep.subr.bf16.mxu0 %v269
    %366 = vmatpush1.bf16.msra.mxu0 %v268
    %367 = vmatprep.subr.bf16.mxu0 %v273
    %368 = vmatpush1.bf16.msra.mxu0 %v272
    %369 = vmatprep.subr.bf16.mxu0 %v277
    %370 = vmatpush1.bf16.msra.mxu0 %v276
    %371 = vmatprep.subr.bf16.mxu0 %v281
    %372 = vmatpush1.bf16.msra.mxu0 %v280
    %373 = vmatprep.subr.bf16.mxu0 %v285
    %374 = vmatpush1.bf16.msra.mxu0 %v284
    %375 = vmatprep.subr.bf16.mxu0 %v289
    %376 = vmatpush1.bf16.msra.mxu0 %v288
    %377 = vmatprep.subr.bf16.mxu0 %v293
    %378 = vmatpush1.bf16.msra.mxu0 %v292
    %379 = vmatprep.subr.bf16.mxu0 %v297
    %380 = vmatpush1.bf16.msra.mxu0 %v296
    %381 = vmatprep.subr.bf16.mxu0 %v353
    %382 = vmatpush1.bf16.msra.mxu0 %v350
    %383 = vmatprep.subr.bf16.mxu0 0
    %384 = vmatpush1.bf16.msra.mxu0 0
    %385 = vmatprep.subr.bf16.mxu0 0
    %386 = vmatpush1.bf16.msra.mxu0 0
    %387 = vmatprep.subr.bf16.mxu0 0
    %388 = vmatpush1.bf16.msra.mxu0 0
    %389 = vmatprep.subr.bf16.mxu0 0
    %390 = vmatpush1.bf16.msra.mxu0 0
    %391 = vmatprep.subr.bf16.mxu0 0
    %392 = vmatpush1.bf16.msra.mxu0 0
    %393 = vmatprep.mubr.bf16.mxu0 %v346
    %394 = vmatmul.mubr.bf16.gmra.mrb[0].mxu0 %v131
    %v395 = vpop.f32.mrb[0].mxu0
    %v396 = vadd.f32 0.0, %v395
    %v397 = vpop.f32.mrb[0].mxu0
    %v398 = vadd.f32 0.0, %v397
    %v399 = vpop.f32.mrb[0].mxu0
    %v400 = vadd.f32 0.0, %v399
    %v401 = vpop.f32.mrb[0].mxu0
    %v402 = vadd.f32 0.0, %v401
    %403 = vdwg.mxu0
    %404 = vmatprep.subr.bf16.mxu0 %v263
    %405 = vmatpush1.bf16.msra.mxu0 %v262
    %406 = vmatprep.subr.bf16.mxu0 %v267
    %407 = vmatpush1.bf16.msra.mxu0 %v266
    %408 = vmatprep.subr.bf16.mxu0 %v271
    %409 = vmatpush1.bf16.msra.mxu0 %v270
    %410 = vmatprep.subr.bf16.mxu0 %v275
    %411 = vmatpush1.bf16.msra.mxu0 %v274
    %412 = vmatprep.subr.bf16.mxu0 %v279
    %413 = vmatpush1.bf16.msra.mxu0 %v278
    %414 = vmatprep.subr.bf16.mxu0 %v283
    %415 = vmatpush1.bf16.msra.mxu0 %v282
    %416 = vmatprep.subr.bf16.mxu0 %v287
    %417 = vmatpush1.bf16.msra.mxu0 %v286
    %418 = vmatprep.subr.bf16.mxu0 %v291
    %419 = vmatpush1.bf16.msra.mxu0 %v290
    %420 = vmatprep.subr.bf16.mxu0 %v295
    %421 = vmatpush1.bf16.msra.mxu0 %v294
    %422 = vmatprep.subr.bf16.mxu0 %v299
    %423 = vmatpush1.bf16.msra.mxu0 %v298
    %424 = vmatprep.subr.bf16.mxu0 %v359
    %425 = vmatpush1.bf16.msra.mxu0 %v356
    %426 = vmatprep.subr.bf16.mxu0 0
    %427 = vmatpush1.bf16.msra.mxu0 0
    %428 = vmatprep.subr.bf16.mxu0 0
    %429 = vmatpush1.bf16.msra.mxu0 0
    %430 = vmatprep.subr.bf16.mxu0 0
    %431 = vmatpush1.bf16.msra.mxu0 0
    %432 = vmatprep.subr.bf16.mxu0 0
    %433 = vmatpush1.bf16.msra.mxu0 0
    %434 = vmatprep.subr.bf16.mxu0 0
    %435 = vmatpush1.bf16.msra.mxu0 0
    %436 = vmatprep.mubr.bf16.mxu0 %v346
    %437 = vmatmul.mubr.bf16.gmra.mrb[0].mxu0 %v131
    %v438 = vpop.f32.mrb[0].mxu0
    %v439 = vadd.f32 0.0, %v438
    %v440 = vpop.f32.mrb[0].mxu0
    %v441 = vadd.f32 0.0, %v440
    %v442 = vpop.f32.mrb[0].mxu0
    %v443 = vadd.f32 0.0, %v442
    %v444 = vpop.f32.mrb[0].mxu0
    %v445 = vadd.f32 0.0, %v444
    %446 = vdwg.mxu0
    %v447 = vmax.f32 %v396, %v398
    %v448 = vmax.f32 %v400, %v402
    %v449 = vmax.f32 %v439, %v441
    %v450 = vmax.f32 %v443, %v445
    %v451 = vmax.f32 %v447, %v449
    %v452 = vmax.f32 %v448, %v450
    %v454 = vlaneseq
    %v455 = vshrl.u32 %v454, 7
    %v456 = vsub.s32 0, %v455
    %v457 = vrot.slane %v122, %v456
    %v459 = vadd.f32 %v451, %v457
    %v460 = vadd.f32 %v452, %v457
    %v461 = vmax.f32 %v459, 0.0
    %v462 = vmax.f32 %v460, 0.0
    %v463 = vpack.c.bf16 %v462, %v461
    %464 = vst [vmem:[#allocation2] sm:$0xff] %v463
    %v465 = vld [vmem:[%s0] sm:$0xff]
    %v466 = vld [vmem:[%s0 + $0x1c] sm:$0xff]
    %v469 = vunpack.c.l.b16 %v465
    %v470 = vunpack.c.h.b16 %v465
    %v471 = vunpack.c.l.b16 %v466
    %v472 = vunpack.c.h.b16 %v466
    %v473 = vpack.c.b16 %v471, %v469
    %v474 = vpack.c.b16 %v472, %v470
    %475 = vrot.lane.b32.xlu0 %v473, 72
    %v476 = vpop.permute.xlu0 %475
    %477 = vrot.lane.b32.xlu0 %v474, 72
    %v478 = vpop.permute.xlu0 %477
    %vm479 = vcmask 588800
    %v480 = vsel %vm479, %v476, %v478
    %v483 = vsel %vm344, %v478, 0
    %485 = vmatprep.subr.bf16.mxu0 %v261
    %486 = vmatpush1.bf16.msra.mxu0 %v260
    %487 = vmatprep.subr.bf16.mxu0 %v265
    %488 = vmatpush1.bf16.msra.mxu0 %v264
    %489 = vmatprep.subr.bf16.mxu0 %v269
    %490 = vmatpush1.bf16.msra.mxu0 %v268
    %491 = vmatprep.subr.bf16.mxu0 %v273
    %492 = vmatpush1.bf16.msra.mxu0 %v272
    %493 = vmatprep.subr.bf16.mxu0 %v277
    %494 = vmatpush1.bf16.msra.mxu0 %v276
    %495 = vmatprep.subr.bf16.mxu0 %v281
    %496 = vmatpush1.bf16.msra.mxu0 %v280
    %497 = vmatprep.subr.bf16.mxu0 %v285
    %498 = vmatpush1.bf16.msra.mxu0 %v284
    %499 = vmatprep.subr.bf16.mxu0 %v289
    %500 = vmatpush1.bf16.msra.mxu0 %v288
    %501 = vmatprep.subr.bf16.mxu0 %v293
    %502 = vmatpush1.bf16.msra.mxu0 %v292
    %503 = vmatprep.subr.bf16.mxu0 %v297
    %504 = vmatpush1.bf16.msra.mxu0 %v296
    %505 = vmatprep.subr.bf16.mxu0 %v353
    %506 = vmatpush1.bf16.msra.mxu0 %v350
    %507 = vmatprep.subr.bf16.mxu0 0
    %508 = vmatpush1.bf16.msra.mxu0 0
    %509 = vmatprep.subr.bf16.mxu0 0
    %510 = vmatpush1.bf16.msra.mxu0 0
    %511 = vmatprep.subr.bf16.mxu0 0
    %512 = vmatpush1.bf16.msra.mxu0 0
    %513 = vmatprep.subr.bf16.mxu0 0
    %514 = vmatpush1.bf16.msra.mxu0 0
    %515 = vmatprep.subr.bf16.mxu0 0
    %516 = vmatpush1.bf16.msra.mxu0 0
    %517 = vmatprep.mubr.bf16.mxu0 %v483
    %518 = vmatmul.mubr.bf16.gmra.mrb[0].mxu0 %v480
    %v519 = vpop.f32.mrb[0].mxu0
    %v520 = vadd.f32 0.0, %v519
    %v521 = vpop.f32.mrb[0].mxu0
    %v522 = vadd.f32 0.0, %v521
    %v523 = vpop.f32.mrb[0].mxu0
    %v524 = vadd.f32 0.0, %v523
    %v525 = vpop.f32.mrb[0].mxu0
    %v526 = vadd.f32 0.0, %v525
    %527 = vdwg.mxu0
    %528 = vmatprep.subr.bf16.mxu0 %v263
    %529 = vmatpush1.bf16.msra.mxu0 %v262
    %530 = vmatprep.subr.bf16.mxu0 %v267
    %531 = vmatpush1.bf16.msra.mxu0 %v266
    %532 = vmatprep.subr.bf16.mxu0 %v271
    %533 = vmatpush1.bf16.msra.mxu0 %v270
    %534 = vmatprep.subr.bf16.mxu0 %v275
    %535 = vmatpush1.bf16.msra.mxu0 %v274
    %536 = vmatprep.subr.bf16.mxu0 %v279
    %537 = vmatpush1.bf16.msra.mxu0 %v278
    %538 = vmatprep.subr.bf16.mxu0 %v283
    %539 = vmatpush1.bf16.msra.mxu0 %v282
    %540 = vmatprep.subr.bf16.mxu0 %v287
    %541 = vmatpush1.bf16.msra.mxu0 %v286
    %542 = vmatprep.subr.bf16.mxu0 %v291
    %543 = vmatpush1.bf16.msra.mxu0 %v290
    %544 = vmatprep.subr.bf16.mxu0 %v295
    %545 = vmatpush1.bf16.msra.mxu0 %v294
    %546 = vmatprep.subr.bf16.mxu0 %v299
    %547 = vmatpush1.bf16.msra.mxu0 %v298
    %548 = vmatprep.subr.bf16.mxu0 %v359
    %549 = vmatpush1.bf16.msra.mxu0 %v356
    %550 = vmatprep.subr.bf16.mxu0 0
    %551 = vmatpush1.bf16.msra.mxu0 0
    %552 = vmatprep.subr.bf16.mxu0 0
    %553 = vmatpush1.bf16.msra.mxu0 0
    %554 = vmatprep.subr.bf16.mxu0 0
    %555 = vmatpush1.bf16.msra.mxu0 0
    %556 = vmatprep.subr.bf16.mxu0 0
    %557 = vmatpush1.bf16.msra.mxu0 0
    %558 = vmatprep.subr.bf16.mxu0 0
    %559 = vmatpush1.bf16.msra.mxu0 0
    %560 = vmatprep.mubr.bf16.mxu0 %v483
    %561 = vmatmul.mubr.bf16.gmra.mrb[0].mxu0 %v480
    %v562 = vpop.f32.mrb[0].mxu0
    %v563 = vadd.f32 0.0, %v562
    %v564 = vpop.f32.mrb[0].mxu0
    %v565 = vadd.f32 0.0, %v564
    %v566 = vpop.f32.mrb[0].mxu0
    %v567 = vadd.f32 0.0, %v566
    %v568 = vpop.f32.mrb[0].mxu0
    %v569 = vadd.f32 0.0, %v568
    %570 = vdwg.mxu0
    %v571 = vmax.f32 %v520, %v522
    %v572 = vmax.f32 %v524, %v526
    %v573 = vmax.f32 %v563, %v565
    %v574 = vmax.f32 %v567, %v569
    %v575 = vmax.f32 %v571, %v573
    %v576 = vmax.f32 %v572, %v574
    %v577 = vadd.f32 %v575, %v457
    %v578 = vadd.f32 %v576, %v457
    %v579 = vmax.f32 %v577, 0.0
    %v580 = vmax.f32 %v578, 0.0
    %v581 = vpack.c.bf16 %v580, %v579
    %582 = vst [vmem:[#allocation2 + $0x8] sm:$0xff] %v581
    %v583 = vld [vmem:[%s0] sm:$0xff]
    %v584 = vld [vmem:[%s0 + $0x8] sm:$0xf]
    %v585 = vld [vmem:[%s0 + $0x1c] sm:$0xff]
    %v586 = vld [vmem:[%s0 + $0x24] sm:$0xf]
    %v591 = vunpack.c.l.b16 %v583
    %v592 = vunpack.c.h.b16 %v583
    %v593 = vunpack.c.l.b16 %v584
    %v594 = vunpack.c.l.b16 %v585
    %v595 = vunpack.c.h.b16 %v585
    %v596 = vunpack.c.l.b16 %v586
    %v597 = vpack.c.b16 %v594, %v591
    %v598 = vpack.c.b16 %v595, %v592
    %v599 = vpack.c.b16 %v596, %v593
    %600 = vrot.lane.b32.xlu0 %v597, 16
    %v601 = vpop.permute.xlu0 %600
    %602 = vrot.lane.b32.xlu0 %v598, 16
    %v603 = vpop.permute.xlu0 %602
    %604 = vrot.lane.b32.xlu0 %v599, 16
    %v605 = vpop.permute.xlu0 %604
    %vm606 = vcmask 130048
    %v607 = vsel %vm606, %v601, %v603
    %v608 = vsel %vm606, %v603, %v605
    %v611 = vsel %vm344, %v608, 0
    %613 = vmatprep.subr.bf16.mxu0 %v261
    %614 = vmatpush1.bf16.msra.mxu0 %v260
    %615 = vmatprep.subr.bf16.mxu0 %v265
    %616 = vmatpush1.bf16.msra.mxu0 %v264
    %617 = vmatprep.subr.bf16.mxu0 %v269
    %618 = vmatpush1.bf16.msra.mxu0 %v268
    %619 = vmatprep.subr.bf16.mxu0 %v273
    %620 = vmatpush1.bf16.msra.mxu0 %v272
    %621 = vmatprep.subr.bf16.mxu0 %v277
    %622 = vmatpush1.bf16.msra.mxu0 %v276
    %623 = vmatprep.subr.bf16.mxu0 %v281
    %624 = vmatpush1.bf16.msra.mxu0 %v280
    %625 = vmatprep.subr.bf16.mxu0 %v285
    %626 = vmatpush1.bf16.msra.mxu0 %v284
    %627 = vmatprep.subr.bf16.mxu0 %v289
    %628 = vmatpush1.bf16.msra.mxu0 %v288
    %629 = vmatprep.subr.bf16.mxu0 %v293
    %630 = vmatpush1.bf16.msra.mxu0 %v292
    %631 = vmatprep.subr.bf16.mxu0 %v297
    %632 = vmatpush1.bf16.msra.mxu0 %v296
    %633 = vmatprep.subr.bf16.mxu0 %v353
    %634 = vmatpush1.bf16.msra.mxu0 %v350
    %635 = vmatprep.subr.bf16.mxu0 0
    %636 = vmatpush1.bf16.msra.mxu0 0
    %637 = vmatprep.subr.bf16.mxu0 0
    %638 = vmatpush1.bf16.msra.mxu0 0
    %639 = vmatprep.subr.bf16.mxu0 0
    %640 = vmatpush1.bf16.msra.mxu0 0
    %641 = vmatprep.subr.bf16.mxu0 0
    %642 = vmatpush1.bf16.msra.mxu0 0
    %643 = vmatprep.subr.bf16.mxu0 0
    %644 = vmatpush1.bf16.msra.mxu0 0
    %645 = vmatprep.mubr.bf16.mxu0 %v611
    %646 = vmatmul.mubr.bf16.gmra.mrb[0].mxu0 %v607
    %v647 = vpop.f32.mrb[0].mxu0
    %v648 = vadd.f32 0.0, %v647
    %v649 = vpop.f32.mrb[0].mxu0
    %v650 = vadd.f32 0.0, %v649
    %v651 = vpop.f32.mrb[0].mxu0
    %v652 = vadd.f32 0.0, %v651
    %v653 = vpop.f32.mrb[0].mxu0
    %v654 = vadd.f32 0.0, %v653
    %655 = vdwg.mxu0
    %656 = vmatprep.subr.bf16.mxu0 %v263
    %657 = vmatpush1.bf16.msra.mxu0 %v262
    %658 = vmatprep.subr.bf16.mxu0 %v267
    %659 = vmatpush1.bf16.msra.mxu0 %v266
    %660 = vmatprep.subr.bf16.mxu0 %v271
    %661 = vmatpush1.bf16.msra.mxu0 %v270
    %662 = vmatprep.subr.bf16.mxu0 %v275
    %663 = vmatpush1.bf16.msra.mxu0 %v274
    %664 = vmatprep.subr.bf16.mxu0 %v279
    %665 = vmatpush1.bf16.msra.mxu0 %v278
    %666 = vmatprep.subr.bf16.mxu0 %v283
    %667 = vmatpush1.bf16.msra.mxu0 %v282
    %668 = vmatprep.subr.bf16.mxu0 %v287
    %669 = vmatpush1.bf16.msra.mxu0 %v286
    %670 = vmatprep.subr.bf16.mxu0 %v291
    %671 = vmatpush1.bf16.msra.mxu0 %v290
    %672 = vmatprep.subr.bf16.mxu0 %v295
    %673 = vmatpush1.bf16.msra.mxu0 %v294
    %674 = vmatprep.subr.bf16.mxu0 %v299
    %675 = vmatpush1.bf16.msra.mxu0 %v298
    %676 = vmatprep.subr.bf16.mxu0 %v359
    %677 = vmatpush1.bf16.msra.mxu0 %v356
    %678 = vmatprep.subr.bf16.mxu0 0
    %679 = vmatpush1.bf16.msra.mxu0 0
    %680 = vmatprep.subr.bf16.mxu0 0
    %681 = vmatpush1.bf16.msra.mxu0 0
    %682 = vmatprep.subr.bf16.mxu0 0
    %683 = vmatpush1.bf16.msra.mxu0 0
    %684 = vmatprep.subr.bf16.mxu0 0
    %685 = vmatpush1.bf16.msra.mxu0 0
    %686 = vmatprep.subr.bf16.mxu0 0
    %687 = vmatpush1.bf16.msra.mxu0 0
    %688 = vmatprep.mubr.bf16.mxu0 %v611
    %689 = vmatmul.mubr.bf16.gmra.mrb[0].mxu0 %v607
    %v690 = vpop.f32.mrb[0].mxu0
    %v691 = vadd.f32 0.0, %v690
    %v692 = vpop.f32.mrb[0].mxu0
    %v693 = vadd.f32 0.0, %v692
    %v694 = vpop.f32.mrb[0].mxu0
    %v695 = vadd.f32 0.0, %v694
    %v696 = vpop.f32.mrb[0].mxu0
    %v697 = vadd.f32 0.0, %v696
    %698 = vdwg.mxu0
    %v699 = vmax.f32 %v648, %v650
    %v700 = vmax.f32 %v652, %v654
    %v701 = vmax.f32 %v691, %v693
    %v702 = vmax.f32 %v695, %v697
    %v703 = vmax.f32 %v699, %v701
    %v704 = vmax.f32 %v700, %v702
    %v705 = vadd.f32 %v703, %v457
    %v706 = vadd.f32 %v704, %v457
    %v707 = vmax.f32 %v705, 0.0
    %v708 = vmax.f32 %v706, 0.0
    %v709 = vpack.c.bf16 %v708, %v707
    %710 = vst [vmem:[#allocation2 + $0x10] sm:$0xff] %v709
    %v711 = vld [vmem:[%s0 + $0x4] sm:$0xff]
    %v712 = vld [vmem:[%s0 + $0x20] sm:$0xff]
    %v715 = vunpack.c.l.b16 %v711
    %v716 = vunpack.c.h.b16 %v711
    %v717 = vunpack.c.l.b16 %v712
    %v718 = vunpack.c.h.b16 %v712
    %v719 = vpack.c.b16 %v717, %v715
    %v720 = vpack.c.b16 %v718, %v716
    %721 = vrot.lane.b32.xlu0 %v719, 88
    %v722 = vpop.permute.xlu0 %721
    %723 = vrot.lane.b32.xlu0 %v720, 88
    %v724 = vpop.permute.xlu0 %723
    %vm725 = vcmask 719872
    %v726 = vsel %vm725, %v722, %v724
    %v729 = vsel %vm344, %v724, 0
    %731 = vmatprep.subr.bf16.mxu0 %v261
    %732 = vmatpush1.bf16.msra.mxu0 %v260
    %733 = vmatprep.subr.bf16.mxu0 %v265
    %734 = vmatpush1.bf16.msra.mxu0 %v264
    %735 = vmatprep.subr.bf16.mxu0 %v269
    %736 = vmatpush1.bf16.msra.mxu0 %v268
    %737 = vmatprep.subr.bf16.mxu0 %v273
    %738 = vmatpush1.bf16.msra.mxu0 %v272
    %739 = vmatprep.subr.bf16.mxu0 %v277
    %740 = vmatpush1.bf16.msra.mxu0 %v276
    %741 = vmatprep.subr.bf16.mxu0 %v281
    %742 = vmatpush1.bf16.msra.mxu0 %v280
    %743 = vmatprep.subr.bf16.mxu0 %v285
    %744 = vmatpush1.bf16.msra.mxu0 %v284
    %745 = vmatprep.subr.bf16.mxu0 %v289
    %746 = vmatpush1.bf16.msra.mxu0 %v288
    %747 = vmatprep.subr.bf16.mxu0 %v293
    %748 = vmatpush1.bf16.msra.mxu0 %v292
    %749 = vmatprep.subr.bf16.mxu0 %v297
    %750 = vmatpush1.bf16.msra.mxu0 %v296
    %751 = vmatprep.subr.bf16.mxu0 %v353
    %752 = vmatpush1.bf16.msra.mxu0 %v350
    %753 = vmatprep.subr.bf16.mxu0 0
    %754 = vmatpush1.bf16.msra.mxu0 0
    %755 = vmatprep.subr.bf16.mxu0 0
    %756 = vmatpush1.bf16.msra.mxu0 0
    %757 = vmatprep.subr.bf16.mxu0 0
    %758 = vmatpush1.bf16.msra.mxu0 0
    %759 = vmatprep.subr.bf16.mxu0 0
    %760 = vmatpush1.bf16.msra.mxu0 0
    %761 = vmatprep.subr.bf16.mxu0 0
    %762 = vmatpush1.bf16.msra.mxu0 0
    %763 = vmatprep.mubr.bf16.mxu0 %v729
    %764 = vmatmul.mubr.bf16.gmra.mrb[0].mxu0 %v726
    %v765 = vpop.f32.mrb[0].mxu0
    %v766 = vadd.f32 0.0, %v765
    %v767 = vpop.f32.mrb[0].mxu0
    %v768 = vadd.f32 0.0, %v767
    %v769 = vpop.f32.mrb[0].mxu0
    %v770 = vadd.f32 0.0, %v769
    %v771 = vpop.f32.mrb[0].mxu0
    %v772 = vadd.f32 0.0, %v771
    %773 = vdwg.mxu0
    %774 = vmatprep.subr.bf16.mxu0 %v263
    %775 = vmatpush1.bf16.msra.mxu0 %v262
    %776 = vmatprep.subr.bf16.mxu0 %v267
    %777 = vmatpush1.bf16.msra.mxu0 %v266
    %778 = vmatprep.subr.bf16.mxu0 %v271
    %779 = vmatpush1.bf16.msra.mxu0 %v270
    %780 = vmatprep.subr.bf16.mxu0 %v275
    %781 = vmatpush1.bf16.msra.mxu0 %v274
    %782 = vmatprep.subr.bf16.mxu0 %v279
    %783 = vmatpush1.bf16.msra.mxu0 %v278
    %784 = vmatprep.subr.bf16.mxu0 %v283
    %785 = vmatpush1.bf16.msra.mxu0 %v282
    %786 = vmatprep.subr.bf16.mxu0 %v287
    %787 = vmatpush1.bf16.msra.mxu0 %v286
    %788 = vmatprep.subr.bf16.mxu0 %v291
    %789 = vmatpush1.bf16.msra.mxu0 %v290
    %790 = vmatprep.subr.bf16.mxu0 %v295
    %791 = vmatpush1.bf16.msra.mxu0 %v294
    %792 = vmatprep.subr.bf16.mxu0 %v299
    %793 = vmatpush1.bf16.msra.mxu0 %v298
    %794 = vmatprep.subr.bf16.mxu0 %v359
    %795 = vmatpush1.bf16.msra.mxu0 %v356
    %796 = vmatprep.subr.bf16.mxu0 0
    %797 = vmatpush1.bf16.msra.mxu0 0
    %798 = vmatprep.subr.bf16.mxu0 0
    %799 = vmatpush1.bf16.msra.mxu0 0
    %800 = vmatprep.subr.bf16.mxu0 0
    %801 = vmatpush1.bf16.msra.mxu0 0
    %802 = vmatprep.subr.bf16.mxu0 0
    %803 = vmatpush1.bf16.msra.mxu0 0
    %804 = vmatprep.subr.bf16.mxu0 0
    %805 = vmatpush1.bf16.msra.mxu0 0
    %806 = vmatprep.mubr.bf16.mxu0 %v729
    %807 = vmatmul.mubr.bf16.gmra.mrb[0].mxu0 %v726
    %v808 = vpop.f32.mrb[0].mxu0
    %v809 = vadd.f32 0.0, %v808
    %v810 = vpop.f32.mrb[0].mxu0
    %v811 = vadd.f32 0.0, %v810
    %v812 = vpop.f32.mrb[0].mxu0
    %v813 = vadd.f32 0.0, %v812
    %v814 = vpop.f32.mrb[0].mxu0
    %v815 = vadd.f32 0.0, %v814
    %816 = vdwg.mxu0
    %v817 = vmax.f32 %v766, %v768
    %v818 = vmax.f32 %v770, %v772
    %v819 = vmax.f32 %v809, %v811
    %v820 = vmax.f32 %v813, %v815
    %v821 = vmax.f32 %v817, %v819
    %v822 = vmax.f32 %v818, %v820
    %v823 = vadd.f32 %v821, %v457
    %v824 = vadd.f32 %v822, %v457
    %v825 = vmax.f32 %v823, 0.0
    %v826 = vmax.f32 %v824, 0.0
    %v827 = vpack.c.bf16 %v826, %v825
    %828 = vst [vmem:[#allocation2 + $0x18] sm:$0xff] %v827
    %v829 = vld [vmem:[%s0 + $0x4] sm:$0xff]
    %v830 = vld [vmem:[%s0 + $0xc] sm:$0xf]
    %v831 = vld [vmem:[%s0 + $0x20] sm:$0xff]
    %v832 = vld [vmem:[%s0 + $0x28] sm:$0xf]
    %v837 = vunpack.c.l.b16 %v829
    %v838 = vunpack.c.h.b16 %v829
    %v839 = vunpack.c.l.b16 %v830
    %v840 = vunpack.c.l.b16 %v831
    %v841 = vunpack.c.h.b16 %v831
    %v842 = vunpack.c.l.b16 %v832
    %v843 = vpack.c.b16 %v840, %v837
    %v844 = vpack.c.b16 %v841, %v838
    %v845 = vpack.c.b16 %v842, %v839
    %846 = vrot.lane.b32.xlu0 %v843, 32
    %v847 = vpop.permute.xlu0 %846
    %848 = vrot.lane.b32.xlu0 %v844, 32
    %v849 = vpop.permute.xlu0 %848
    %850 = vrot.lane.b32.xlu0 %v845, 32
    %v851 = vpop.permute.xlu0 %850
    %vm852 = vcmask 261120
    %v853 = vsel %vm852, %v847, %v849
    %v854 = vsel %vm852, %v849, %v851
    %v857 = vsel %vm344, %v854, 0
    %859 = vmatprep.subr.bf16.mxu0 %v261
    %860 = vmatpush1.bf16.msra.mxu0 %v260
    %861 = vmatprep.subr.bf16.mxu0 %v265
    %862 = vmatpush1.bf16.msra.mxu0 %v264
    %863 = vmatprep.subr.bf16.mxu0 %v269
    %864 = vmatpush1.bf16.msra.mxu0 %v268
    %865 = vmatprep.subr.bf16.mxu0 %v273
    %866 = vmatpush1.bf16.msra.mxu0 %v272
    %867 = vmatprep.subr.bf16.mxu0 %v277
    %868 = vmatpush1.bf16.msra.mxu0 %v276
    %869 = vmatprep.subr.bf16.mxu0 %v281
    %870 = vmatpush1.bf16.msra.mxu0 %v280
    %871 = vmatprep.subr.bf16.mxu0 %v285
    %872 = vmatpush1.bf16.msra.mxu0 %v284
    %873 = vmatprep.subr.bf16.mxu0 %v289
    %874 = vmatpush1.bf16.msra.mxu0 %v288
    %875 = vmatprep.subr.bf16.mxu0 %v293
    %876 = vmatpush1.bf16.msra.mxu0 %v292
    %877 = vmatprep.subr.bf16.mxu0 %v297
    %878 = vmatpush1.bf16.msra.mxu0 %v296
    %879 = vmatprep.subr.bf16.mxu0 %v353
    %880 = vmatpush1.bf16.msra.mxu0 %v350
    %881 = vmatprep.subr.bf16.mxu0 0
    %882 = vmatpush1.bf16.msra.mxu0 0
    %883 = vmatprep.subr.bf16.mxu0 0
    %884 = vmatpush1.bf16.msra.mxu0 0
    %885 = vmatprep.subr.bf16.mxu0 0
    %886 = vmatpush1.bf16.msra.mxu0 0
    %887 = vmatprep.subr.bf16.mxu0 0
    %888 = vmatpush1.bf16.msra.mxu0 0
    %889 = vmatprep.subr.bf16.mxu0 0
    %890 = vmatpush1.bf16.msra.mxu0 0
    %891 = vmatprep.mubr.bf16.mxu0 %v857
    %892 = vmatmul.mubr.bf16.gmra.mrb[0].mxu0 %v853
    %v893 = vpop.f32.mrb[0].mxu0
    %v894 = vadd.f32 0.0, %v893
    %v895 = vpop.f32.mrb[0].mxu0
    %v896 = vadd.f32 0.0, %v895
    %v897 = vpop.f32.mrb[0].mxu0
    %v898 = vadd.f32 0.0, %v897
    %v899 = vpop.f32.mrb[0].mxu0
    %v900 = vadd.f32 0.0, %v899
    %901 = vdwg.mxu0
    %902 = vmatprep.subr.bf16.mxu0 %v263
    %903 = vmatpush1.bf16.msra.mxu0 %v262
    %904 = vmatprep.subr.bf16.mxu0 %v267
    %905 = vmatpush1.bf16.msra.mxu0 %v266
    %906 = vmatprep.subr.bf16.mxu0 %v271
    %907 = vmatpush1.bf16.msra.mxu0 %v270
    %908 = vmatprep.subr.bf16.mxu0 %v275
    %909 = vmatpush1.bf16.msra.mxu0 %v274
    %910 = vmatprep.subr.bf16.mxu0 %v279
    %911 = vmatpush1.bf16.msra.mxu0 %v278
    %912 = vmatprep.subr.bf16.mxu0 %v283
    %913 = vmatpush1.bf16.msra.mxu0 %v282
    %914 = vmatprep.subr.bf16.mxu0 %v287
    %915 = vmatpush1.bf16.msra.mxu0 %v286
    %916 = vmatprep.subr.bf16.mxu0 %v291
    %917 = vmatpush1.bf16.msra.mxu0 %v290
    %918 = vmatprep.subr.bf16.mxu0 %v295
    %919 = vmatpush1.bf16.msra.mxu0 %v294
    %920 = vmatprep.subr.bf16.mxu0 %v299
    %921 = vmatpush1.bf16.msra.mxu0 %v298
    %922 = vmatprep.subr.bf16.mxu0 %v359
    %923 = vmatpush1.bf16.msra.mxu0 %v356
    %924 = vmatprep.subr.bf16.mxu0 0
    %925 = vmatpush1.bf16.msra.mxu0 0
    %926 = vmatprep.subr.bf16.mxu0 0
    %927 = vmatpush1.bf16.msra.mxu0 0
    %928 = vmatprep.subr.bf16.mxu0 0
    %929 = vmatpush1.bf16.msra.mxu0 0
    %930 = vmatprep.subr.bf16.mxu0 0
    %931 = vmatpush1.bf16.msra.mxu0 0
    %932 = vmatprep.subr.bf16.mxu0 0
    %933 = vmatpush1.bf16.msra.mxu0 0
    %934 = vmatprep.mubr.bf16.mxu0 %v857
    %935 = vmatmul.mubr.bf16.gmra.mrb[0].mxu0 %v853
    %v936 = vpop.f32.mrb[0].mxu0
    %v937 = vadd.f32 0.0, %v936
    %v938 = vpop.f32.mrb[0].mxu0
    %v939 = vadd.f32 0.0, %v938
    %v940 = vpop.f32.mrb[0].mxu0
    %v941 = vadd.f32 0.0, %v940
    %v942 = vpop.f32.mrb[0].mxu0
    %v943 = vadd.f32 0.0, %v942
    %944 = vdwg.mxu0
    %v945 = vmax.f32 %v894, %v896
    %v946 = vmax.f32 %v898, %v900
    %v947 = vmax.f32 %v937, %v939
    %v948 = vmax.f32 %v941, %v943
    %v949 = vmax.f32 %v945, %v947
    %v950 = vmax.f32 %v946, %v948
    %v951 = vadd.f32 %v949, %v457
    %v952 = vadd.f32 %v950, %v457
    %v953 = vmax.f32 %v951, 0.0
    %v954 = vmax.f32 %v952, 0.0
    %v955 = vpack.c.bf16 %v954, %v953
    %956 = vst [vmem:[#allocation2 + $0x20] sm:$0xff] %v955
    %v957 = vld [vmem:[%s0 + $0x8] sm:$0xff]
    %v958 = vld [vmem:[%s0 + $0x24] sm:$0xff]
    %v961 = vunpack.c.l.b16 %v957
    %v962 = vunpack.c.h.b16 %v957
    %v963 = vunpack.c.l.b16 %v958
    %v964 = vunpack.c.h.b16 %v958
    %v965 = vpack.c.b16 %v963, %v961
    %v966 = vpack.c.b16 %v964, %v962
    %967 = vrot.lane.b32.xlu0 %v965, 104
    %v968 = vpop.permute.xlu0 %967
    %969 = vrot.lane.b32.xlu0 %v966, 104
    %v970 = vpop.permute.xlu0 %969
    %vm971 = vcmask 850944
    %v972 = vsel %vm971, %v968, %v970
    %v975 = vsel %vm344, %v970, 0
    %977 = vmatprep.subr.bf16.mxu0 %v261
    %978 = vmatpush1.bf16.msra.mxu0 %v260
    %979 = vmatprep.subr.bf16.mxu0 %v265
    %980 = vmatpush1.bf16.msra.mxu0 %v264
    %981 = vmatprep.subr.bf16.mxu0 %v269
    %982 = vmatpush1.bf16.msra.mxu0 %v268
    %983 = vmatprep.subr.bf16.mxu0 %v273
    %984 = vmatpush1.bf16.msra.mxu0 %v272
    %985 = vmatprep.subr.bf16.mxu0 %v277
    %986 = vmatpush1.bf16.msra.mxu0 %v276
    %987 = vmatprep.subr.bf16.mxu0 %v281
    %988 = vmatpush1.bf16.msra.mxu0 %v280
    %989 = vmatprep.subr.bf16.mxu0 %v285
    %990 = vmatpush1.bf16.msra.mxu0 %v284
    %991 = vmatprep.subr.bf16.mxu0 %v289
    %992 = vmatpush1.bf16.msra.mxu0 %v288
    %993 = vmatprep.subr.bf16.mxu0 %v293
    %994 = vmatpush1.bf16.msra.mxu0 %v292
    %995 = vmatprep.subr.bf16.mxu0 %v297
    %996 = vmatpush1.bf16.msra.mxu0 %v296
    %997 = vmatprep.subr.bf16.mxu0 %v353
    %998 = vmatpush1.bf16.msra.mxu0 %v350
    %999 = vmatprep.subr.bf16.mxu0 0
    %1000 = vmatpush1.bf16.msra.mxu0 0
    %1001 = vmatprep.subr.bf16.mxu0 0
    %1002 = vmatpush1.bf16.msra.mxu0 0
    %1003 = vmatprep.subr.bf16.mxu0 0
    %1004 = vmatpush1.bf16.msra.mxu0 0
    %1005 = vmatprep.subr.bf16.mxu0 0
    %1006 = vmatpush1.bf16.msra.mxu0 0
    %1007 = vmatprep.subr.bf16.mxu0 0
    %1008 = vmatpush1.bf16.msra.mxu0 0
    %1009 = vmatprep.mubr.bf16.mxu0 %v975
    %1010 = vmatmul.mubr.bf16.gmra.mrb[0].mxu0 %v972
    %v1011 = vpop.f32.mrb[0].mxu0
    %v1012 = vadd.f32 0.0, %v1011
    %v1013 = vpop.f32.mrb[0].mxu0
    %v1014 = vadd.f32 0.0, %v1013
    %v1015 = vpop.f32.mrb[0].mxu0
    %v1016 = vadd.f32 0.0, %v1015
    %v1017 = vpop.f32.mrb[0].mxu0
    %v1018 = vadd.f32 0.0, %v1017
    %1019 = vdwg.mxu0
    %1020 = vmatprep.subr.bf16.mxu0 %v263
    %1021 = vmatpush1.bf16.msra.mxu0 %v262
    %1022 = vmatprep.subr.bf16.mxu0 %v267
    %1023 = vmatpush1.bf16.msra.mxu0 %v266
    %1024 = vmatprep.subr.bf16.mxu0 %v271
    %1025 = vmatpush1.bf16.msra.mxu0 %v270
    %1026 = vmatprep.subr.bf16.mxu0 %v275
    %1027 = vmatpush1.bf16.msra.mxu0 %v274
    %1028 = vmatprep.subr.bf16.mxu0 %v279
    %1029 = vmatpush1.bf16.msra.mxu0 %v278
    %1030 = vmatprep.subr.bf16.mxu0 %v283
    %1031 = vmatpush1.bf16.msra.mxu0 %v282
    %1032 = vmatprep.subr.bf16.mxu0 %v287
    %1033 = vmatpush1.bf16.msra.mxu0 %v286
    %1034 = vmatprep.subr.bf16.mxu0 %v291
    %1035 = vmatpush1.bf16.msra.mxu0 %v290
    %1036 = vmatprep.subr.bf16.mxu0 %v295
    %1037 = vmatpush1.bf16.msra.mxu0 %v294
    %1038 = vmatprep.subr.bf16.mxu0 %v299
    %1039 = vmatpush1.bf16.msra.mxu0 %v298
    %1040 = vmatprep.subr.bf16.mxu0 %v359
    %1041 = vmatpush1.bf16.msra.mxu0 %v356
    %1042 = vmatprep.subr.bf16.mxu0 0
    %1043 = vmatpush1.bf16.msra.mxu0 0
    %1044 = vmatprep.subr.bf16.mxu0 0
    %1045 = vmatpush1.bf16.msra.mxu0 0
    %1046 = vmatprep.subr.bf16.mxu0 0
    %1047 = vmatpush1.bf16.msra.mxu0 0
    %1048 = vmatprep.subr.bf16.mxu0 0
    %1049 = vmatpush1.bf16.msra.mxu0 0
    %1050 = vmatprep.subr.bf16.mxu0 0
    %1051 = vmatpush1.bf16.msra.mxu0 0
    %1052 = vmatprep.mubr.bf16.mxu0 %v975
    %1053 = vmatmul.mubr.bf16.gmra.mrb[0].mxu0 %v972
    %v1054 = vpop.f32.mrb[0].mxu0
    %v1055 = vadd.f32 0.0, %v1054
    %v1056 = vpop.f32.mrb[0].mxu0
    %v1057 = vadd.f32 0.0, %v1056
    %v1058 = vpop.f32.mrb[0].mxu0
    %v1059 = vadd.f32 0.0, %v1058
    %v1060 = vpop.f32.mrb[0].mxu0
    %v1061 = vadd.f32 0.0, %v1060
    %1062 = vdwg.mxu0
    %v1063 = vmax.f32 %v1012, %v1014
    %v1064 = vmax.f32 %v1016, %v1018
    %v1065 = vmax.f32 %v1055, %v1057
    %v1066 = vmax.f32 %v1059, %v1061
    %v1067 = vmax.f32 %v1063, %v1065
    %v1068 = vmax.f32 %v1064, %v1066
    %v1069 = vadd.f32 %v1067, %v457
    %v1070 = vadd.f32 %v1068, %v457
    %v1071 = vmax.f32 %v1069, 0.0
    %v1072 = vmax.f32 %v1070, 0.0
    %v1073 = vpack.c.bf16 %v1072, %v1071
    %1074 = vst [vmem:[#allocation2 + $0x28] sm:$0xff] %v1073
    %v1075 = vld [vmem:[%s0 + $0x8] sm:$0xff]
    %v1076 = vld [vmem:[%s0 + $0x24] sm:$0xff]
    %v1079 = vunpack.c.l.b16 %v1075
    %v1080 = vunpack.c.h.b16 %v1075
    %v1081 = vunpack.c.l.b16 %v1076
    %v1082 = vunpack.c.h.b16 %v1076
    %v1083 = vpack.c.b16 %v1081, %v1079
    %v1084 = vpack.c.b16 %v1082, %v1080
    %1085 = vrot.lane.b32.xlu0 %v1083, 48
    %v1086 = vpop.permute.xlu0 %1085
    %1087 = vrot.lane.b32.xlu0 %v1084, 48
    %v1088 = vpop.permute.xlu0 %1087
    %vm1089 = vcmask 392192
    %v1090 = vsel %vm1089, %v1086, %v1088
    %v1093 = vsel %vm344, %v1088, 0
    %1095 = vmatprep.subr.bf16.mxu0 %v261
    %1096 = vmatpush1.bf16.msra.mxu0 %v260
    %1097 = vmatprep.subr.bf16.mxu0 %v265
    %1098 = vmatpush1.bf16.msra.mxu0 %v264
    %1099 = vmatprep.subr.bf16.mxu0 %v269
    %1100 = vmatpush1.bf16.msra.mxu0 %v268
    %1101 = vmatprep.subr.bf16.mxu0 %v273
    %1102 = vmatpush1.bf16.msra.mxu0 %v272
    %1103 = vmatprep.subr.bf16.mxu0 %v277
    %1104 = vmatpush1.bf16.msra.mxu0 %v276
    %1105 = vmatprep.subr.bf16.mxu0 %v281
    %1106 = vmatpush1.bf16.msra.mxu0 %v280
    %1107 = vmatprep.subr.bf16.mxu0 %v285
    %1108 = vmatpush1.bf16.msra.mxu0 %v284
    %1109 = vmatprep.subr.bf16.mxu0 %v289
    %1110 = vmatpush1.bf16.msra.mxu0 %v288
    %1111 = vmatprep.subr.bf16.mxu0 %v293
    %1112 = vmatpush1.bf16.msra.mxu0 %v292
    %1113 = vmatprep.subr.bf16.mxu0 %v297
    %1114 = vmatpush1.bf16.msra.mxu0 %v296
    %1115 = vmatprep.subr.bf16.mxu0 %v353
    %1116 = vmatpush1.bf16.msra.mxu0 %v350
    %1117 = vmatprep.subr.bf16.mxu0 0
    %1118 = vmatpush1.bf16.msra.mxu0 0
    %1119 = vmatprep.subr.bf16.mxu0 0
    %1120 = vmatpush1.bf16.msra.mxu0 0
    %1121 = vmatprep.subr.bf16.mxu0 0
    %1122 = vmatpush1.bf16.msra.mxu0 0
    %1123 = vmatprep.subr.bf16.mxu0 0
    %1124 = vmatpush1.bf16.msra.mxu0 0
    %1125 = vmatprep.subr.bf16.mxu0 0
    %1126 = vmatpush1.bf16.msra.mxu0 0
    %1127 = vmatprep.mubr.bf16.mxu0 %v1093
    %1128 = vmatmul.mubr.bf16.gmra.mrb[0].mxu0 %v1090
    %v1129 = vpop.f32.mrb[0].mxu0
    %v1130 = vadd.f32 0.0, %v1129
    %v1131 = vpop.f32.mrb[0].mxu0
    %v1132 = vadd.f32 0.0, %v1131
    %v1133 = vpop.f32.mrb[0].mxu0
    %v1134 = vadd.f32 0.0, %v1133
    %v1135 = vpop.f32.mrb[0].mxu0
    %v1136 = vadd.f32 0.0, %v1135
    %1137 = vdwg.mxu0
    %1138 = vmatprep.subr.bf16.mxu0 %v263
    %1139 = vmatpush1.bf16.msra.mxu0 %v262
    %1140 = vmatprep.subr.bf16.mxu0 %v267
    %1141 = vmatpush1.bf16.msra.mxu0 %v266
    %1142 = vmatprep.subr.bf16.mxu0 %v271
    %1143 = vmatpush1.bf16.msra.mxu0 %v270
    %1144 = vmatprep.subr.bf16.mxu0 %v275
    %1145 = vmatpush1.bf16.msra.mxu0 %v274
    %1146 = vmatprep.subr.bf16.mxu0 %v279
    %1147 = vmatpush1.bf16.msra.mxu0 %v278
    %1148 = vmatprep.subr.bf16.mxu0 %v283
    %1149 = vmatpush1.bf16.msra.mxu0 %v282
    %1150 = vmatprep.subr.bf16.mxu0 %v287
    %1151 = vmatpush1.bf16.msra.mxu0 %v286
    %1152 = vmatprep.subr.bf16.mxu0 %v291
    %1153 = vmatpush1.bf16.msra.mxu0 %v290
    %1154 = vmatprep.subr.bf16.mxu0 %v295
    %1155 = vmatpush1.bf16.msra.mxu0 %v294
    %1156 = vmatprep.subr.bf16.mxu0 %v299
    %1157 = vmatpush1.bf16.msra.mxu0 %v298
    %1158 = vmatprep.subr.bf16.mxu0 %v359
    %1159 = vmatpush1.bf16.msra.mxu0 %v356
    %1160 = vmatprep.subr.bf16.mxu0 0
    %1161 = vmatpush1.bf16.msra.mxu0 0
    %1162 = vmatprep.subr.bf16.mxu0 0
    %1163 = vmatpush1.bf16.msra.mxu0 0
    %1164 = vmatprep.subr.bf16.mxu0 0
    %1165 = vmatpush1.bf16.msra.mxu0 0
    %1166 = vmatprep.subr.bf16.mxu0 0
    %1167 = vmatpush1.bf16.msra.mxu0 0
    %1168 = vmatprep.subr.bf16.mxu0 0
    %1169 = vmatpush1.bf16.msra.mxu0 0
    %1170 = vmatprep.mubr.bf16.mxu0 %v1093
    %1171 = vmatmul.mubr.bf16.gmra.mrb[0].mxu0 %v1090
    %v1172 = vpop.f32.mrb[0].mxu0
    %v1173 = vadd.f32 0.0, %v1172
    %v1174 = vpop.f32.mrb[0].mxu0
    %v1175 = vadd.f32 0.0, %v1174
    %v1176 = vpop.f32.mrb[0].mxu0
    %v1177 = vadd.f32 0.0, %v1176
    %v1178 = vpop.f32.mrb[0].mxu0
    %v1179 = vadd.f32 0.0, %v1178
    %1180 = vdwg.mxu0
    %v1181 = vmax.f32 %v1130, %v1132
    %v1182 = vmax.f32 %v1134, %v1136
    %v1183 = vmax.f32 %v1173, %v1175
    %v1184 = vmax.f32 %v1177, %v1179
    %v1185 = vmax.f32 %v1181, %v1183
    %v1186 = vmax.f32 %v1182, %v1184
    %v1187 = vadd.f32 %v1185, %v457
    %v1188 = vadd.f32 %v1186, %v457
    %v1189 = vmax.f32 %v1187, 0.0
    %v1190 = vmax.f32 %v1188, 0.0
    %v1191 = vpack.c.bf16 %v1190, %v1189
    %1192 = vst [vmem:[#allocation2 + $0x30] sm:$0xff] %v1191
    %v1193 = vld [vmem:[%s0 + $0xc] sm:$0xff]
    %v1194 = vld [vmem:[%s0 + $0x28] sm:$0xff]
    %v1197 = vunpack.c.l.b16 %v1193
    %v1198 = vunpack.c.h.b16 %v1193
    %v1199 = vunpack.c.l.b16 %v1194
    %v1200 = vunpack.c.h.b16 %v1194
    %v1201 = vpack.c.b16 %v1199, %v1197
    %v1202 = vpack.c.b16 %v1200, %v1198
    %1203 = vrot.lane.b32.xlu0 %v1201, 120
    %v1204 = vpop.permute.xlu0 %1203
    %1205 = vrot.lane.b32.xlu0 %v1202, 120
    %v1206 = vpop.permute.xlu0 %1205
    %vm1207 = vcmask 982016
    %v1208 = vsel %vm1207, %v1204, %v1206
    %v1211 = vsel %vm344, %v1206, 0
    %1213 = vmatprep.subr.bf16.mxu0 %v261
    %1214 = vmatpush1.bf16.msra.mxu0 %v260
    %1215 = vmatprep.subr.bf16.mxu0 %v265
    %1216 = vmatpush1.bf16.msra.mxu0 %v264
    %1217 = vmatprep.subr.bf16.mxu0 %v269
    %1218 = vmatpush1.bf16.msra.mxu0 %v268
    %1219 = vmatprep.subr.bf16.mxu0 %v273
    %1220 = vmatpush1.bf16.msra.mxu0 %v272
    %1221 = vmatprep.subr.bf16.mxu0 %v277
    %1222 = vmatpush1.bf16.msra.mxu0 %v276
    %1223 = vmatprep.subr.bf16.mxu0 %v281
    %1224 = vmatpush1.bf16.msra.mxu0 %v280
    %1225 = vmatprep.subr.bf16.mxu0 %v285
    %1226 = vmatpush1.bf16.msra.mxu0 %v284
    %1227 = vmatprep.subr.bf16.mxu0 %v289
    %1228 = vmatpush1.bf16.msra.mxu0 %v288
    %1229 = vmatprep.subr.bf16.mxu0 %v293
    %1230 = vmatpush1.bf16.msra.mxu0 %v292
    %1231 = vmatprep.subr.bf16.mxu0 %v297
    %1232 = vmatpush1.bf16.msra.mxu0 %v296
    %1233 = vmatprep.subr.bf16.mxu0 %v353
    %1234 = vmatpush1.bf16.msra.mxu0 %v350
    %1235 = vmatprep.subr.bf16.mxu0 0
    %1236 = vmatpush1.bf16.msra.mxu0 0
    %1237 = vmatprep.subr.bf16.mxu0 0
    %1238 = vmatpush1.bf16.msra.mxu0 0
    %1239 = vmatprep.subr.bf16.mxu0 0
    %1240 = vmatpush1.bf16.msra.mxu0 0
    %1241 = vmatprep.subr.bf16.mxu0 0
    %1242 = vmatpush1.bf16.msra.mxu0 0
    %1243 = vmatprep.subr.bf16.mxu0 0
    %1244 = vmatpush1.bf16.msra.mxu0 0
    %1245 = vmatprep.mubr.bf16.mxu0 %v1211
    %1246 = vmatmul.mubr.bf16.gmra.mrb[0].mxu0 %v1208
    %v1247 = vpop.f32.mrb[0].mxu0
    %v1248 = vadd.f32 0.0, %v1247
    %v1249 = vpop.f32.mrb[0].mxu0
    %v1250 = vadd.f32 0.0, %v1249
    %v1251 = vpop.f32.mrb[0].mxu0
    %v1252 = vadd.f32 0.0, %v1251
    %v1253 = vpop.f32.mrb[0].mxu0
    %v1254 = vadd.f32 0.0, %v1253
    %1255 = vdwg.mxu0
    %1256 = vmatprep.subr.bf16.mxu0 %v263
    %1257 = vmatpush1.bf16.msra.mxu0 %v262
    %1258 = vmatprep.subr.bf16.mxu0 %v267
    %1259 = vmatpush1.bf16.msra.mxu0 %v266
    %1260 = vmatprep.subr.bf16.mxu0 %v271
    %1261 = vmatpush1.bf16.msra.mxu0 %v270
    %1262 = vmatprep.subr.bf16.mxu0 %v275
    %1263 = vmatpush1.bf16.msra.mxu0 %v274
    %1264 = vmatprep.subr.bf16.mxu0 %v279
    %1265 = vmatpush1.bf16.msra.mxu0 %v278
    %1266 = vmatprep.subr.bf16.mxu0 %v283
    %1267 = vmatpush1.bf16.msra.mxu0 %v282
    %1268 = vmatprep.subr.bf16.mxu0 %v287
    %1269 = vmatpush1.bf16.msra.mxu0 %v286
    %1270 = vmatprep.subr.bf16.mxu0 %v291
    %1271 = vmatpush1.bf16.msra.mxu0 %v290
    %1272 = vmatprep.subr.bf16.mxu0 %v295
    %1273 = vmatpush1.bf16.msra.mxu0 %v294
    %1274 = vmatprep.subr.bf16.mxu0 %v299
    %1275 = vmatpush1.bf16.msra.mxu0 %v298
    %1276 = vmatprep.subr.bf16.mxu0 %v359
    %1277 = vmatpush1.bf16.msra.mxu0 %v356
    %1278 = vmatprep.subr.bf16.mxu0 0
    %1279 = vmatpush1.bf16.msra.mxu0 0
    %1280 = vmatprep.subr.bf16.mxu0 0
    %1281 = vmatpush1.bf16.msra.mxu0 0
    %1282 = vmatprep.subr.bf16.mxu0 0
    %1283 = vmatpush1.bf16.msra.mxu0 0
    %1284 = vmatprep.subr.bf16.mxu0 0
    %1285 = vmatpush1.bf16.msra.mxu0 0
    %1286 = vmatprep.subr.bf16.mxu0 0
    %1287 = vmatpush1.bf16.msra.mxu0 0
    %1288 = vmatprep.mubr.bf16.mxu0 %v1211
    %1289 = vmatmul.mubr.bf16.gmra.mrb[0].mxu0 %v1208
    %v1290 = vpop.f32.mrb[0].mxu0
    %v1291 = vadd.f32 0.0, %v1290
    %v1292 = vpop.f32.mrb[0].mxu0
    %v1293 = vadd.f32 0.0, %v1292
    %v1294 = vpop.f32.mrb[0].mxu0
    %v1295 = vadd.f32 0.0, %v1294
    %v1296 = vpop.f32.mrb[0].mxu0
    %v1297 = vadd.f32 0.0, %v1296
    %1298 = vdwg.mxu0
    %v1299 = vmax.f32 %v1248, %v1250
    %v1300 = vmax.f32 %v1252, %v1254
    %v1301 = vmax.f32 %v1291, %v1293
    %v1302 = vmax.f32 %v1295, %v1297
    %v1303 = vmax.f32 %v1299, %v1301
    %v1304 = vmax.f32 %v1300, %v1302
    %v1305 = vadd.f32 %v1303, %v457
    %v1306 = vadd.f32 %v1304, %v457
    %v1307 = vmax.f32 %v1305, 0.0
    %v1308 = vmax.f32 %v1306, 0.0
    %v1309 = vpack.c.bf16 %v1308, %v1307
    %1310 = vst [vmem:[#allocation2 + $0x38] sm:$0xff] %v1309
    %v1311 = vld [vmem:[%s0 + $0xc] sm:$0xff]
    %v1312 = vld [vmem:[%s0 + $0x28] sm:$0xff]
    %v1315 = vunpack.c.l.b16 %v1311
    %v1316 = vunpack.c.h.b16 %v1311
    %v1317 = vunpack.c.l.b16 %v1312
    %v1318 = vunpack.c.h.b16 %v1312
    %v1319 = vpack.c.b16 %v1317, %v1315
    %v1320 = vpack.c.b16 %v1318, %v1316
    %1321 = vrot.lane.b32.xlu0 %v1319, 64
    %v1322 = vpop.permute.xlu0 %1321
    %1323 = vrot.lane.b32.xlu0 %v1320, 64
    %v1324 = vpop.permute.xlu0 %1323
    %vm1325 = vcmask 523264
    %v1326 = vsel %vm1325, %v1322, %v1324
    %v1329 = vsel %vm344, %v1324, 0
    %1331 = vmatprep.subr.bf16.mxu0 %v261
    %1332 = vmatpush1.bf16.msra.mxu0 %v260
    %1333 = vmatprep.subr.bf16.mxu0 %v265
    %1334 = vmatpush1.bf16.msra.mxu0 %v264
    %1335 = vmatprep.subr.bf16.mxu0 %v269
    %1336 = vmatpush1.bf16.msra.mxu0 %v268
    %1337 = vmatprep.subr.bf16.mxu0 %v273
    %1338 = vmatpush1.bf16.msra.mxu0 %v272
    %1339 = vmatprep.subr.bf16.mxu0 %v277
    %1340 = vmatpush1.bf16.msra.mxu0 %v276
    %1341 = vmatprep.subr.bf16.mxu0 %v281
    %1342 = vmatpush1.bf16.msra.mxu0 %v280
    %1343 = vmatprep.subr.bf16.mxu0 %v285
    %1344 = vmatpush1.bf16.msra.mxu0 %v284
    %1345 = vmatprep.subr.bf16.mxu0 %v289
    %1346 = vmatpush1.bf16.msra.mxu0 %v288
    %1347 = vmatprep.subr.bf16.mxu0 %v293
    %1348 = vmatpush1.bf16.msra.mxu0 %v292
    %1349 = vmatprep.subr.bf16.mxu0 %v297
    %1350 = vmatpush1.bf16.msra.mxu0 %v296
    %1351 = vmatprep.subr.bf16.mxu0 %v353
    %1352 = vmatpush1.bf16.msra.mxu0 %v350
    %1353 = vmatprep.subr.bf16.mxu0 0
    %1354 = vmatpush1.bf16.msra.mxu0 0
    %1355 = vmatprep.subr.bf16.mxu0 0
    %1356 = vmatpush1.bf16.msra.mxu0 0
    %1357 = vmatprep.subr.bf16.mxu0 0
    %1358 = vmatpush1.bf16.msra.mxu0 0
    %1359 = vmatprep.subr.bf16.mxu0 0
    %1360 = vmatpush1.bf16.msra.mxu0 0
    %1361 = vmatprep.subr.bf16.mxu0 0
    %1362 = vmatpush1.bf16.msra.mxu0 0
    %1363 = vmatprep.mubr.bf16.mxu0 %v1329
    %1364 = vmatmul.mubr.bf16.gmra.mrb[0].mxu0 %v1326
    %v1365 = vpop.f32.mrb[0].mxu0
    %v1366 = vadd.f32 0.0, %v1365
    %v1367 = vpop.f32.mrb[0].mxu0
    %v1368 = vadd.f32 0.0, %v1367
    %v1369 = vpop.f32.mrb[0].mxu0
    %v1370 = vadd.f32 0.0, %v1369
    %v1371 = vpop.f32.mrb[0].mxu0
    %v1372 = vadd.f32 0.0, %v1371
    %1373 = vdwg.mxu0
    %1374 = vmatprep.subr.bf16.mxu0 %v263
    %1375 = vmatpush1.bf16.msra.mxu0 %v262
    %1376 = vmatprep.subr.bf16.mxu0 %v267
    %1377 = vmatpush1.bf16.msra.mxu0 %v266
    %1378 = vmatprep.subr.bf16.mxu0 %v271
    %1379 = vmatpush1.bf16.msra.mxu0 %v270
    %1380 = vmatprep.subr.bf16.mxu0 %v275
    %1381 = vmatpush1.bf16.msra.mxu0 %v274
    %1382 = vmatprep.subr.bf16.mxu0 %v279
    %1383 = vmatpush1.bf16.msra.mxu0 %v278
    %1384 = vmatprep.subr.bf16.mxu0 %v283
    %1385 = vmatpush1.bf16.msra.mxu0 %v282
    %1386 = vmatprep.subr.bf16.mxu0 %v287
    %1387 = vmatpush1.bf16.msra.mxu0 %v286
    %1388 = vmatprep.subr.bf16.mxu0 %v291
    %1389 = vmatpush1.bf16.msra.mxu0 %v290
    %1390 = vmatprep.subr.bf16.mxu0 %v295
    %1391 = vmatpush1.bf16.msra.mxu0 %v294
    %1392 = vmatprep.subr.bf16.mxu0 %v299
    %1393 = vmatpush1.bf16.msra.mxu0 %v298
    %1394 = vmatprep.subr.bf16.mxu0 %v359
    %1395 = vmatpush1.bf16.msra.mxu0 %v356
    %1396 = vmatprep.subr.bf16.mxu0 0
    %1397 = vmatpush1.bf16.msra.mxu0 0
    %1398 = vmatprep.subr.bf16.mxu0 0
    %1399 = vmatpush1.bf16.msra.mxu0 0
    %1400 = vmatprep.subr.bf16.mxu0 0
    %1401 = vmatpush1.bf16.msra.mxu0 0
    %1402 = vmatprep.subr.bf16.mxu0 0
    %1403 = vmatpush1.bf16.msra.mxu0 0
    %1404 = vmatprep.subr.bf16.mxu0 0
    %1405 = vmatpush1.bf16.msra.mxu0 0
    %1406 = vmatprep.mubr.bf16.mxu0 %v1329
    %1407 = vmatmul.mubr.bf16.gmra.mrb[0].mxu0 %v1326
    %v1408 = vpop.f32.mrb[0].mxu0
    %v1409 = vadd.f32 0.0, %v1408
    %v1410 = vpop.f32.mrb[0].mxu0
    %v1411 = vadd.f32 0.0, %v1410
    %v1412 = vpop.f32.mrb[0].mxu0
    %v1413 = vadd.f32 0.0, %v1412
    %v1414 = vpop.f32.mrb[0].mxu0
    %v1415 = vadd.f32 0.0, %v1414
    %1416 = vdwg.mxu0
    %v1417 = vmax.f32 %v1366, %v1368
    %v1418 = vmax.f32 %v1370, %v1372
    %v1419 = vmax.f32 %v1409, %v1411
    %v1420 = vmax.f32 %v1413, %v1415
    %v1421 = vmax.f32 %v1417, %v1419
    %v1422 = vmax.f32 %v1418, %v1420
    %v1423 = vadd.f32 %v1421, %v457
    %v1424 = vadd.f32 %v1422, %v457
    %v1425 = vmax.f32 %v1423, 0.0
    %v1426 = vmax.f32 %v1424, 0.0
    %v1427 = vpack.c.bf16 %v1426, %v1425
    %1428 = vst [vmem:[#allocation2 + $0x40] sm:$0xff] %v1427
    %v1429 = vld [vmem:[%s0 + $0xc] sm:$0xff]
    %v1430 = vld [vmem:[%s0 + $0x14] sm:$0xf]
    %v1431 = vld [vmem:[%s0 + $0x28] sm:$0xff]
    %v1432 = vld [vmem:[%s0 + $0x30] sm:$0xf]
    %v1437 = vunpack.c.l.b16 %v1429
    %v1438 = vunpack.c.h.b16 %v1429
    %v1439 = vunpack.c.l.b16 %v1430
    %v1440 = vunpack.c.l.b16 %v1431
    %v1441 = vunpack.c.h.b16 %v1431
    %v1442 = vunpack.c.l.b16 %v1432
    %v1443 = vpack.c.b16 %v1440, %v1437
    %v1444 = vpack.c.b16 %v1441, %v1438
    %v1445 = vpack.c.b16 %v1442, %v1439
    %1446 = vrot.lane.b32.xlu0 %v1443, 8
    %v1447 = vpop.permute.xlu0 %1446
    %1448 = vrot.lane.b32.xlu0 %v1444, 8
    %v1449 = vpop.permute.xlu0 %1448
    %1450 = vrot.lane.b32.xlu0 %v1445, 8
    %v1451 = vpop.permute.xlu0 %1450
    %vm1452 = vcmask 64512
    %v1453 = vsel %vm1452, %v1447, %v1449
    %v1454 = vsel %vm1452, %v1449, %v1451
    %v1457 = vsel %vm344, %v1454, 0
    %1459 = vmatprep.subr.bf16.mxu0 %v261
    %1460 = vmatpush1.bf16.msra.mxu0 %v260
    %1461 = vmatprep.subr.bf16.mxu0 %v265
    %1462 = vmatpush1.bf16.msra.mxu0 %v264
    %1463 = vmatprep.subr.bf16.mxu0 %v269
    %1464 = vmatpush1.bf16.msra.mxu0 %v268
    %1465 = vmatprep.subr.bf16.mxu0 %v273
    %1466 = vmatpush1.bf16.msra.mxu0 %v272
    %1467 = vmatprep.subr.bf16.mxu0 %v277
    %1468 = vmatpush1.bf16.msra.mxu0 %v276
    %1469 = vmatprep.subr.bf16.mxu0 %v281
    %1470 = vmatpush1.bf16.msra.mxu0 %v280
    %1471 = vmatprep.subr.bf16.mxu0 %v285
    %1472 = vmatpush1.bf16.msra.mxu0 %v284
    %1473 = vmatprep.subr.bf16.mxu0 %v289
    %1474 = vmatpush1.bf16.msra.mxu0 %v288
    %1475 = vmatprep.subr.bf16.mxu0 %v293
    %1476 = vmatpush1.bf16.msra.mxu0 %v292
    %1477 = vmatprep.subr.bf16.mxu0 %v297
    %1478 = vmatpush1.bf16.msra.mxu0 %v296
    %1479 = vmatprep.subr.bf16.mxu0 %v353
    %1480 = vmatpush1.bf16.msra.mxu0 %v350
    %1481 = vmatprep.subr.bf16.mxu0 0
    %1482 = vmatpush1.bf16.msra.mxu0 0
    %1483 = vmatprep.subr.bf16.mxu0 0
    %1484 = vmatpush1.bf16.msra.mxu0 0
    %1485 = vmatprep.subr.bf16.mxu0 0
    %1486 = vmatpush1.bf16.msra.mxu0 0
    %1487 = vmatprep.subr.bf16.mxu0 0
    %1488 = vmatpush1.bf16.msra.mxu0 0
    %1489 = vmatprep.subr.bf16.mxu0 0
    %1490 = vmatpush1.bf16.msra.mxu0 0
    %1491 = vmatprep.mubr.bf16.mxu0 %v1457
    %1492 = vmatmul.mubr.bf16.gmra.mrb[0].mxu0 %v1453
    %v1493 = vpop.f32.mrb[0].mxu0
    %v1494 = vadd.f32 0.0, %v1493
    %v1495 = vpop.f32.mrb[0].mxu0
    %v1496 = vadd.f32 0.0, %v1495
    %v1497 = vpop.f32.mrb[0].mxu0
    %v1498 = vadd.f32 0.0, %v1497
    %v1499 = vpop.f32.mrb[0].mxu0
    %v1500 = vadd.f32 0.0, %v1499
    %1501 = vdwg.mxu0
    %1502 = vmatprep.subr.bf16.mxu0 %v263
    %1503 = vmatpush1.bf16.msra.mxu0 %v262
    %1504 = vmatprep.subr.bf16.mxu0 %v267
    %1505 = vmatpush1.bf16.msra.mxu0 %v266
    %1506 = vmatprep.subr.bf16.mxu0 %v271
    %1507 = vmatpush1.bf16.msra.mxu0 %v270
    %1508 = vmatprep.subr.bf16.mxu0 %v275
    %1509 = vmatpush1.bf16.msra.mxu0 %v274
    %1510 = vmatprep.subr.bf16.mxu0 %v279
    %1511 = vmatpush1.bf16.msra.mxu0 %v278
    %1512 = vmatprep.subr.bf16.mxu0 %v283
    %1513 = vmatpush1.bf16.msra.mxu0 %v282
    %1514 = vmatprep.subr.bf16.mxu0 %v287
    %1515 = vmatpush1.bf16.msra.mxu0 %v286
    %1516 = vmatprep.subr.bf16.mxu0 %v291
    %1517 = vmatpush1.bf16.msra.mxu0 %v290
    %1518 = vmatprep.subr.bf16.mxu0 %v295
    %1519 = vmatpush1.bf16.msra.mxu0 %v294
    %1520 = vmatprep.subr.bf16.mxu0 %v299
    %1521 = vmatpush1.bf16.msra.mxu0 %v298
    %1522 = vmatprep.subr.bf16.mxu0 %v359
    %1523 = vmatpush1.bf16.msra.mxu0 %v356
    %1524 = vmatprep.subr.bf16.mxu0 0
    %1525 = vmatpush1.bf16.msra.mxu0 0
    %1526 = vmatprep.subr.bf16.mxu0 0
    %1527 = vmatpush1.bf16.msra.mxu0 0
    %1528 = vmatprep.subr.bf16.mxu0 0
    %1529 = vmatpush1.bf16.msra.mxu0 0
    %1530 = vmatprep.subr.bf16.mxu0 0
    %1531 = vmatpush1.bf16.msra.mxu0 0
    %1532 = vmatprep.subr.bf16.mxu0 0
    %1533 = vmatpush1.bf16.msra.mxu0 0
    %1534 = vmatprep.mubr.bf16.mxu0 %v1457
    %1535 = vmatmul.mubr.bf16.gmra.mrb[0].mxu0 %v1453
    %v1536 = vpop.f32.mrb[0].mxu0
    %v1537 = vadd.f32 0.0, %v1536
    %v1538 = vpop.f32.mrb[0].mxu0
    %v1539 = vadd.f32 0.0, %v1538
    %v1540 = vpop.f32.mrb[0].mxu0
    %v1541 = vadd.f32 0.0, %v1540
    %v1542 = vpop.f32.mrb[0].mxu0
    %v1543 = vadd.f32 0.0, %v1542
    %1544 = vdwg.mxu0
    %v1545 = vmax.f32 %v1494, %v1496
    %v1546 = vmax.f32 %v1498, %v1500
    %v1547 = vmax.f32 %v1537, %v1539
    %v1548 = vmax.f32 %v1541, %v1543
    %v1549 = vmax.f32 %v1545, %v1547
    %v1550 = vmax.f32 %v1546, %v1548
    %v1551 = vadd.f32 %v1549, %v457
    %v1552 = vadd.f32 %v1550, %v457
    %v1553 = vmax.f32 %v1551, 0.0
    %v1554 = vmax.f32 %v1552, 0.0
    %v1555 = vpack.c.bf16 %v1554, %v1553
    %1556 = vst [vmem:[#allocation2 + $0x48] sm:$0xff] %v1555
    %v1557 = vld [vmem:[%s0 + $0x10] sm:$0xff]
    %v1558 = vld [vmem:[%s0 + $0x2c] sm:$0xff]
    %v1561 = vunpack.c.l.b16 %v1557
    %v1562 = vunpack.c.h.b16 %v1557
    %v1563 = vunpack.c.l.b16 %v1558
    %v1564 = vunpack.c.h.b16 %v1558
    %v1565 = vpack.c.b16 %v1563, %v1561
    %v1566 = vpack.c.b16 %v1564, %v1562
    %1567 = vrot.lane.b32.xlu0 %v1565, 80
    %v1568 = vpop.permute.xlu0 %1567
    %1569 = vrot.lane.b32.xlu0 %v1566, 80
    %v1570 = vpop.permute.xlu0 %1569
    %vm1571 = vcmask 654336
    %v1572 = vsel %vm1571, %v1568, %v1570
    %v1575 = vsel %vm344, %v1570, 0
    %1577 = vmatprep.subr.bf16.mxu0 %v261
    %1578 = vmatpush1.bf16.msra.mxu0 %v260
    %1579 = vmatprep.subr.bf16.mxu0 %v265
    %1580 = vmatpush1.bf16.msra.mxu0 %v264
    %1581 = vmatprep.subr.bf16.mxu0 %v269
    %1582 = vmatpush1.bf16.msra.mxu0 %v268
    %1583 = vmatprep.subr.bf16.mxu0 %v273
    %1584 = vmatpush1.bf16.msra.mxu0 %v272
    %1585 = vmatprep.subr.bf16.mxu0 %v277
    %1586 = vmatpush1.bf16.msra.mxu0 %v276
    %1587 = vmatprep.subr.bf16.mxu0 %v281
    %1588 = vmatpush1.bf16.msra.mxu0 %v280
    %1589 = vmatprep.subr.bf16.mxu0 %v285
    %1590 = vmatpush1.bf16.msra.mxu0 %v284
    %1591 = vmatprep.subr.bf16.mxu0 %v289
    %1592 = vmatpush1.bf16.msra.mxu0 %v288
    %1593 = vmatprep.subr.bf16.mxu0 %v293
    %1594 = vmatpush1.bf16.msra.mxu0 %v292
    %1595 = vmatprep.subr.bf16.mxu0 %v297
    %1596 = vmatpush1.bf16.msra.mxu0 %v296
    %1597 = vmatprep.subr.bf16.mxu0 %v353
    %1598 = vmatpush1.bf16.msra.mxu0 %v350
    %1599 = vmatprep.subr.bf16.mxu0 0
    %1600 = vmatpush1.bf16.msra.mxu0 0
    %1601 = vmatprep.subr.bf16.mxu0 0
    %1602 = vmatpush1.bf16.msra.mxu0 0
    %1603 = vmatprep.subr.bf16.mxu0 0
    %1604 = vmatpush1.bf16.msra.mxu0 0
    %1605 = vmatprep.subr.bf16.mxu0 0
    %1606 = vmatpush1.bf16.msra.mxu0 0
    %1607 = vmatprep.subr.bf16.mxu0 0
    %1608 = vmatpush1.bf16.msra.mxu0 0
    %1609 = vmatprep.mubr.bf16.mxu0 %v1575
    %1610 = vmatmul.mubr.bf16.gmra.mrb[0].mxu0 %v1572
    %v1611 = vpop.f32.mrb[0].mxu0
    %v1612 = vadd.f32 0.0, %v1611
    %v1613 = vpop.f32.mrb[0].mxu0
    %v1614 = vadd.f32 0.0, %v1613
    %v1615 = vpop.f32.mrb[0].mxu0
    %v1616 = vadd.f32 0.0, %v1615
    %v1617 = vpop.f32.mrb[0].mxu0
    %v1618 = vadd.f32 0.0, %v1617
    %1619 = vdwg.mxu0
    %1620 = vmatprep.subr.bf16.mxu0 %v263
    %1621 = vmatpush1.bf16.msra.mxu0 %v262
    %1622 = vmatprep.subr.bf16.mxu0 %v267
    %1623 = vmatpush1.bf16.msra.mxu0 %v266
    %1624 = vmatprep.subr.bf16.mxu0 %v271
    %1625 = vmatpush1.bf16.msra.mxu0 %v270
    %1626 = vmatprep.subr.bf16.mxu0 %v275
    %1627 = vmatpush1.bf16.msra.mxu0 %v274
    %1628 = vmatprep.subr.bf16.mxu0 %v279
    %1629 = vmatpush1.bf16.msra.mxu0 %v278
    %1630 = vmatprep.subr.bf16.mxu0 %v283
    %1631 = vmatpush1.bf16.msra.mxu0 %v282
    %1632 = vmatprep.subr.bf16.mxu0 %v287
    %1633 = vmatpush1.bf16.msra.mxu0 %v286
    %1634 = vmatprep.subr.bf16.mxu0 %v291
    %1635 = vmatpush1.bf16.msra.mxu0 %v290
    %1636 = vmatprep.subr.bf16.mxu0 %v295
    %1637 = vmatpush1.bf16.msra.mxu0 %v294
    %1638 = vmatprep.subr.bf16.mxu0 %v299
    %1639 = vmatpush1.bf16.msra.mxu0 %v298
    %1640 = vmatprep.subr.bf16.mxu0 %v359
    %1641 = vmatpush1.bf16.msra.mxu0 %v356
    %1642 = vmatprep.subr.bf16.mxu0 0
    %1643 = vmatpush1.bf16.msra.mxu0 0
    %1644 = vmatprep.subr.bf16.mxu0 0
    %1645 = vmatpush1.bf16.msra.mxu0 0
    %1646 = vmatprep.subr.bf16.mxu0 0
    %1647 = vmatpush1.bf16.msra.mxu0 0
    %1648 = vmatprep.subr.bf16.mxu0 0
    %1649 = vmatpush1.bf16.msra.mxu0 0
    %1650 = vmatprep.subr.bf16.mxu0 0
    %1651 = vmatpush1.bf16.msra.mxu0 0
    %1652 = vmatprep.mubr.bf16.mxu0 %v1575
    %1653 = vmatmul.mubr.bf16.gmra.mrb[0].mxu0 %v1572
    %v1654 = vpop.f32.mrb[0].mxu0
    %v1655 = vadd.f32 0.0, %v1654
    %v1656 = vpop.f32.mrb[0].mxu0
    %v1657 = vadd.f32 0.0, %v1656
    %v1658 = vpop.f32.mrb[0].mxu0
    %v1659 = vadd.f32 0.0, %v1658
    %v1660 = vpop.f32.mrb[0].mxu0
    %v1661 = vadd.f32 0.0, %v1660
    %1662 = vdwg.mxu0
    %v1663 = vmax.f32 %v1612, %v1614
    %v1664 = vmax.f32 %v1616, %v1618
    %v1665 = vmax.f32 %v1655, %v1657
    %v1666 = vmax.f32 %v1659, %v1661
    %v1667 = vmax.f32 %v1663, %v1665
    %v1668 = vmax.f32 %v1664, %v1666
    %v1669 = vadd.f32 %v1667, %v457
    %v1670 = vadd.f32 %v1668, %v457
    %v1671 = vmax.f32 %v1669, 0.0
    %v1672 = vmax.f32 %v1670, 0.0
    %v1673 = vpack.c.bf16 %v1672, %v1671
    %1674 = vst [vmem:[#allocation2 + $0x50] sm:$0xff] %v1673
    %v1675 = vld [vmem:[%s0 + $0x10] sm:$0xff]
    %v1676 = vld [vmem:[%s0 + $0x18] sm:$0xf]
    %v1677 = vld [vmem:[%s0 + $0x2c] sm:$0xff]
    %v1678 = vld [vmem:[%s0 + $0x34] sm:$0xf]
    %v1683 = vunpack.c.l.b16 %v1675
    %v1684 = vunpack.c.h.b16 %v1675
    %v1685 = vunpack.c.l.b16 %v1676
    %v1686 = vunpack.c.l.b16 %v1677
    %v1687 = vunpack.c.h.b16 %v1677
    %v1688 = vunpack.c.l.b16 %v1678
    %v1689 = vpack.c.b16 %v1686, %v1683
    %v1690 = vpack.c.b16 %v1687, %v1684
    %v1691 = vpack.c.b16 %v1688, %v1685
    %1692 = vrot.lane.b32.xlu0 %v1689, 24
    %v1693 = vpop.permute.xlu0 %1692
    %1694 = vrot.lane.b32.xlu0 %v1690, 24
    %v1695 = vpop.permute.xlu0 %1694
    %1696 = vrot.lane.b32.xlu0 %v1691, 24
    %v1697 = vpop.permute.xlu0 %1696
    %vm1698 = vcmask 195584
    %v1699 = vsel %vm1698, %v1693, %v1695
    %v1700 = vsel %vm1698, %v1695, %v1697
    %v1703 = vsel %vm344, %v1700, 0
    %1705 = vmatprep.subr.bf16.mxu0 %v261
    %1706 = vmatpush1.bf16.msra.mxu0 %v260
    %1707 = vmatprep.subr.bf16.mxu0 %v265
    %1708 = vmatpush1.bf16.msra.mxu0 %v264
    %1709 = vmatprep.subr.bf16.mxu0 %v269
    %1710 = vmatpush1.bf16.msra.mxu0 %v268
    %1711 = vmatprep.subr.bf16.mxu0 %v273
    %1712 = vmatpush1.bf16.msra.mxu0 %v272
    %1713 = vmatprep.subr.bf16.mxu0 %v277
    %1714 = vmatpush1.bf16.msra.mxu0 %v276
    %1715 = vmatprep.subr.bf16.mxu0 %v281
    %1716 = vmatpush1.bf16.msra.mxu0 %v280
    %1717 = vmatprep.subr.bf16.mxu0 %v285
    %1718 = vmatpush1.bf16.msra.mxu0 %v284
    %1719 = vmatprep.subr.bf16.mxu0 %v289
    %1720 = vmatpush1.bf16.msra.mxu0 %v288
    %1721 = vmatprep.subr.bf16.mxu0 %v293
    %1722 = vmatpush1.bf16.msra.mxu0 %v292
    %1723 = vmatprep.subr.bf16.mxu0 %v297
    %1724 = vmatpush1.bf16.msra.mxu0 %v296
    %1725 = vmatprep.subr.bf16.mxu0 %v353
    %1726 = vmatpush1.bf16.msra.mxu0 %v350
    %1727 = vmatprep.subr.bf16.mxu0 0
    %1728 = vmatpush1.bf16.msra.mxu0 0
    %1729 = vmatprep.subr.bf16.mxu0 0
    %1730 = vmatpush1.bf16.msra.mxu0 0
    %1731 = vmatprep.subr.bf16.mxu0 0
    %1732 = vmatpush1.bf16.msra.mxu0 0
    %1733 = vmatprep.subr.bf16.mxu0 0
    %1734 = vmatpush1.bf16.msra.mxu0 0
    %1735 = vmatprep.subr.bf16.mxu0 0
    %1736 = vmatpush1.bf16.msra.mxu0 0
    %1737 = vmatprep.mubr.bf16.mxu0 %v1703
    %1738 = vmatmul.mubr.bf16.gmra.mrb[0].mxu0 %v1699
    %v1739 = vpop.f32.mrb[0].mxu0
    %v1740 = vadd.f32 0.0, %v1739
    %v1741 = vpop.f32.mrb[0].mxu0
    %v1742 = vadd.f32 0.0, %v1741
    %v1743 = vpop.f32.mrb[0].mxu0
    %v1744 = vadd.f32 0.0, %v1743
    %v1745 = vpop.f32.mrb[0].mxu0
    %v1746 = vadd.f32 0.0, %v1745
    %1747 = vdwg.mxu0
    %1748 = vmatprep.subr.bf16.mxu0 %v263
    %1749 = vmatpush1.bf16.msra.mxu0 %v262
    %1750 = vmatprep.subr.bf16.mxu0 %v267
    %1751 = vmatpush1.bf16.msra.mxu0 %v266
    %1752 = vmatprep.subr.bf16.mxu0 %v271
    %1753 = vmatpush1.bf16.msra.mxu0 %v270
    %1754 = vmatprep.subr.bf16.mxu0 %v275
    %1755 = vmatpush1.bf16.msra.mxu0 %v274
    %1756 = vmatprep.subr.bf16.mxu0 %v279
    %1757 = vmatpush1.bf16.msra.mxu0 %v278
    %1758 = vmatprep.subr.bf16.mxu0 %v283
    %1759 = vmatpush1.bf16.msra.mxu0 %v282
    %1760 = vmatprep.subr.bf16.mxu0 %v287
    %1761 = vmatpush1.bf16.msra.mxu0 %v286
    %1762 = vmatprep.subr.bf16.mxu0 %v291
    %1763 = vmatpush1.bf16.msra.mxu0 %v290
    %1764 = vmatprep.subr.bf16.mxu0 %v295
    %1765 = vmatpush1.bf16.msra.mxu0 %v294
    %1766 = vmatprep.subr.bf16.mxu0 %v299
    %1767 = vmatpush1.bf16.msra.mxu0 %v298
    %1768 = vmatprep.subr.bf16.mxu0 %v359
    %1769 = vmatpush1.bf16.msra.mxu0 %v356
    %1770 = vmatprep.subr.bf16.mxu0 0
    %1771 = vmatpush1.bf16.msra.mxu0 0
    %1772 = vmatprep.subr.bf16.mxu0 0
    %1773 = vmatpush1.bf16.msra.mxu0 0
    %1774 = vmatprep.subr.bf16.mxu0 0
    %1775 = vmatpush1.bf16.msra.mxu0 0
    %1776 = vmatprep.subr.bf16.mxu0 0
    %1777 = vmatpush1.bf16.msra.mxu0 0
    %1778 = vmatprep.subr.bf16.mxu0 0
    %1779 = vmatpush1.bf16.msra.mxu0 0
    %1780 = vmatprep.mubr.bf16.mxu0 %v1703
    %1781 = vmatmul.mubr.bf16.gmra.mrb[0].mxu0 %v1699
    %v1782 = vpop.f32.mrb[0].mxu0
    %v1783 = vadd.f32 0.0, %v1782
    %v1784 = vpop.f32.mrb[0].mxu0
    %v1785 = vadd.f32 0.0, %v1784
    %v1786 = vpop.f32.mrb[0].mxu0
    %v1787 = vadd.f32 0.0, %v1786
    %v1788 = vpop.f32.mrb[0].mxu0
    %v1789 = vadd.f32 0.0, %v1788
    %1790 = vdwg.mxu0
    %v1791 = vmax.f32 %v1740, %v1742
    %v1792 = vmax.f32 %v1744, %v1746
    %v1793 = vmax.f32 %v1783, %v1785
    %v1794 = vmax.f32 %v1787, %v1789
    %v1795 = vmax.f32 %v1791, %v1793
    %v1796 = vmax.f32 %v1792, %v1794
    %v1797 = vadd.f32 %v1795, %v457
    %v1798 = vadd.f32 %v1796, %v457
    %v1799 = vmax.f32 %v1797, 0.0
    %v1800 = vmax.f32 %v1798, 0.0
    %v1801 = vpack.c.bf16 %v1800, %v1799
    %1802 = vst [vmem:[#allocation2 + $0x58] sm:$0xff] %v1801
    %v1803 = vld [vmem:[#allocation5] sm:$0xff]
    %v1804 = vld [vmem:[#allocation5 + $0x8] sm:$0xff]
    %v1805 = vld [vmem:[#allocation5 + $0x10] sm:$0xff]
    %v1806 = vld [vmem:[#allocation5 + $0x18] sm:$0xff]
    %v1807 = vld [vmem:[#allocation5 + $0x20] sm:$0xff]
    %v1808 = vld [vmem:[#allocation5 + $0x28] sm:$0xff]
    %v1809 = vld [vmem:[#allocation5 + $0x30] sm:$0xff]
    %v1810 = vld [vmem:[#allocation5 + $0x38] sm:$0xff]
    %v1811 = vld [vmem:[#allocation5 + $0x40] sm:$0xff]
    %v1812 = vld [vmem:[#allocation5 + $0x48] sm:$0xff]
    %v1813 = vld [vmem:[#allocation5 + $0x50] sm:$0xff]
    %v1814 = vld [vmem:[#allocation5 + $0x58] sm:$0xff]
    %v1815 = vld [vmem:[#allocation5 + $0x60] sm:$0xff]
    %v1816 = vld [vmem:[#allocation5 + $0x68] sm:$0xff]
    %v1817 = vld [vmem:[#allocation5 + $0x70] sm:$0xff]
    %v1818 = vld [vmem:[#allocation5 + $0x78] sm:$0xff]
    %v1819 = vld [vmem:[#allocation5 + $0x80] sm:$0xff]
    %v1820 = vld [vmem:[#allocation5 + $0x88] sm:$0xff]
    %v1821 = vld [vmem:[#allocation5 + $0x90] sm:$0xff]
    %v1822 = vld [vmem:[#allocation5 + $0x98] sm:$0xff]
    %v1823 = vld [vmem:[#allocation5 + $0xa0] sm:$0xff]
    %v1824 = vld [vmem:[#allocation5 + $0xa8] sm:$0xff]
    %v1825 = vld [vmem:[#allocation5 + $0xb0] sm:$0xff]
    %v1826 = vld [vmem:[#allocation5 + $0xb8] sm:$0xff]
    %v1827 = vld [vmem:[#allocation5 + $0xc0] sm:$0xff]
    %v1828 = vld [vmem:[#allocation5 + $0xc8] sm:$0xff]
    %v1829 = vld [vmem:[#allocation5 + $0xd0] sm:$0xff]
    %v1830 = vld [vmem:[#allocation5 + $0xd8] sm:$0xff]
    %v1831 = vld [vmem:[#allocation5 + $0xe0] sm:$0xff]
    %v1832 = vld [vmem:[#allocation5 + $0xe8] sm:$0xff]
    %v1833 = vld [vmem:[#allocation5 + $0xf0] sm:$0xff]
    %v1834 = vld [vmem:[#allocation5 + $0xf8] sm:$0xff]
    %v1835 = vld [vmem:[#allocation5 + $0x100] sm:$0xff]
    %v1836 = vld [vmem:[#allocation5 + $0x108] sm:$0xff]
    %v1837 = vld [vmem:[#allocation5 + $0x110] sm:$0xff]
    %v1838 = vld [vmem:[#allocation5 + $0x118] sm:$0xff]
    %v1839 = vld [vmem:[#allocation5 + $0x120] sm:$0xff]
    %v1840 = vld [vmem:[#allocation5 + $0x128] sm:$0xff]
    %v1841 = vld [vmem:[#allocation5 + $0x130] sm:$0xff]
    %v1842 = vld [vmem:[#allocation5 + $0x138] sm:$0xff]
    %v1843 = vld [vmem:[#allocation5 + $0x140] sm:$0xff]
    %v1844 = vld [vmem:[#allocation5 + $0x148] sm:$0xff]
    %v1845 = vld [vmem:[#allocation5 + $0x150] sm:$0xff]
    %v1846 = vld [vmem:[#allocation5 + $0x158] sm:$0xff]
    %v1847 = vld [vmem:[#allocation5 + $0x160] sm:$0xff]
    %v1848 = vld [vmem:[#allocation5 + $0x168] sm:$0xff]
    %v1849 = vld [vmem:[#allocation5 + $0x170] sm:$0xff]
    %v1850 = vld [vmem:[#allocation5 + $0x178] sm:$0xff]
    %v1851 = vld [vmem:[#allocation5 + $0x180] sm:$0xff]
    %v1852 = vld [vmem:[#allocation5 + $0x188] sm:$0xff]
    %v1853 = vld [vmem:[#allocation5 + $0x190] sm:$0xff]
    %v1854 = vld [vmem:[#allocation5 + $0x198] sm:$0xff]
    %v1855 = vld [vmem:[#allocation5 + $0x1a0] sm:$0xff]
    %v1856 = vld [vmem:[#allocation5 + $0x1a8] sm:$0xff]
    %v1857 = vld [vmem:[#allocation5 + $0x1b0] sm:$0xff]
    %v1858 = vld [vmem:[#allocation5 + $0x1b8] sm:$0xff]
    %v1859 = vld [vmem:[#allocation5 + $0x1c0] sm:$0xff]
    %v1860 = vld [vmem:[#allocation5 + $0x1c8] sm:$0xff]
    %v1861 = vld [vmem:[#allocation5 + $0x1d0] sm:$0xff]
    %v1862 = vld [vmem:[#allocation5 + $0x1d8] sm:$0xff]
    %v1863 = vld [vmem:[#allocation5 + $0x1e0] sm:$0xff]
    %v1864 = vld [vmem:[#allocation5 + $0x1e8] sm:$0xff]
    %v1865 = vld [vmem:[#allocation5 + $0x1f0] sm:$0xff]
    %v1866 = vld [vmem:[#allocation5 + $0x1f8] sm:$0xff]
    %v1867 = vld [vmem:[#allocation5 + $0x200] sm:$0xff]
    %v1868 = vld [vmem:[#allocation5 + $0x208] sm:$0xff]
    %v1869 = vld [vmem:[#allocation5 + $0x210] sm:$0xff]
    %v1870 = vld [vmem:[#allocation5 + $0x218] sm:$0xff]
    %v1871 = vld [vmem:[#allocation5 + $0x220] sm:$0xff]
    %v1872 = vld [vmem:[#allocation5 + $0x228] sm:$0xff]
    %v1873 = vld [vmem:[#allocation5 + $0x230] sm:$0xff]
    %v1874 = vld [vmem:[#allocation5 + $0x238] sm:$0xff]
    %v1875 = vld [vmem:[#allocation5 + $0x240] sm:$0xff]
    %v1876 = vld [vmem:[#allocation5 + $0x248] sm:$0xff]
    %v1877 = vld [vmem:[#allocation5 + $0x250] sm:$0xff]
    %v1878 = vld [vmem:[#allocation5 + $0x258] sm:$0xff]
    %v1879 = vld [vmem:[#allocation5 + $0x260] sm:$0xff]
    %v1880 = vld [vmem:[#allocation5 + $0x268] sm:$0xff]
    %v1881 = vld [vmem:[#allocation5 + $0x270] sm:$0xff]
    %v1882 = vld [vmem:[#allocation5 + $0x278] sm:$0xff]
    %v1883 = vld [vmem:[#allocation5 + $0x280] sm:$0xff]
    %v1884 = vld [vmem:[#allocation5 + $0x288] sm:$0xff]
    %v1885 = vld [vmem:[#allocation5 + $0x290] sm:$0xff]
    %v1886 = vld [vmem:[#allocation5 + $0x298] sm:$0xff]
    %v1887 = vld [vmem:[#allocation5 + $0x2a0] sm:$0xff]
    %v1888 = vld [vmem:[#allocation5 + $0x2a8] sm:$0xff]
    %v1889 = vld [vmem:[#allocation5 + $0x2b0] sm:$0xff]
    %v1890 = vld [vmem:[#allocation5 + $0x2b8] sm:$0xff]
    %v1891 = vld [vmem:[#allocation5 + $0x2c0] sm:$0xff]
    %v1892 = vld [vmem:[#allocation5 + $0x2c8] sm:$0xff]
    %v1893 = vld [vmem:[#allocation5 + $0x2d0] sm:$0xff]
    %v1894 = vld [vmem:[#allocation5 + $0x2d8] sm:$0xff]
    %v1895 = vld [vmem:[#allocation5 + $0x2e0] sm:$0xff]
    %v1896 = vld [vmem:[#allocation5 + $0x2e8] sm:$0xff]
    %v1897 = vld [vmem:[#allocation5 + $0x2f0] sm:$0xff]
    %v1898 = vld [vmem:[#allocation5 + $0x2f8] sm:$0xff]
    %v1899 = vld [vmem:[#allocation5 + $0x300] sm:$0xff]
    %v1900 = vld [vmem:[#allocation5 + $0x308] sm:$0xff]
    %v1901 = vld [vmem:[#allocation5 + $0x310] sm:$0xff]
    %v1902 = vld [vmem:[#allocation5 + $0x318] sm:$0xff]
    %v1903 = vld [vmem:[#allocation5 + $0x320] sm:$0xff]
    %v1904 = vld [vmem:[#allocation5 + $0x328] sm:$0xff]
    %v1905 = vld [vmem:[#allocation5 + $0x330] sm:$0xff]
    %v1906 = vld [vmem:[#allocation5 + $0x338] sm:$0xff]
    %v1907 = vld [vmem:[#allocation5 + $0x340] sm:$0xff]
    %v1908 = vld [vmem:[#allocation5 + $0x348] sm:$0xff]
    %v1909 = vld [vmem:[#allocation5 + $0x350] sm:$0xff]
    %v1910 = vld [vmem:[#allocation5 + $0x358] sm:$0xff]
    %v1911 = vld [vmem:[#allocation5 + $0x360] sm:$0xff]
    %v1912 = vld [vmem:[#allocation5 + $0x368] sm:$0xff]
    %v1913 = vld [vmem:[#allocation5 + $0x370] sm:$0xff]
    %v1914 = vld [vmem:[#allocation5 + $0x378] sm:$0xff]
    %v1915 = vld [vmem:[#allocation5 + $0x380] sm:$0xff]
    %v1916 = vld [vmem:[#allocation5 + $0x388] sm:$0xff]
    %v1917 = vld [vmem:[#allocation5 + $0x390] sm:$0xff]
    %v1918 = vld [vmem:[#allocation5 + $0x398] sm:$0xff]
    %v1919 = vld [vmem:[#allocation5 + $0x3a0] sm:$0xff]
    %v1920 = vld [vmem:[#allocation5 + $0x3a8] sm:$0xff]
    %v1921 = vld [vmem:[#allocation5 + $0x3b0] sm:$0xff]
    %v1922 = vld [vmem:[#allocation5 + $0x3b8] sm:$0xff]
    %v1923 = vld [vmem:[#allocation5 + $0x3c0] sm:$0xff]
    %v1924 = vld [vmem:[#allocation5 + $0x3c8] sm:$0xff]
    %v1925 = vld [vmem:[#allocation5 + $0x3d0] sm:$0xff]
    %v1926 = vld [vmem:[#allocation5 + $0x3d8] sm:$0xff]
    %v1927 = vld [vmem:[#allocation5 + $0x3e0] sm:$0xff]
    %v1928 = vld [vmem:[#allocation5 + $0x3e8] sm:$0xff]
    %v1929 = vld [vmem:[#allocation5 + $0x3f0] sm:$0xff]
    %v1930 = vld [vmem:[#allocation5 + $0x3f8] sm:$0xff]
    %v1931 = vld [vmem:[#allocation5 + $0x400] sm:$0xff]
    %v1932 = vld [vmem:[#allocation5 + $0x408] sm:$0xff]
    %v1933 = vld [vmem:[#allocation5 + $0x410] sm:$0xff]
    %v1934 = vld [vmem:[#allocation5 + $0x418] sm:$0xff]
    %v1935 = vld [vmem:[#allocation5 + $0x420] sm:$0xff]
    %v1936 = vld [vmem:[#allocation5 + $0x428] sm:$0xff]
    %v1937 = vld [vmem:[#allocation5 + $0x430] sm:$0xff]
    %v1938 = vld [vmem:[#allocation5 + $0x438] sm:$0xff]
    %v1939 = vld [vmem:[#allocation5 + $0x440] sm:$0xff]
    %v1940 = vld [vmem:[#allocation5 + $0x448] sm:$0xff]
    %v1941 = vld [vmem:[#allocation5 + $0x450] sm:$0xff]
    %v1942 = vld [vmem:[#allocation5 + $0x458] sm:$0xff]
    %v1943 = vld [vmem:[#allocation5 + $0x460] sm:$0xff]
    %v1944 = vld [vmem:[#allocation5 + $0x468] sm:$0xff]
    %v1945 = vld [vmem:[#allocation5 + $0x470] sm:$0xff]
    %v1946 = vld [vmem:[#allocation5 + $0x478] sm:$0xff]
    %v1947 = vld [vmem:[#allocation5 + $0x480] sm:$0xff]
    %v1948 = vld [vmem:[#allocation5 + $0x488] sm:$0xff]
    %v1949 = vld [vmem:[#allocation5 + $0x490] sm:$0xff]
    %v1950 = vld [vmem:[#allocation5 + $0x498] sm:$0xff]
    %v1951 = vld [vmem:[#allocation5 + $0x4a0] sm:$0xff]
    %v1952 = vld [vmem:[#allocation5 + $0x4a8] sm:$0xff]
    %v1953 = vld [vmem:[#allocation5 + $0x4b0] sm:$0xff]
    %v1954 = vld [vmem:[#allocation5 + $0x4b8] sm:$0xff]
    %v1955 = vld [vmem:[#allocation5 + $0x4c0] sm:$0xff]
    %v1956 = vld [vmem:[#allocation5 + $0x4c8] sm:$0xff]
    %v1957 = vld [vmem:[#allocation5 + $0x4d0] sm:$0xff]
    %v1958 = vld [vmem:[#allocation5 + $0x4d8] sm:$0xff]
    %v1959 = vld [vmem:[#allocation5 + $0x4e0] sm:$0xff]
    %v1960 = vld [vmem:[#allocation5 + $0x4e8] sm:$0xff]
    %v1961 = vld [vmem:[#allocation5 + $0x4f0] sm:$0xff]
    %v1962 = vld [vmem:[#allocation5 + $0x4f8] sm:$0xff]
    %v1963 = vld [vmem:[#allocation5 + $0x500] sm:$0xff]
    %v1964 = vld [vmem:[#allocation5 + $0x508] sm:$0xff]
    %v1965 = vld [vmem:[#allocation5 + $0x510] sm:$0xff]
    %v1966 = vld [vmem:[#allocation5 + $0x518] sm:$0xff]
    %v1967 = vld [vmem:[#allocation5 + $0x520] sm:$0xff]
    %v1968 = vld [vmem:[#allocation5 + $0x528] sm:$0xff]
    %v1969 = vld [vmem:[#allocation5 + $0x530] sm:$0xff]
    %v1970 = vld [vmem:[#allocation5 + $0x538] sm:$0xff]
    %v1971 = vld [vmem:[#allocation5 + $0x540] sm:$0xff]
    %v1972 = vld [vmem:[#allocation5 + $0x548] sm:$0xff]
    %v1973 = vld [vmem:[#allocation5 + $0x550] sm:$0xff]
    %v1974 = vld [vmem:[#allocation5 + $0x558] sm:$0xff]
    %v1975 = vld [vmem:[#allocation5 + $0x560] sm:$0xff]
    %v1976 = vld [vmem:[#allocation5 + $0x568] sm:$0xff]
    %v1977 = vld [vmem:[#allocation5 + $0x570] sm:$0xff]
    %v1978 = vld [vmem:[#allocation5 + $0x578] sm:$0xff]
    %v1979 = vld [vmem:[#allocation5 + $0x580] sm:$0xff]
    %v1980 = vld [vmem:[#allocation5 + $0x588] sm:$0xff]
    %v1981 = vld [vmem:[#allocation5 + $0x590] sm:$0xff]
    %v1982 = vld [vmem:[#allocation5 + $0x598] sm:$0xff]
    %v1983 = vld [vmem:[#allocation5 + $0x5a0] sm:$0xff]
    %v1984 = vld [vmem:[#allocation5 + $0x5a8] sm:$0xff]
    %v1985 = vld [vmem:[#allocation5 + $0x5b0] sm:$0xff]
    %v1986 = vld [vmem:[#allocation5 + $0x5b8] sm:$0xff]
    %v1987 = vld [vmem:[#allocation5 + $0x5c0] sm:$0xff]
    %v1988 = vld [vmem:[#allocation5 + $0x5c8] sm:$0xff]
    %v1989 = vld [vmem:[#allocation5 + $0x5d0] sm:$0xff]
    %v1990 = vld [vmem:[#allocation5 + $0x5d8] sm:$0xff]
    %v1991 = vld [vmem:[#allocation5 + $0x5e0] sm:$0xff]
    %v1992 = vld [vmem:[#allocation5 + $0x5e8] sm:$0xff]
    %v1993 = vld [vmem:[#allocation5 + $0x5f0] sm:$0xff]
    %v1994 = vld [vmem:[#allocation5 + $0x5f8] sm:$0xff]
    %v1995 = vld [vmem:[%s4] sm:$0x1]
    %v1996 = vld [vmem:[#allocation2] sm:$0xff]
    %v1997 = vld [vmem:[#allocation2 + $0x8] sm:$0xff]
    %v1998 = vld [vmem:[#allocation2 + $0x10] sm:$0xff]
    %v1999 = vld [vmem:[#allocation2 + $0x18] sm:$0xff]
    %v2000 = vld [vmem:[#allocation2 + $0x20] sm:$0xff]
    %v2001 = vld [vmem:[#allocation2 + $0x28] sm:$0xff]
    %v2194 = vunpack.c.l.b16 %v1803
    %v2195 = vunpack.c.h.b16 %v1803
    %v2196 = vunpack.c.l.b16 %v1804
    %v2197 = vunpack.c.h.b16 %v1804
    %v2198 = vunpack.c.l.b16 %v1805
    %v2199 = vunpack.c.h.b16 %v1805
    %v2200 = vunpack.c.l.b16 %v1806
    %v2201 = vunpack.c.h.b16 %v1806
    %v2202 = vunpack.c.l.b16 %v1807
    %v2203 = vunpack.c.h.b16 %v1807
    %v2204 = vunpack.c.l.b16 %v1808
    %v2205 = vunpack.c.h.b16 %v1808
    %v2206 = vunpack.c.l.b16 %v1809
    %v2207 = vunpack.c.h.b16 %v1809
    %v2208 = vunpack.c.l.b16 %v1810
    %v2209 = vunpack.c.h.b16 %v1810
    %v2210 = vunpack.c.l.b16 %v1811
    %v2211 = vunpack.c.h.b16 %v1811
    %v2212 = vunpack.c.l.b16 %v1812
    %v2213 = vunpack.c.h.b16 %v1812
    %v2214 = vunpack.c.l.b16 %v1813
    %v2215 = vunpack.c.h.b16 %v1813
    %v2216 = vunpack.c.l.b16 %v1814
    %v2217 = vunpack.c.h.b16 %v1814
    %v2218 = vunpack.c.l.b16 %v1815
    %v2219 = vunpack.c.h.b16 %v1815
    %v2220 = vunpack.c.l.b16 %v1816
    %v2221 = vunpack.c.h.b16 %v1816
    %v2222 = vunpack.c.l.b16 %v1817
    %v2223 = vunpack.c.h.b16 %v1817
    %v2224 = vunpack.c.l.b16 %v1818
    %v2225 = vunpack.c.h.b16 %v1818
    %v2226 = vunpack.c.l.b16 %v1819
    %v2227 = vunpack.c.h.b16 %v1819
    %v2228 = vunpack.c.l.b16 %v1820
    %v2229 = vunpack.c.h.b16 %v1820
    %v2230 = vunpack.c.l.b16 %v1821
    %v2231 = vunpack.c.h.b16 %v1821
    %v2232 = vunpack.c.l.b16 %v1822
    %v2233 = vunpack.c.h.b16 %v1822
    %v2234 = vunpack.c.l.b16 %v1823
    %v2235 = vunpack.c.h.b16 %v1823
    %v2236 = vunpack.c.l.b16 %v1824
    %v2237 = vunpack.c.h.b16 %v1824
    %v2238 = vunpack.c.l.b16 %v1825
    %v2239 = vunpack.c.h.b16 %v1825
    %v2240 = vunpack.c.l.b16 %v1826
    %v2241 = vunpack.c.h.b16 %v1826
    %v2242 = vunpack.c.l.b16 %v1827
    %v2243 = vunpack.c.h.b16 %v1827
    %v2244 = vunpack.c.l.b16 %v1828
    %v2245 = vunpack.c.h.b16 %v1828
    %v2246 = vunpack.c.l.b16 %v1829
    %v2247 = vunpack.c.h.b16 %v1829
    %v2248 = vunpack.c.l.b16 %v1830
    %v2249 = vunpack.c.h.b16 %v1830
    %v2250 = vunpack.c.l.b16 %v1831
    %v2251 = vunpack.c.h.b16 %v1831
    %v2252 = vunpack.c.l.b16 %v1832
    %v2253 = vunpack.c.h.b16 %v1832
    %v2254 = vunpack.c.l.b16 %v1833
    %v2255 = vunpack.c.h.b16 %v1833
    %v2256 = vunpack.c.l.b16 %v1834
    %v2257 = vunpack.c.h.b16 %v1834
    %v2258 = vunpack.c.l.b16 %v1835
    %v2259 = vunpack.c.h.b16 %v1835
    %v2260 = vunpack.c.l.b16 %v1836
    %v2261 = vunpack.c.h.b16 %v1836
    %v2262 = vunpack.c.l.b16 %v1837
    %v2263 = vunpack.c.h.b16 %v1837
    %v2264 = vunpack.c.l.b16 %v1838
    %v2265 = vunpack.c.h.b16 %v1838
    %v2266 = vunpack.c.l.b16 %v1839
    %v2267 = vunpack.c.h.b16 %v1839
    %v2268 = vunpack.c.l.b16 %v1840
    %v2269 = vunpack.c.h.b16 %v1840
    %v2270 = vunpack.c.l.b16 %v1841
    %v2271 = vunpack.c.h.b16 %v1841
    %v2272 = vunpack.c.l.b16 %v1842
    %v2273 = vunpack.c.h.b16 %v1842
    %v2274 = vunpack.c.l.b16 %v1843
    %v2275 = vunpack.c.h.b16 %v1843
    %v2276 = vunpack.c.l.b16 %v1844
    %v2277 = vunpack.c.h.b16 %v1844
    %v2278 = vunpack.c.l.b16 %v1845
    %v2279 = vunpack.c.h.b16 %v1845
    %v2280 = vunpack.c.l.b16 %v1846
    %v2281 = vunpack.c.h.b16 %v1846
    %v2282 = vunpack.c.l.b16 %v1847
    %v2283 = vunpack.c.h.b16 %v1847
    %v2284 = vunpack.c.l.b16 %v1848
    %v2285 = vunpack.c.h.b16 %v1848
    %v2286 = vunpack.c.l.b16 %v1849
    %v2287 = vunpack.c.h.b16 %v1849
    %v2288 = vunpack.c.l.b16 %v1850
    %v2289 = vunpack.c.h.b16 %v1850
    %v2290 = vunpack.c.l.b16 %v1851
    %v2291 = vunpack.c.h.b16 %v1851
    %v2292 = vunpack.c.l.b16 %v1852
    %v2293 = vunpack.c.h.b16 %v1852
    %v2294 = vunpack.c.l.b16 %v1853
    %v2295 = vunpack.c.h.b16 %v1853
    %v2296 = vunpack.c.l.b16 %v1854
    %v2297 = vunpack.c.h.b16 %v1854
    %v2298 = vunpack.c.l.b16 %v1855
    %v2299 = vunpack.c.h.b16 %v1855
    %v2300 = vunpack.c.l.b16 %v1856
    %v2301 = vunpack.c.h.b16 %v1856
    %v2302 = vunpack.c.l.b16 %v1857
    %v2303 = vunpack.c.h.b16 %v1857
    %v2304 = vunpack.c.l.b16 %v1858
    %v2305 = vunpack.c.h.b16 %v1858
    %v2306 = vunpack.c.l.b16 %v1859
    %v2307 = vunpack.c.h.b16 %v1859
    %v2308 = vunpack.c.l.b16 %v1860
    %v2309 = vunpack.c.h.b16 %v1860
    %v2310 = vunpack.c.l.b16 %v1861
    %v2311 = vunpack.c.h.b16 %v1861
    %v2312 = vunpack.c.l.b16 %v1862
    %v2313 = vunpack.c.h.b16 %v1862
    %v2314 = vunpack.c.l.b16 %v1863
    %v2315 = vunpack.c.h.b16 %v1863
    %v2316 = vunpack.c.l.b16 %v1864
    %v2317 = vunpack.c.h.b16 %v1864
    %v2318 = vunpack.c.l.b16 %v1865
    %v2319 = vunpack.c.h.b16 %v1865
    %v2320 = vunpack.c.l.b16 %v1866
    %v2321 = vunpack.c.h.b16 %v1866
    %v2322 = vunpack.c.l.b16 %v1867
    %v2323 = vunpack.c.h.b16 %v1867
    %v2324 = vunpack.c.l.b16 %v1868
    %v2325 = vunpack.c.h.b16 %v1868
    %v2326 = vunpack.c.l.b16 %v1869
    %v2327 = vunpack.c.h.b16 %v1869
    %v2328 = vunpack.c.l.b16 %v1870
    %v2329 = vunpack.c.h.b16 %v1870
    %v2330 = vunpack.c.l.b16 %v1871
    %v2331 = vunpack.c.h.b16 %v1871
    %v2332 = vunpack.c.l.b16 %v1872
    %v2333 = vunpack.c.h.b16 %v1872
    %v2334 = vunpack.c.l.b16 %v1873
    %v2335 = vunpack.c.h.b16 %v1873
    %v2336 = vunpack.c.l.b16 %v1874
    %v2337 = vunpack.c.h.b16 %v1874
    %v2338 = vunpack.c.l.b16 %v1875
    %v2339 = vunpack.c.h.b16 %v1875
    %v2340 = vunpack.c.l.b16 %v1876
    %v2341 = vunpack.c.h.b16 %v1876
    %v2342 = vunpack.c.l.b16 %v1877
    %v2343 = vunpack.c.h.b16 %v1877
    %v2344 = vunpack.c.l.b16 %v1878
    %v2345 = vunpack.c.h.b16 %v1878
    %v2346 = vunpack.c.l.b16 %v1879
    %v2347 = vunpack.c.h.b16 %v1879
    %v2348 = vunpack.c.l.b16 %v1880
    %v2349 = vunpack.c.h.b16 %v1880
    %v2350 = vunpack.c.l.b16 %v1881
    %v2351 = vunpack.c.h.b16 %v1881
    %v2352 = vunpack.c.l.b16 %v1882
    %v2353 = vunpack.c.h.b16 %v1882
    %v2354 = vunpack.c.l.b16 %v1883
    %v2355 = vunpack.c.h.b16 %v1883
    %v2356 = vunpack.c.l.b16 %v1884
    %v2357 = vunpack.c.h.b16 %v1884
    %v2358 = vunpack.c.l.b16 %v1885
    %v2359 = vunpack.c.h.b16 %v1885
    %v2360 = vunpack.c.l.b16 %v1886
    %v2361 = vunpack.c.h.b16 %v1886
    %v2362 = vunpack.c.l.b16 %v1887
    %v2363 = vunpack.c.h.b16 %v1887
    %v2364 = vunpack.c.l.b16 %v1888
    %v2365 = vunpack.c.h.b16 %v1888
    %v2366 = vunpack.c.l.b16 %v1889
    %v2367 = vunpack.c.h.b16 %v1889
    %v2368 = vunpack.c.l.b16 %v1890
    %v2369 = vunpack.c.h.b16 %v1890
    %v2370 = vunpack.c.l.b16 %v1891
    %v2371 = vunpack.c.h.b16 %v1891
    %v2372 = vunpack.c.l.b16 %v1892
    %v2373 = vunpack.c.h.b16 %v1892
    %v2374 = vunpack.c.l.b16 %v1893
    %v2375 = vunpack.c.h.b16 %v1893
    %v2376 = vunpack.c.l.b16 %v1894
    %v2377 = vunpack.c.h.b16 %v1894
    %v2378 = vunpack.c.l.b16 %v1895
    %v2379 = vunpack.c.h.b16 %v1895
    %v2380 = vunpack.c.l.b16 %v1896
    %v2381 = vunpack.c.h.b16 %v1896
    %v2382 = vunpack.c.l.b16 %v1897
    %v2383 = vunpack.c.h.b16 %v1897
    %v2384 = vunpack.c.l.b16 %v1898
    %v2385 = vunpack.c.h.b16 %v1898
    %v2386 = vunpack.c.l.b16 %v1899
    %v2387 = vunpack.c.h.b16 %v1899
    %v2388 = vunpack.c.l.b16 %v1900
    %v2389 = vunpack.c.h.b16 %v1900
    %v2390 = vunpack.c.l.b16 %v1901
    %v2391 = vunpack.c.h.b16 %v1901
    %v2392 = vunpack.c.l.b16 %v1902
    %v2393 = vunpack.c.h.b16 %v1902
    %v2394 = vunpack.c.l.b16 %v1903
    %v2395 = vunpack.c.h.b16 %v1903
    %v2396 = vunpack.c.l.b16 %v1904
    %v2397 = vunpack.c.h.b16 %v1904
    %v2398 = vunpack.c.l.b16 %v1905
    %v2399 = vunpack.c.h.b16 %v1905
    %v2400 = vunpack.c.l.b16 %v1906
    %v2401 = vunpack.c.h.b16 %v1906
    %v2402 = vunpack.c.l.b16 %v1907
    %v2403 = vunpack.c.h.b16 %v1907
    %v2404 = vunpack.c.l.b16 %v1908
    %v2405 = vunpack.c.h.b16 %v1908
    %v2406 = vunpack.c.l.b16 %v1909
    %v2407 = vunpack.c.h.b16 %v1909
    %v2408 = vunpack.c.l.b16 %v1910
    %v2409 = vunpack.c.h.b16 %v1910
    %v2410 = vunpack.c.l.b16 %v1911
    %v2411 = vunpack.c.h.b16 %v1911
    %v2412 = vunpack.c.l.b16 %v1912
    %v2413 = vunpack.c.h.b16 %v1912
    %v2414 = vunpack.c.l.b16 %v1913
    %v2415 = vunpack.c.h.b16 %v1913
    %v2416 = vunpack.c.l.b16 %v1914
    %v2417 = vunpack.c.h.b16 %v1914
    %v2418 = vunpack.c.l.b16 %v1915
    %v2419 = vunpack.c.h.b16 %v1915
    %v2420 = vunpack.c.l.b16 %v1916
    %v2421 = vunpack.c.h.b16 %v1916
    %v2422 = vunpack.c.l.b16 %v1917
    %v2423 = vunpack.c.h.b16 %v1917
    %v2424 = vunpack.c.l.b16 %v1918
    %v2425 = vunpack.c.h.b16 %v1918
    %v2426 = vunpack.c.l.b16 %v1919
    %v2427 = vunpack.c.h.b16 %v1919
    %v2428 = vunpack.c.l.b16 %v1920
    %v2429 = vunpack.c.h.b16 %v1920
    %v2430 = vunpack.c.l.b16 %v1921
    %v2431 = vunpack.c.h.b16 %v1921
    %v2432 = vunpack.c.l.b16 %v1922
    %v2433 = vunpack.c.h.b16 %v1922
    %v2434 = vunpack.c.l.b16 %v1923
    %v2435 = vunpack.c.h.b16 %v1923
    %v2436 = vunpack.c.l.b16 %v1924
    %v2437 = vunpack.c.h.b16 %v1924
    %v2438 = vunpack.c.l.b16 %v1925
    %v2439 = vunpack.c.h.b16 %v1925
    %v2440 = vunpack.c.l.b16 %v1926
    %v2441 = vunpack.c.h.b16 %v1926
    %v2442 = vunpack.c.l.b16 %v1927
    %v2443 = vunpack.c.h.b16 %v1927
    %v2444 = vunpack.c.l.b16 %v1928
    %v2445 = vunpack.c.h.b16 %v1928
    %v2446 = vunpack.c.l.b16 %v1929
    %v2447 = vunpack.c.h.b16 %v1929
    %v2448 = vunpack.c.l.b16 %v1930
    %v2449 = vunpack.c.h.b16 %v1930
    %v2450 = vunpack.c.l.b16 %v1931
    %v2451 = vunpack.c.h.b16 %v1931
    %v2452 = vunpack.c.l.b16 %v1932
    %v2453 = vunpack.c.h.b16 %v1932
    %v2454 = vunpack.c.l.b16 %v1933
    %v2455 = vunpack.c.h.b16 %v1933
    %v2456 = vunpack.c.l.b16 %v1934
    %v2457 = vunpack.c.h.b16 %v1934
    %v2458 = vunpack.c.l.b16 %v1935
    %v2459 = vunpack.c.h.b16 %v1935
    %v2460 = vunpack.c.l.b16 %v1936
    %v2461 = vunpack.c.h.b16 %v1936
    %v2462 = vunpack.c.l.b16 %v1937
    %v2463 = vunpack.c.h.b16 %v1937
    %v2464 = vunpack.c.l.b16 %v1938
    %v2465 = vunpack.c.h.b16 %v1938
    %v2466 = vunpack.c.l.b16 %v1939
    %v2467 = vunpack.c.h.b16 %v1939
    %v2468 = vunpack.c.l.b16 %v1940
    %v2469 = vunpack.c.h.b16 %v1940
    %v2470 = vunpack.c.l.b16 %v1941
    %v2471 = vunpack.c.h.b16 %v1941
    %v2472 = vunpack.c.l.b16 %v1942
    %v2473 = vunpack.c.h.b16 %v1942
    %v2474 = vunpack.c.l.b16 %v1943
    %v2475 = vunpack.c.h.b16 %v1943
    %v2476 = vunpack.c.l.b16 %v1944
    %v2477 = vunpack.c.h.b16 %v1944
    %v2478 = vunpack.c.l.b16 %v1945
    %v2479 = vunpack.c.h.b16 %v1945
    %v2480 = vunpack.c.l.b16 %v1946
    %v2481 = vunpack.c.h.b16 %v1946
    %v2482 = vunpack.c.l.b16 %v1947
    %v2483 = vunpack.c.h.b16 %v1947
    %v2484 = vunpack.c.l.b16 %v1948
    %v2485 = vunpack.c.h.b16 %v1948
    %v2486 = vunpack.c.l.b16 %v1949
    %v2487 = vunpack.c.h.b16 %v1949
    %v2488 = vunpack.c.l.b16 %v1950
    %v2489 = vunpack.c.h.b16 %v1950
    %v2490 = vunpack.c.l.b16 %v1951
    %v2491 = vunpack.c.h.b16 %v1951
    %v2492 = vunpack.c.l.b16 %v1952
    %v2493 = vunpack.c.h.b16 %v1952
    %v2494 = vunpack.c.l.b16 %v1953
    %v2495 = vunpack.c.h.b16 %v1953
    %v2496 = vunpack.c.l.b16 %v1954
    %v2497 = vunpack.c.h.b16 %v1954
    %v2498 = vunpack.c.l.b16 %v1955
    %v2499 = vunpack.c.h.b16 %v1955
    %v2500 = vunpack.c.l.b16 %v1956
    %v2501 = vunpack.c.h.b16 %v1956
    %v2502 = vunpack.c.l.b16 %v1957
    %v2503 = vunpack.c.h.b16 %v1957
    %v2504 = vunpack.c.l.b16 %v1958
    %v2505 = vunpack.c.h.b16 %v1958
    %v2506 = vunpack.c.l.b16 %v1959
    %v2507 = vunpack.c.h.b16 %v1959
    %v2508 = vunpack.c.l.b16 %v1960
    %v2509 = vunpack.c.h.b16 %v1960
    %v2510 = vunpack.c.l.b16 %v1961
    %v2511 = vunpack.c.h.b16 %v1961
    %v2512 = vunpack.c.l.b16 %v1962
    %v2513 = vunpack.c.h.b16 %v1962
    %v2514 = vunpack.c.l.b16 %v1963
    %v2515 = vunpack.c.h.b16 %v1963
    %v2516 = vunpack.c.l.b16 %v1964
    %v2517 = vunpack.c.h.b16 %v1964
    %v2518 = vunpack.c.l.b16 %v1965
    %v2519 = vunpack.c.h.b16 %v1965
    %v2520 = vunpack.c.l.b16 %v1966
    %v2521 = vunpack.c.h.b16 %v1966
    %v2522 = vunpack.c.l.b16 %v1967
    %v2523 = vunpack.c.h.b16 %v1967
    %v2524 = vunpack.c.l.b16 %v1968
    %v2525 = vunpack.c.h.b16 %v1968
    %v2526 = vunpack.c.l.b16 %v1969
    %v2527 = vunpack.c.h.b16 %v1969
    %v2528 = vunpack.c.l.b16 %v1970
    %v2529 = vunpack.c.h.b16 %v1970
    %v2530 = vunpack.c.l.b16 %v1971
    %v2531 = vunpack.c.h.b16 %v1971
    %v2532 = vunpack.c.l.b16 %v1972
    %v2533 = vunpack.c.h.b16 %v1972
    %v2534 = vunpack.c.l.b16 %v1973
    %v2535 = vunpack.c.h.b16 %v1973
    %v2536 = vunpack.c.l.b16 %v1974
    %v2537 = vunpack.c.h.b16 %v1974
    %v2538 = vunpack.c.l.b16 %v1975
    %v2539 = vunpack.c.h.b16 %v1975
    %v2540 = vunpack.c.l.b16 %v1976
    %v2541 = vunpack.c.h.b16 %v1976
    %v2542 = vunpack.c.l.b16 %v1977
    %v2543 = vunpack.c.h.b16 %v1977
    %v2544 = vunpack.c.l.b16 %v1978
    %v2545 = vunpack.c.h.b16 %v1978
    %v2546 = vunpack.c.l.b16 %v1979
    %v2547 = vunpack.c.h.b16 %v1979
    %v2548 = vunpack.c.l.b16 %v1980
    %v2549 = vunpack.c.h.b16 %v1980
    %v2550 = vunpack.c.l.b16 %v1981
    %v2551 = vunpack.c.h.b16 %v1981
    %v2552 = vunpack.c.l.b16 %v1982
    %v2553 = vunpack.c.h.b16 %v1982
    %v2554 = vunpack.c.l.b16 %v1983
    %v2555 = vunpack.c.h.b16 %v1983
    %v2556 = vunpack.c.l.b16 %v1984
    %v2557 = vunpack.c.h.b16 %v1984
    %v2558 = vunpack.c.l.b16 %v1985
    %v2559 = vunpack.c.h.b16 %v1985
    %v2560 = vunpack.c.l.b16 %v1986
    %v2561 = vunpack.c.h.b16 %v1986
    %v2562 = vunpack.c.l.b16 %v1987
    %v2563 = vunpack.c.h.b16 %v1987
    %v2564 = vunpack.c.l.b16 %v1988
    %v2565 = vunpack.c.h.b16 %v1988
    %v2566 = vunpack.c.l.b16 %v1989
    %v2567 = vunpack.c.h.b16 %v1989
    %v2568 = vunpack.c.l.b16 %v1990
    %v2569 = vunpack.c.h.b16 %v1990
    %v2570 = vunpack.c.l.b16 %v1991
    %v2571 = vunpack.c.h.b16 %v1991
    %v2572 = vunpack.c.l.b16 %v1992
    %v2573 = vunpack.c.h.b16 %v1992
    %v2574 = vunpack.c.l.b16 %v1993
    %v2575 = vunpack.c.h.b16 %v1993
    %v2576 = vunpack.c.l.b16 %v1994
    %v2577 = vunpack.c.h.b16 %v1994
    %v2578 = vpack.c.b16 %v2198, %v2194
    %v2579 = vpack.c.b16 %v2199, %v2195
    %v2580 = vpack.c.b16 %v2200, %v2196
    %v2581 = vpack.c.b16 %v2201, %v2197
    %v2582 = vpack.c.b16 %v2206, %v2202
    %v2583 = vpack.c.b16 %v2207, %v2203
    %v2584 = vpack.c.b16 %v2208, %v2204
    %v2585 = vpack.c.b16 %v2209, %v2205
    %v2586 = vpack.c.b16 %v2214, %v2210
    %v2587 = vpack.c.b16 %v2215, %v2211
    %v2588 = vpack.c.b16 %v2216, %v2212
    %v2589 = vpack.c.b16 %v2217, %v2213
    %v2590 = vpack.c.b16 %v2222, %v2218
    %v2591 = vpack.c.b16 %v2223, %v2219
    %v2592 = vpack.c.b16 %v2224, %v2220
    %v2593 = vpack.c.b16 %v2225, %v2221
    %v2594 = vpack.c.b16 %v2230, %v2226
    %v2595 = vpack.c.b16 %v2231, %v2227
    %v2596 = vpack.c.b16 %v2232, %v2228
    %v2597 = vpack.c.b16 %v2233, %v2229
    %v2598 = vpack.c.b16 %v2238, %v2234
    %v2599 = vpack.c.b16 %v2239, %v2235
    %v2600 = vpack.c.b16 %v2240, %v2236
    %v2601 = vpack.c.b16 %v2241, %v2237
    %v2602 = vpack.c.b16 %v2246, %v2242
    %v2603 = vpack.c.b16 %v2247, %v2243
    %v2604 = vpack.c.b16 %v2248, %v2244
    %v2605 = vpack.c.b16 %v2249, %v2245
    %v2606 = vpack.c.b16 %v2254, %v2250
    %v2607 = vpack.c.b16 %v2255, %v2251
    %v2608 = vpack.c.b16 %v2256, %v2252
    %v2609 = vpack.c.b16 %v2257, %v2253
    %v2610 = vpack.c.b16 %v2262, %v2258
    %v2611 = vpack.c.b16 %v2263, %v2259
    %v2612 = vpack.c.b16 %v2264, %v2260
    %v2613 = vpack.c.b16 %v2265, %v2261
    %v2614 = vpack.c.b16 %v2270, %v2266
    %v2615 = vpack.c.b16 %v2271, %v2267
    %v2616 = vpack.c.b16 %v2272, %v2268
    %v2617 = vpack.c.b16 %v2273, %v2269
    %v2618 = vpack.c.b16 %v2278, %v2274
    %v2619 = vpack.c.b16 %v2279, %v2275
    %v2620 = vpack.c.b16 %v2280, %v2276
    %v2621 = vpack.c.b16 %v2281, %v2277
    %v2622 = vpack.c.b16 %v2286, %v2282
    %v2623 = vpack.c.b16 %v2287, %v2283
    %v2624 = vpack.c.b16 %v2288, %v2284
    %v2625 = vpack.c.b16 %v2289, %v2285
    %v2626 = vpack.c.b16 %v2294, %v2290
    %v2627 = vpack.c.b16 %v2295, %v2291
    %v2628 = vpack.c.b16 %v2296, %v2292
    %v2629 = vpack.c.b16 %v2297, %v2293
    %v2630 = vpack.c.b16 %v2302, %v2298
    %v2631 = vpack.c.b16 %v2303, %v2299
    %v2632 = vpack.c.b16 %v2304, %v2300
    %v2633 = vpack.c.b16 %v2305, %v2301
    %v2634 = vpack.c.b16 %v2310, %v2306
    %v2635 = vpack.c.b16 %v2311, %v2307
    %v2636 = vpack.c.b16 %v2312, %v2308
    %v2637 = vpack.c.b16 %v2313, %v2309
    %v2638 = vpack.c.b16 %v2318, %v2314
    %v2639 = vpack.c.b16 %v2319, %v2315
    %v2640 = vpack.c.b16 %v2320, %v2316
    %v2641 = vpack.c.b16 %v2321, %v2317
    %v2642 = vpack.c.b16 %v2326, %v2322
    %v2643 = vpack.c.b16 %v2327, %v2323
    %v2644 = vpack.c.b16 %v2328, %v2324
    %v2645 = vpack.c.b16 %v2329, %v2325
    %v2646 = vpack.c.b16 %v2334, %v2330
    %v2647 = vpack.c.b16 %v2335, %v2331
    %v2648 = vpack.c.b16 %v2336, %v2332
    %v2649 = vpack.c.b16 %v2337, %v2333
    %v2650 = vpack.c.b16 %v2342, %v2338
    %v2651 = vpack.c.b16 %v2343, %v2339
    %v2652 = vpack.c.b16 %v2344, %v2340
    %v2653 = vpack.c.b16 %v2345, %v2341
    %v2654 = vpack.c.b16 %v2350, %v2346
    %v2655 = vpack.c.b16 %v2351, %v2347
    %v2656 = vpack.c.b16 %v2352, %v2348
    %v2657 = vpack.c.b16 %v2353, %v2349
    %v2658 = vpack.c.b16 %v2358, %v2354
    %v2659 = vpack.c.b16 %v2359, %v2355
    %v2660 = vpack.c.b16 %v2360, %v2356
    %v2661 = vpack.c.b16 %v2361, %v2357
    %v2662 = vpack.c.b16 %v2366, %v2362
    %v2663 = vpack.c.b16 %v2367, %v2363
    %v2664 = vpack.c.b16 %v2368, %v2364
    %v2665 = vpack.c.b16 %v2369, %v2365
    %v2666 = vpack.c.b16 %v2374, %v2370
    %v2667 = vpack.c.b16 %v2375, %v2371
    %v2668 = vpack.c.b16 %v2376, %v2372
    %v2669 = vpack.c.b16 %v2377, %v2373
    %v2670 = vpack.c.b16 %v2382, %v2378
    %v2671 = vpack.c.b16 %v2383, %v2379
    %v2672 = vpack.c.b16 %v2384, %v2380
    %v2673 = vpack.c.b16 %v2385, %v2381
    %v2674 = vpack.c.b16 %v2390, %v2386
    %v2675 = vpack.c.b16 %v2391, %v2387
    %v2676 = vpack.c.b16 %v2392, %v2388
    %v2677 = vpack.c.b16 %v2393, %v2389
    %v2678 = vpack.c.b16 %v2398, %v2394
    %v2679 = vpack.c.b16 %v2399, %v2395
    %v2680 = vpack.c.b16 %v2400, %v2396
    %v2681 = vpack.c.b16 %v2401, %v2397
    %v2682 = vpack.c.b16 %v2406, %v2402
    %v2683 = vpack.c.b16 %v2407, %v2403
    %v2684 = vpack.c.b16 %v2408, %v2404
    %v2685 = vpack.c.b16 %v2409, %v2405
    %v2686 = vpack.c.b16 %v2414, %v2410
    %v2687 = vpack.c.b16 %v2415, %v2411
    %v2688 = vpack.c.b16 %v2416, %v2412
    %v2689 = vpack.c.b16 %v2417, %v2413
    %v2690 = vpack.c.b16 %v2422, %v2418
    %v2691 = vpack.c.b16 %v2423, %v2419
    %v2692 = vpack.c.b16 %v2424, %v2420
    %v2693 = vpack.c.b16 %v2425, %v2421
    %v2694 = vpack.c.b16 %v2430, %v2426
    %v2695 = vpack.c.b16 %v2431, %v2427
    %v2696 = vpack.c.b16 %v2432, %v2428
    %v2697 = vpack.c.b16 %v2433, %v2429
    %v2698 = vpack.c.b16 %v2438, %v2434
    %v2699 = vpack.c.b16 %v2439, %v2435
    %v2700 = vpack.c.b16 %v2440, %v2436
    %v2701 = vpack.c.b16 %v2441, %v2437
    %v2702 = vpack.c.b16 %v2446, %v2442
    %v2703 = vpack.c.b16 %v2447, %v2443
    %v2704 = vpack.c.b16 %v2448, %v2444
    %v2705 = vpack.c.b16 %v2449, %v2445
    %v2706 = vpack.c.b16 %v2454, %v2450
    %v2707 = vpack.c.b16 %v2455, %v2451
    %v2708 = vpack.c.b16 %v2456, %v2452
    %v2709 = vpack.c.b16 %v2457, %v2453
    %v2710 = vpack.c.b16 %v2462, %v2458
    %v2711 = vpack.c.b16 %v2463, %v2459
    %v2712 = vpack.c.b16 %v2464, %v2460
    %v2713 = vpack.c.b16 %v2465, %v2461
    %v2714 = vpack.c.b16 %v2470, %v2466
    %v2715 = vpack.c.b16 %v2471, %v2467
    %v2716 = vpack.c.b16 %v2472, %v2468
    %v2717 = vpack.c.b16 %v2473, %v2469
    %v2718 = vpack.c.b16 %v2478, %v2474
    %v2719 = vpack.c.b16 %v2479, %v2475
    %v2720 = vpack.c.b16 %v2480, %v2476
    %v2721 = vpack.c.b16 %v2481, %v2477
    %v2722 = vpack.c.b16 %v2486, %v2482
    %v2723 = vpack.c.b16 %v2487, %v2483
    %v2724 = vpack.c.b16 %v2488, %v2484
    %v2725 = vpack.c.b16 %v2489, %v2485
    %v2726 = vpack.c.b16 %v2494, %v2490
    %v2727 = vpack.c.b16 %v2495, %v2491
    %v2728 = vpack.c.b16 %v2496, %v2492
    %v2729 = vpack.c.b16 %v2497, %v2493
    %v2730 = vpack.c.b16 %v2502, %v2498
    %v2731 = vpack.c.b16 %v2503, %v2499
    %v2732 = vpack.c.b16 %v2504, %v2500
    %v2733 = vpack.c.b16 %v2505, %v2501
    %v2734 = vpack.c.b16 %v2510, %v2506
    %v2735 = vpack.c.b16 %v2511, %v2507
    %v2736 = vpack.c.b16 %v2512, %v2508
    %v2737 = vpack.c.b16 %v2513, %v2509
    %v2738 = vpack.c.b16 %v2518, %v2514
    %v2739 = vpack.c.b16 %v2519, %v2515
    %v2740 = vpack.c.b16 %v2520, %v2516
    %v2741 = vpack.c.b16 %v2521, %v2517
    %v2742 = vpack.c.b16 %v2526, %v2522
    %v2743 = vpack.c.b16 %v2527, %v2523
    %v2744 = vpack.c.b16 %v2528, %v2524
    %v2745 = vpack.c.b16 %v2529, %v2525
    %v2746 = vpack.c.b16 %v2534, %v2530
    %v2747 = vpack.c.b16 %v2535, %v2531
    %v2748 = vpack.c.b16 %v2536, %v2532
    %v2749 = vpack.c.b16 %v2537, %v2533
    %v2750 = vpack.c.b16 %v2542, %v2538
    %v2751 = vpack.c.b16 %v2543, %v2539
    %v2752 = vpack.c.b16 %v2544, %v2540
    %v2753 = vpack.c.b16 %v2545, %v2541
    %v2754 = vpack.c.b16 %v2550, %v2546
    %v2755 = vpack.c.b16 %v2551, %v2547
    %v2756 = vpack.c.b16 %v2552, %v2548
    %v2757 = vpack.c.b16 %v2553, %v2549
    %v2758 = vpack.c.b16 %v2558, %v2554
    %v2759 = vpack.c.b16 %v2559, %v2555
    %v2760 = vpack.c.b16 %v2560, %v2556
    %v2761 = vpack.c.b16 %v2561, %v2557
    %v2762 = vpack.c.b16 %v2566, %v2562
    %v2763 = vpack.c.b16 %v2567, %v2563
    %v2764 = vpack.c.b16 %v2568, %v2564
    %v2765 = vpack.c.b16 %v2569, %v2565
    %v2766 = vpack.c.b16 %v2574, %v2570
    %v2767 = vpack.c.b16 %v2575, %v2571
    %v2768 = vpack.c.b16 %v2576, %v2572
    %v2769 = vpack.c.b16 %v2577, %v2573
    %2962 = vmatprep.subr.bf16.mxu0 %v2579
    %2963 = vmatpush1.bf16.msra.mxu0 %v2578
    %2964 = vmatprep.subr.bf16.mxu0 %v2583
    %2965 = vmatpush1.bf16.msra.mxu0 %v2582
    %2966 = vmatprep.subr.bf16.mxu0 %v2587
    %2967 = vmatpush1.bf16.msra.mxu0 %v2586
    %2968 = vmatprep.subr.bf16.mxu0 %v2591
    %2969 = vmatpush1.bf16.msra.mxu0 %v2590
    %2970 = vmatprep.subr.bf16.mxu0 %v2595
    %2971 = vmatpush1.bf16.msra.mxu0 %v2594
    %2972 = vmatprep.subr.bf16.mxu0 %v2599
    %2973 = vmatpush1.bf16.msra.mxu0 %v2598
    %2974 = vmatprep.subr.bf16.mxu0 %v2603
    %2975 = vmatpush1.bf16.msra.mxu0 %v2602
    %2976 = vmatprep.subr.bf16.mxu0 %v2607
    %2977 = vmatpush1.bf16.msra.mxu0 %v2606
    %2978 = vmatprep.subr.bf16.mxu0 %v2611
    %2979 = vmatpush1.bf16.msra.mxu0 %v2610
    %2980 = vmatprep.subr.bf16.mxu0 %v2615
    %2981 = vmatpush1.bf16.msra.mxu0 %v2614
    %2982 = vmatprep.subr.bf16.mxu0 %v2619
    %2983 = vmatpush1.bf16.msra.mxu0 %v2618
    %2984 = vmatprep.subr.bf16.mxu0 %v2623
    %2985 = vmatpush1.bf16.msra.mxu0 %v2622
    %2986 = vmatprep.subr.bf16.mxu0 %v2627
    %2987 = vmatpush1.bf16.msra.mxu0 %v2626
    %2988 = vmatprep.subr.bf16.mxu0 %v2631
    %2989 = vmatpush1.bf16.msra.mxu0 %v2630
    %2990 = vmatprep.subr.bf16.mxu0 %v2635
    %2991 = vmatpush1.bf16.msra.mxu0 %v2634
    %2992 = vmatprep.subr.bf16.mxu0 %v2639
    %2993 = vmatpush1.bf16.msra.mxu0 %v2638
    %2994 = vmatprep.mubr.bf16.mxu0 %v1997
    %2995 = vmatmul.mubr.bf16.gmra.mrb[0].mxu0 %v1996
    %v2996 = vpop.f32.mrb[0].mxu0
    %v2997 = vadd.f32 0.0, %v2996
    %v2998 = vpop.f32.mrb[0].mxu0
    %v2999 = vadd.f32 0.0, %v2998
    %v3000 = vpop.f32.mrb[0].mxu0
    %v3001 = vadd.f32 0.0, %v3000
    %v3002 = vpop.f32.mrb[0].mxu0
    %v3003 = vadd.f32 0.0, %v3002
    %3004 = vdwg.mxu0
    %3005 = vmatprep.subr.bf16.mxu0 %v2643
    %3006 = vmatpush1.bf16.msra.mxu0 %v2642
    %3007 = vmatprep.subr.bf16.mxu0 %v2647
    %3008 = vmatpush1.bf16.msra.mxu0 %v2646
    %3009 = vmatprep.subr.bf16.mxu0 %v2651
    %3010 = vmatpush1.bf16.msra.mxu0 %v2650
    %3011 = vmatprep.subr.bf16.mxu0 %v2655
    %3012 = vmatpush1.bf16.msra.mxu0 %v2654
    %3013 = vmatprep.subr.bf16.mxu0 %v2659
    %3014 = vmatpush1.bf16.msra.mxu0 %v2658
    %3015 = vmatprep.subr.bf16.mxu0 %v2663
    %3016 = vmatpush1.bf16.msra.mxu0 %v2662
    %3017 = vmatprep.subr.bf16.mxu0 %v2667
    %3018 = vmatpush1.bf16.msra.mxu0 %v2666
    %3019 = vmatprep.subr.bf16.mxu0 %v2671
    %3020 = vmatpush1.bf16.msra.mxu0 %v2670
    %3021 = vmatprep.subr.bf16.mxu0 %v2675
    %3022 = vmatpush1.bf16.msra.mxu0 %v2674
    %3023 = vmatprep.subr.bf16.mxu0 %v2679
    %3024 = vmatpush1.bf16.msra.mxu0 %v2678
    %3025 = vmatprep.subr.bf16.mxu0 %v2683
    %3026 = vmatpush1.bf16.msra.mxu0 %v2682
    %3027 = vmatprep.subr.bf16.mxu0 %v2687
    %3028 = vmatpush1.bf16.msra.mxu0 %v2686
    %3029 = vmatprep.subr.bf16.mxu0 %v2691
    %3030 = vmatpush1.bf16.msra.mxu0 %v2690
    %3031 = vmatprep.subr.bf16.mxu0 %v2695
    %3032 = vmatpush1.bf16.msra.mxu0 %v2694
    %3033 = vmatprep.subr.bf16.mxu0 %v2699
    %3034 = vmatpush1.bf16.msra.mxu0 %v2698
    %3035 = vmatprep.subr.bf16.mxu0 %v2703
    %3036 = vmatpush1.bf16.msra.mxu0 %v2702
    %3037 = vmatprep.mubr.bf16.mxu0 %v1999
    %3038 = vmatmul.mubr.bf16.gmra.mrb[0].mxu0 %v1998
    %v3039 = vpop.f32.mrb[0].mxu0
    %v3040 = vadd.f32 %v2997, %v3039
    %v3041 = vpop.f32.mrb[0].mxu0
    %v3042 = vadd.f32 %v2999, %v3041
    %v3043 = vpop.f32.mrb[0].mxu0
    %v3044 = vadd.f32 %v3001, %v3043
    %v3045 = vpop.f32.mrb[0].mxu0
    %v3046 = vadd.f32 %v3003, %v3045
    %3047 = vdwg.mxu0
    %3048 = vmatprep.subr.bf16.mxu0 %v2707
    %3049 = vmatpush1.bf16.msra.mxu0 %v2706
    %3050 = vmatprep.subr.bf16.mxu0 %v2711
    %3051 = vmatpush1.bf16.msra.mxu0 %v2710
    %3052 = vmatprep.subr.bf16.mxu0 %v2715
    %3053 = vmatpush1.bf16.msra.mxu0 %v2714
    %3054 = vmatprep.subr.bf16.mxu0 %v2719
    %3055 = vmatpush1.bf16.msra.mxu0 %v2718
    %3056 = vmatprep.subr.bf16.mxu0 %v2723
    %3057 = vmatpush1.bf16.msra.mxu0 %v2722
    %3058 = vmatprep.subr.bf16.mxu0 %v2727
    %3059 = vmatpush1.bf16.msra.mxu0 %v2726
    %3060 = vmatprep.subr.bf16.mxu0 %v2731
    %3061 = vmatpush1.bf16.msra.mxu0 %v2730
    %3062 = vmatprep.subr.bf16.mxu0 %v2735
    %3063 = vmatpush1.bf16.msra.mxu0 %v2734
    %3064 = vmatprep.subr.bf16.mxu0 %v2739
    %3065 = vmatpush1.bf16.msra.mxu0 %v2738
    %3066 = vmatprep.subr.bf16.mxu0 %v2743
    %3067 = vmatpush1.bf16.msra.mxu0 %v2742
    %3068 = vmatprep.subr.bf16.mxu0 %v2747
    %3069 = vmatpush1.bf16.msra.mxu0 %v2746
    %3070 = vmatprep.subr.bf16.mxu0 %v2751
    %3071 = vmatpush1.bf16.msra.mxu0 %v2750
    %3072 = vmatprep.subr.bf16.mxu0 %v2755
    %3073 = vmatpush1.bf16.msra.mxu0 %v2754
    %3074 = vmatprep.subr.bf16.mxu0 %v2759
    %3075 = vmatpush1.bf16.msra.mxu0 %v2758
    %3076 = vmatprep.subr.bf16.mxu0 %v2763
    %3077 = vmatpush1.bf16.msra.mxu0 %v2762
    %3078 = vmatprep.subr.bf16.mxu0 %v2767
    %3079 = vmatpush1.bf16.msra.mxu0 %v2766
    %3080 = vmatprep.mubr.bf16.mxu0 %v2001
    %3081 = vmatmul.mubr.bf16.gmra.mrb[0].mxu0 %v2000
    %v3082 = vpop.f32.mrb[0].mxu0
    %v3083 = vadd.f32 %v3040, %v3082
    %v3084 = vpop.f32.mrb[0].mxu0
    %v3085 = vadd.f32 %v3042, %v3084
    %v3086 = vpop.f32.mrb[0].mxu0
    %v3087 = vadd.f32 %v3044, %v3086
    %v3088 = vpop.f32.mrb[0].mxu0
    %v3089 = vadd.f32 %v3046, %v3088
    %3090 = vdwg.mxu0
    %3091 = vmatprep.subr.bf16.mxu0 %v2581
    %3092 = vmatpush1.bf16.msra.mxu0 %v2580
    %3093 = vmatprep.subr.bf16.mxu0 %v2585
    %3094 = vmatpush1.bf16.msra.mxu0 %v2584
    %3095 = vmatprep.subr.bf16.mxu0 %v2589
    %3096 = vmatpush1.bf16.msra.mxu0 %v2588
    %3097 = vmatprep.subr.bf16.mxu0 %v2593
    %3098 = vmatpush1.bf16.msra.mxu0 %v2592
    %3099 = vmatprep.subr.bf16.mxu0 %v2597
    %3100 = vmatpush1.bf16.msra.mxu0 %v2596
    %3101 = vmatprep.subr.bf16.mxu0 %v2601
    %3102 = vmatpush1.bf16.msra.mxu0 %v2600
    %3103 = vmatprep.subr.bf16.mxu0 %v2605
    %3104 = vmatpush1.bf16.msra.mxu0 %v2604
    %3105 = vmatprep.subr.bf16.mxu0 %v2609
    %3106 = vmatpush1.bf16.msra.mxu0 %v2608
    %3107 = vmatprep.subr.bf16.mxu0 %v2613
    %3108 = vmatpush1.bf16.msra.mxu0 %v2612
    %3109 = vmatprep.subr.bf16.mxu0 %v2617
    %3110 = vmatpush1.bf16.msra.mxu0 %v2616
    %3111 = vmatprep.subr.bf16.mxu0 %v2621
    %3112 = vmatpush1.bf16.msra.mxu0 %v2620
    %3113 = vmatprep.subr.bf16.mxu0 %v2625
    %3114 = vmatpush1.bf16.msra.mxu0 %v2624
    %3115 = vmatprep.subr.bf16.mxu0 %v2629
    %3116 = vmatpush1.bf16.msra.mxu0 %v2628
    %3117 = vmatprep.subr.bf16.mxu0 %v2633
    %3118 = vmatpush1.bf16.msra.mxu0 %v2632
    %3119 = vmatprep.subr.bf16.mxu0 %v2637
    %3120 = vmatpush1.bf16.msra.mxu0 %v2636
    %3121 = vmatprep.subr.bf16.mxu0 %v2641
    %3122 = vmatpush1.bf16.msra.mxu0 %v2640
    %3123 = vmatprep.mubr.bf16.mxu0 %v1997
    %3124 = vmatmul.mubr.bf16.gmra.mrb[0].mxu0 %v1996
    %v3125 = vpop.f32.mrb[0].mxu0
    %v3126 = vadd.f32 0.0, %v3125
    %v3127 = vpop.f32.mrb[0].mxu0
    %v3128 = vadd.f32 0.0, %v3127
    %v3129 = vpop.f32.mrb[0].mxu0
    %v3130 = vadd.f32 0.0, %v3129
    %v3131 = vpop.f32.mrb[0].mxu0
    %v3132 = vadd.f32 0.0, %v3131
    %3133 = vdwg.mxu0
    %3134 = vmatprep.subr.bf16.mxu0 %v2645
    %3135 = vmatpush1.bf16.msra.mxu0 %v2644
    %3136 = vmatprep.subr.bf16.mxu0 %v2649
    %3137 = vmatpush1.bf16.msra.mxu0 %v2648
    %3138 = vmatprep.subr.bf16.mxu0 %v2653
    %3139 = vmatpush1.bf16.msra.mxu0 %v2652
    %3140 = vmatprep.subr.bf16.mxu0 %v2657
    %3141 = vmatpush1.bf16.msra.mxu0 %v2656
    %3142 = vmatprep.subr.bf16.mxu0 %v2661
    %3143 = vmatpush1.bf16.msra.mxu0 %v2660
    %3144 = vmatprep.subr.bf16.mxu0 %v2665
    %3145 = vmatpush1.bf16.msra.mxu0 %v2664
    %3146 = vmatprep.subr.bf16.mxu0 %v2669
    %3147 = vmatpush1.bf16.msra.mxu0 %v2668
    %3148 = vmatprep.subr.bf16.mxu0 %v2673
    %3149 = vmatpush1.bf16.msra.mxu0 %v2672
    %3150 = vmatprep.subr.bf16.mxu0 %v2677
    %3151 = vmatpush1.bf16.msra.mxu0 %v2676
    %3152 = vmatprep.subr.bf16.mxu0 %v2681
    %3153 = vmatpush1.bf16.msra.mxu0 %v2680
    %3154 = vmatprep.subr.bf16.mxu0 %v2685
    %3155 = vmatpush1.bf16.msra.mxu0 %v2684
    %3156 = vmatprep.subr.bf16.mxu0 %v2689
    %3157 = vmatpush1.bf16.msra.mxu0 %v2688
    %3158 = vmatprep.subr.bf16.mxu0 %v2693
    %3159 = vmatpush1.bf16.msra.mxu0 %v2692
    %3160 = vmatprep.subr.bf16.mxu0 %v2697
    %3161 = vmatpush1.bf16.msra.mxu0 %v2696
    %3162 = vmatprep.subr.bf16.mxu0 %v2701
    %3163 = vmatpush1.bf16.msra.mxu0 %v2700
    %3164 = vmatprep.subr.bf16.mxu0 %v2705
    %3165 = vmatpush1.bf16.msra.mxu0 %v2704
    %3166 = vmatprep.mubr.bf16.mxu0 %v1999
    %3167 = vmatmul.mubr.bf16.gmra.mrb[0].mxu0 %v1998
    %v3168 = vpop.f32.mrb[0].mxu0
    %v3169 = vadd.f32 %v3126, %v3168
    %v3170 = vpop.f32.mrb[0].mxu0
    %v3171 = vadd.f32 %v3128, %v3170
    %v3172 = vpop.f32.mrb[0].mxu0
    %v3173 = vadd.f32 %v3130, %v3172
    %v3174 = vpop.f32.mrb[0].mxu0
    %v3175 = vadd.f32 %v3132, %v3174
    %3176 = vdwg.mxu0
    %3177 = vmatprep.subr.bf16.mxu0 %v2709
    %3178 = vmatpush1.bf16.msra.mxu0 %v2708
    %3179 = vmatprep.subr.bf16.mxu0 %v2713
    %3180 = vmatpush1.bf16.msra.mxu0 %v2712
    %3181 = vmatprep.subr.bf16.mxu0 %v2717
    %3182 = vmatpush1.bf16.msra.mxu0 %v2716
    %3183 = vmatprep.subr.bf16.mxu0 %v2721
    %3184 = vmatpush1.bf16.msra.mxu0 %v2720
    %3185 = vmatprep.subr.bf16.mxu0 %v2725
    %3186 = vmatpush1.bf16.msra.mxu0 %v2724
    %3187 = vmatprep.subr.bf16.mxu0 %v2729
    %3188 = vmatpush1.bf16.msra.mxu0 %v2728
    %3189 = vmatprep.subr.bf16.mxu0 %v2733
    %3190 = vmatpush1.bf16.msra.mxu0 %v2732
    %3191 = vmatprep.subr.bf16.mxu0 %v2737
    %3192 = vmatpush1.bf16.msra.mxu0 %v2736
    %3193 = vmatprep.subr.bf16.mxu0 %v2741
    %3194 = vmatpush1.bf16.msra.mxu0 %v2740
    %3195 = vmatprep.subr.bf16.mxu0 %v2745
    %3196 = vmatpush1.bf16.msra.mxu0 %v2744
    %3197 = vmatprep.subr.bf16.mxu0 %v2749
    %3198 = vmatpush1.bf16.msra.mxu0 %v2748
    %3199 = vmatprep.subr.bf16.mxu0 %v2753
    %3200 = vmatpush1.bf16.msra.mxu0 %v2752
    %3201 = vmatprep.subr.bf16.mxu0 %v2757
    %3202 = vmatpush1.bf16.msra.mxu0 %v2756
    %3203 = vmatprep.subr.bf16.mxu0 %v2761
    %3204 = vmatpush1.bf16.msra.mxu0 %v2760
    %3205 = vmatprep.subr.bf16.mxu0 %v2765
    %3206 = vmatpush1.bf16.msra.mxu0 %v2764
    %3207 = vmatprep.subr.bf16.mxu0 %v2769
    %3208 = vmatpush1.bf16.msra.mxu0 %v2768
    %3209 = vmatprep.mubr.bf16.mxu0 %v2001
    %3210 = vmatmul.mubr.bf16.gmra.mrb[0].mxu0 %v2000
    %v3211 = vpop.f32.mrb[0].mxu0
    %v3212 = vadd.f32 %v3169, %v3211
    %v3213 = vpop.f32.mrb[0].mxu0
    %v3214 = vadd.f32 %v3171, %v3213
    %v3215 = vpop.f32.mrb[0].mxu0
    %v3216 = vadd.f32 %v3173, %v3215
    %v3217 = vpop.f32.mrb[0].mxu0
    %v3218 = vadd.f32 %v3175, %v3217
    %3219 = vdwg.mxu0
    %v3220 = vmax.f32 %v3083, %v3085
    %v3221 = vmax.f32 %v3087, %v3089
    %v3222 = vmax.f32 %v3212, %v3214
    %v3223 = vmax.f32 %v3216, %v3218
    %v3224 = vmax.f32 %v3220, %v3222
    %v3225 = vmax.f32 %v3221, %v3223
    %v3227 = vlaneseq
    %v3228 = vshrl.u32 %v3227, 7
    %v3229 = vsub.s32 0, %v3228
    %v3230 = vrot.slane %v1995, %v3229
    %v3232 = vadd.f32 %v3224, %v3230
    %v3233 = vadd.f32 %v3225, %v3230
    %v3234 = vmax.f32 %v3232, 0.0
    %v3235 = vmax.f32 %v3233, 0.0
    %v3236 = vpack.c.bf16 %v3235, %v3234
    %v3237 = vld [vmem:[#allocation7] sm:$0xf]
    %v3238 = vld [vmem:[#allocation7 + $0x4] sm:$0xf]
    %v3239 = vld [vmem:[#allocation7 + $0x8] sm:$0xf]
    %v3240 = vld [vmem:[#allocation7 + $0xc] sm:$0xf]
    %v3241 = vld [vmem:[#allocation7 + $0x10] sm:$0xf]
    %v3242 = vld [vmem:[#allocation7 + $0x14] sm:$0xf]
    %v3243 = vld [vmem:[#allocation7 + $0x18] sm:$0xf]
    %v3244 = vld [vmem:[#allocation7 + $0x1c] sm:$0xf]
    %v3245 = vld [vmem:[#allocation7 + $0x20] sm:$0xf]
    %v3246 = vld [vmem:[#allocation7 + $0x24] sm:$0xf]
    %v3247 = vld [vmem:[#allocation7 + $0x28] sm:$0xf]
    %v3248 = vld [vmem:[#allocation7 + $0x2c] sm:$0xf]
    %v3249 = vld [vmem:[#allocation7 + $0x30] sm:$0xf]
    %v3250 = vld [vmem:[#allocation7 + $0x34] sm:$0xf]
    %v3251 = vld [vmem:[#allocation7 + $0x38] sm:$0xf]
    %v3252 = vld [vmem:[#allocation7 + $0x3c] sm:$0xf]
    %v3253 = vld [vmem:[#allocation2 + $0x10] sm:$0xff]
    %v3254 = vld [vmem:[#allocation2 + $0x18] sm:$0xff]
    %v3255 = vld [vmem:[#allocation2 + $0x20] sm:$0xff]
    %v3256 = vld [vmem:[#allocation2 + $0x28] sm:$0xff]
    %v3257 = vld [vmem:[#allocation2 + $0x30] sm:$0xff]
    %v3258 = vld [vmem:[#allocation2 + $0x38] sm:$0xff]
    %3259 = vmatprep.subr.bf16.mxu0 %v2579
    %3260 = vmatpush1.bf16.msra.mxu0 %v2578
    %3261 = vmatprep.subr.bf16.mxu0 %v2583
    %3262 = vmatpush1.bf16.msra.mxu0 %v2582
    %3263 = vmatprep.subr.bf16.mxu0 %v2587
    %3264 = vmatpush1.bf16.msra.mxu0 %v2586
    %3265 = vmatprep.subr.bf16.mxu0 %v2591
    %3266 = vmatpush1.bf16.msra.mxu0 %v2590
    %3267 = vmatprep.subr.bf16.mxu0 %v2595
    %3268 = vmatpush1.bf16.msra.mxu0 %v2594
    %3269 = vmatprep.subr.bf16.mxu0 %v2599
    %3270 = vmatpush1.bf16.msra.mxu0 %v2598
    %3271 = vmatprep.subr.bf16.mxu0 %v2603
    %3272 = vmatpush1.bf16.msra.mxu0 %v2602
    %3273 = vmatprep.subr.bf16.mxu0 %v2607
    %3274 = vmatpush1.bf16.msra.mxu0 %v2606
    %3275 = vmatprep.subr.bf16.mxu0 %v2611
    %3276 = vmatpush1.bf16.msra.mxu0 %v2610
    %3277 = vmatprep.subr.bf16.mxu0 %v2615
    %3278 = vmatpush1.bf16.msra.mxu0 %v2614
    %3279 = vmatprep.subr.bf16.mxu0 %v2619
    %3280 = vmatpush1.bf16.msra.mxu0 %v2618
    %3281 = vmatprep.subr.bf16.mxu0 %v2623
    %3282 = vmatpush1.bf16.msra.mxu0 %v2622
    %3283 = vmatprep.subr.bf16.mxu0 %v2627
    %3284 = vmatpush1.bf16.msra.mxu0 %v2626
    %3285 = vmatprep.subr.bf16.mxu0 %v2631
    %3286 = vmatpush1.bf16.msra.mxu0 %v2630
    %3287 = vmatprep.subr.bf16.mxu0 %v2635
    %3288 = vmatpush1.bf16.msra.mxu0 %v2634
    %3289 = vmatprep.subr.bf16.mxu0 %v2639
    %3290 = vmatpush1.bf16.msra.mxu0 %v2638
    %3291 = vmatprep.mubr.bf16.mxu0 %v3254
    %3292 = vmatmul.mubr.bf16.gmra.mrb[0].mxu0 %v3253
    %v3293 = vpop.f32.mrb[0].mxu0
    %v3294 = vadd.f32 0.0, %v3293
    %v3295 = vpop.f32.mrb[0].mxu0
    %v3296 = vadd.f32 0.0, %v3295
    %v3297 = vpop.f32.mrb[0].mxu0
    %v3298 = vadd.f32 0.0, %v3297
    %v3299 = vpop.f32.mrb[0].mxu0
    %v3300 = vadd.f32 0.0, %v3299
    %3301 = vdwg.mxu0
    %3302 = vmatprep.subr.bf16.mxu0 %v2643
    %3303 = vmatpush1.bf16.msra.mxu0 %v2642
    %3304 = vmatprep.subr.bf16.mxu0 %v2647
    %3305 = vmatpush1.bf16.msra.mxu0 %v2646
    %3306 = vmatprep.subr.bf16.mxu0 %v2651
    %3307 = vmatpush1.bf16.msra.mxu0 %v2650
    %3308 = vmatprep.subr.bf16.mxu0 %v2655
    %3309 = vmatpush1.bf16.msra.mxu0 %v2654
    %3310 = vmatprep.subr.bf16.mxu0 %v2659
    %3311 = vmatpush1.bf16.msra.mxu0 %v2658
    %3312 = vmatprep.subr.bf16.mxu0 %v2663
    %3313 = vmatpush1.bf16.msra.mxu0 %v2662
    %3314 = vmatprep.subr.bf16.mxu0 %v2667
    %3315 = vmatpush1.bf16.msra.mxu0 %v2666
    %3316 = vmatprep.subr.bf16.mxu0 %v2671
    %3317 = vmatpush1.bf16.msra.mxu0 %v2670
    %3318 = vmatprep.subr.bf16.mxu0 %v2675
    %3319 = vmatpush1.bf16.msra.mxu0 %v2674
    %3320 = vmatprep.subr.bf16.mxu0 %v2679
    %3321 = vmatpush1.bf16.msra.mxu0 %v2678
    %3322 = vmatprep.subr.bf16.mxu0 %v2683
    %3323 = vmatpush1.bf16.msra.mxu0 %v2682
    %3324 = vmatprep.subr.bf16.mxu0 %v2687
    %3325 = vmatpush1.bf16.msra.mxu0 %v2686
    %3326 = vmatprep.subr.bf16.mxu0 %v2691
    %3327 = vmatpush1.bf16.msra.mxu0 %v2690
    %3328 = vmatprep.subr.bf16.mxu0 %v2695
    %3329 = vmatpush1.bf16.msra.mxu0 %v2694
    %3330 = vmatprep.subr.bf16.mxu0 %v2699
    %3331 = vmatpush1.bf16.msra.mxu0 %v2698
    %3332 = vmatprep.subr.bf16.mxu0 %v2703
    %3333 = vmatpush1.bf16.msra.mxu0 %v2702
    %3334 = vmatprep.mubr.bf16.mxu0 %v3256
    %3335 = vmatmul.mubr.bf16.gmra.mrb[0].mxu0 %v3255
    %v3336 = vpop.f32.mrb[0].mxu0
    %v3337 = vadd.f32 %v3294, %v3336
    %v3338 = vpop.f32.mrb[0].mxu0
    %v3339 = vadd.f32 %v3296, %v3338
    %v3340 = vpop.f32.mrb[0].mxu0
    %v3341 = vadd.f32 %v3298, %v3340
    %v3342 = vpop.f32.mrb[0].mxu0
    %v3343 = vadd.f32 %v3300, %v3342
    %3344 = vdwg.mxu0
    %3345 = vmatprep.subr.bf16.mxu0 %v2707
    %3346 = vmatpush1.bf16.msra.mxu0 %v2706
    %3347 = vmatprep.subr.bf16.mxu0 %v2711
    %3348 = vmatpush1.bf16.msra.mxu0 %v2710
    %3349 = vmatprep.subr.bf16.mxu0 %v2715
    %3350 = vmatpush1.bf16.msra.mxu0 %v2714
    %3351 = vmatprep.subr.bf16.mxu0 %v2719
    %3352 = vmatpush1.bf16.msra.mxu0 %v2718
    %3353 = vmatprep.subr.bf16.mxu0 %v2723
    %3354 = vmatpush1.bf16.msra.mxu0 %v2722
    %3355 = vmatprep.subr.bf16.mxu0 %v2727
    %3356 = vmatpush1.bf16.msra.mxu0 %v2726
    %3357 = vmatprep.subr.bf16.mxu0 %v2731
    %3358 = vmatpush1.bf16.msra.mxu0 %v2730
    %3359 = vmatprep.subr.bf16.mxu0 %v2735
    %3360 = vmatpush1.bf16.msra.mxu0 %v2734
    %3361 = vmatprep.subr.bf16.mxu0 %v2739
    %3362 = vmatpush1.bf16.msra.mxu0 %v2738
    %3363 = vmatprep.subr.bf16.mxu0 %v2743
    %3364 = vmatpush1.bf16.msra.mxu0 %v2742
    %3365 = vmatprep.subr.bf16.mxu0 %v2747
    %3366 = vmatpush1.bf16.msra.mxu0 %v2746
    %3367 = vmatprep.subr.bf16.mxu0 %v2751
    %3368 = vmatpush1.bf16.msra.mxu0 %v2750
    %3369 = vmatprep.subr.bf16.mxu0 %v2755
    %3370 = vmatpush1.bf16.msra.mxu0 %v2754
    %3371 = vmatprep.subr.bf16.mxu0 %v2759
    %3372 = vmatpush1.bf16.msra.mxu0 %v2758
    %3373 = vmatprep.subr.bf16.mxu0 %v2763
    %3374 = vmatpush1.bf16.msra.mxu0 %v2762
    %3375 = vmatprep.subr.bf16.mxu0 %v2767
    %3376 = vmatpush1.bf16.msra.mxu0 %v2766
    %3377 = vmatprep.mubr.bf16.mxu0 %v3258
    %3378 = vmatmul.mubr.bf16.gmra.mrb[0].mxu0 %v3257
    %v3379 = vpop.f32.mrb[0].mxu0
    %v3380 = vadd.f32 %v3337, %v3379
    %v3381 = vpop.f32.mrb[0].mxu0
    %v3382 = vadd.f32 %v3339, %v3381
    %v3383 = vpop.f32.mrb[0].mxu0
    %v3384 = vadd.f32 %v3341, %v3383
    %v3385 = vpop.f32.mrb[0].mxu0
    %v3386 = vadd.f32 %v3343, %v3385
    %3387 = vdwg.mxu0
    %3388 = vmatprep.subr.bf16.mxu0 %v2581
    %3389 = vmatpush1.bf16.msra.mxu0 %v2580
    %3390 = vmatprep.subr.bf16.mxu0 %v2585
    %3391 = vmatpush1.bf16.msra.mxu0 %v2584
    %3392 = vmatprep.subr.bf16.mxu0 %v2589
    %3393 = vmatpush1.bf16.msra.mxu0 %v2588
    %3394 = vmatprep.subr.bf16.mxu0 %v2593
    %3395 = vmatpush1.bf16.msra.mxu0 %v2592
    %3396 = vmatprep.subr.bf16.mxu0 %v2597
    %3397 = vmatpush1.bf16.msra.mxu0 %v2596
    %3398 = vmatprep.subr.bf16.mxu0 %v2601
    %3399 = vmatpush1.bf16.msra.mxu0 %v2600
    %3400 = vmatprep.subr.bf16.mxu0 %v2605
    %3401 = vmatpush1.bf16.msra.mxu0 %v2604
    %3402 = vmatprep.subr.bf16.mxu0 %v2609
    %3403 = vmatpush1.bf16.msra.mxu0 %v2608
    %3404 = vmatprep.subr.bf16.mxu0 %v2613
    %3405 = vmatpush1.bf16.msra.mxu0 %v2612
    %3406 = vmatprep.subr.bf16.mxu0 %v2617
    %3407 = vmatpush1.bf16.msra.mxu0 %v2616
    %3408 = vmatprep.subr.bf16.mxu0 %v2621
    %3409 = vmatpush1.bf16.msra.mxu0 %v2620
    %3410 = vmatprep.subr.bf16.mxu0 %v2625
    %3411 = vmatpush1.bf16.msra.mxu0 %v2624
    %3412 = vmatprep.subr.bf16.mxu0 %v2629
    %3413 = vmatpush1.bf16.msra.mxu0 %v2628
    %3414 = vmatprep.subr.bf16.mxu0 %v2633
    %3415 = vmatpush1.bf16.msra.mxu0 %v2632
    %3416 = vmatprep.subr.bf16.mxu0 %v2637
    %3417 = vmatpush1.bf16.msra.mxu0 %v2636
    %3418 = vmatprep.subr.bf16.mxu0 %v2641
    %3419 = vmatpush1.bf16.msra.mxu0 %v2640
    %3420 = vmatprep.mubr.bf16.mxu0 %v3254
    %3421 = vmatmul.mubr.bf16.gmra.mrb[0].mxu0 %v3253
    %v3422 = vpop.f32.mrb[0].mxu0
    %v3423 = vadd.f32 0.0, %v3422
    %v3424 = vpop.f32.mrb[0].mxu0
    %v3425 = vadd.f32 0.0, %v3424
    %v3426 = vpop.f32.mrb[0].mxu0
    %v3427 = vadd.f32 0.0, %v3426
    %v3428 = vpop.f32.mrb[0].mxu0
    %v3429 = vadd.f32 0.0, %v3428
    %3430 = vdwg.mxu0
    %3431 = vmatprep.subr.bf16.mxu0 %v2645
    %3432 = vmatpush1.bf16.msra.mxu0 %v2644
    %3433 = vmatprep.subr.bf16.mxu0 %v2649
    %3434 = vmatpush1.bf16.msra.mxu0 %v2648
    %3435 = vmatprep.subr.bf16.mxu0 %v2653
    %3436 = vmatpush1.bf16.msra.mxu0 %v2652
    %3437 = vmatprep.subr.bf16.mxu0 %v2657
    %3438 = vmatpush1.bf16.msra.mxu0 %v2656
    %3439 = vmatprep.subr.bf16.mxu0 %v2661
    %3440 = vmatpush1.bf16.msra.mxu0 %v2660
    %3441 = vmatprep.subr.bf16.mxu0 %v2665
    %3442 = vmatpush1.bf16.msra.mxu0 %v2664
    %3443 = vmatprep.subr.bf16.mxu0 %v2669
    %3444 = vmatpush1.bf16.msra.mxu0 %v2668
    %3445 = vmatprep.subr.bf16.mxu0 %v2673
    %3446 = vmatpush1.bf16.msra.mxu0 %v2672
    %3447 = vmatprep.subr.bf16.mxu0 %v2677
    %3448 = vmatpush1.bf16.msra.mxu0 %v2676
    %3449 = vmatprep.subr.bf16.mxu0 %v2681
    %3450 = vmatpush1.bf16.msra.mxu0 %v2680
    %3451 = vmatprep.subr.bf16.mxu0 %v2685
    %3452 = vmatpush1.bf16.msra.mxu0 %v2684
    %3453 = vmatprep.subr.bf16.mxu0 %v2689
    %3454 = vmatpush1.bf16.msra.mxu0 %v2688
    %3455 = vmatprep.subr.bf16.mxu0 %v2693
    %3456 = vmatpush1.bf16.msra.mxu0 %v2692
    %3457 = vmatprep.subr.bf16.mxu0 %v2697
    %3458 = vmatpush1.bf16.msra.mxu0 %v2696
    %3459 = vmatprep.subr.bf16.mxu0 %v2701
    %3460 = vmatpush1.bf16.msra.mxu0 %v2700
    %3461 = vmatprep.subr.bf16.mxu0 %v2705
    %3462 = vmatpush1.bf16.msra.mxu0 %v2704
    %3463 = vmatprep.mubr.bf16.mxu0 %v3256
    %3464 = vmatmul.mubr.bf16.gmra.mrb[0].mxu0 %v3255
    %v3465 = vpop.f32.mrb[0].mxu0
    %v3466 = vadd.f32 %v3423, %v3465
    %v3467 = vpop.f32.mrb[0].mxu0
    %v3468 = vadd.f32 %v3425, %v3467
    %v3469 = vpop.f32.mrb[0].mxu0
    %v3470 = vadd.f32 %v3427, %v3469
    %v3471 = vpop.f32.mrb[0].mxu0
    %v3472 = vadd.f32 %v3429, %v3471
    %3473 = vdwg.mxu0
    %3474 = vmatprep.subr.bf16.mxu0 %v2709
    %3475 = vmatpush1.bf16.msra.mxu0 %v2708
    %3476 = vmatprep.subr.bf16.mxu0 %v2713
    %3477 = vmatpush1.bf16.msra.mxu0 %v2712
    %3478 = vmatprep.subr.bf16.mxu0 %v2717
    %3479 = vmatpush1.bf16.msra.mxu0 %v2716
    %3480 = vmatprep.subr.bf16.mxu0 %v2721
    %3481 = vmatpush1.bf16.msra.mxu0 %v2720
    %3482 = vmatprep.subr.bf16.mxu0 %v2725
    %3483 = vmatpush1.bf16.msra.mxu0 %v2724
    %3484 = vmatprep.subr.bf16.mxu0 %v2729
    %3485 = vmatpush1.bf16.msra.mxu0 %v2728
    %3486 = vmatprep.subr.bf16.mxu0 %v2733
    %3487 = vmatpush1.bf16.msra.mxu0 %v2732
    %3488 = vmatprep.subr.bf16.mxu0 %v2737
    %3489 = vmatpush1.bf16.msra.mxu0 %v2736
    %3490 = vmatprep.subr.bf16.mxu0 %v2741
    %3491 = vmatpush1.bf16.msra.mxu0 %v2740
    %3492 = vmatprep.subr.bf16.mxu0 %v2745
    %3493 = vmatpush1.bf16.msra.mxu0 %v2744
    %3494 = vmatprep.subr.bf16.mxu0 %v2749
    %3495 = vmatpush1.bf16.msra.mxu0 %v2748
    %3496 = vmatprep.subr.bf16.mxu0 %v2753
    %3497 = vmatpush1.bf16.msra.mxu0 %v2752
    %3498 = vmatprep.subr.bf16.mxu0 %v2757
    %3499 = vmatpush1.bf16.msra.mxu0 %v2756
    %3500 = vmatprep.subr.bf16.mxu0 %v2761
    %3501 = vmatpush1.bf16.msra.mxu0 %v2760
    %3502 = vmatprep.subr.bf16.mxu0 %v2765
    %3503 = vmatpush1.bf16.msra.mxu0 %v2764
    %3504 = vmatprep.subr.bf16.mxu0 %v2769
    %3505 = vmatpush1.bf16.msra.mxu0 %v2768
    %3506 = vmatprep.mubr.bf16.mxu0 %v3258
    %3507 = vmatmul.mubr.bf16.gmra.mrb[0].mxu0 %v3257
    %v3508 = vpop.f32.mrb[0].mxu0
    %v3509 = vadd.f32 %v3466, %v3508
    %v3510 = vpop.f32.mrb[0].mxu0
    %v3511 = vadd.f32 %v3468, %v3510
    %v3512 = vpop.f32.mrb[0].mxu0
    %v3513 = vadd.f32 %v3470, %v3512
    %v3514 = vpop.f32.mrb[0].mxu0
    %v3515 = vadd.f32 %v3472, %v3514
    %3516 = vdwg.mxu0
    %v3517 = vmax.f32 %v3380, %v3382
    %v3518 = vmax.f32 %v3384, %v3386
    %v3519 = vmax.f32 %v3509, %v3511
    %v3520 = vmax.f32 %v3513, %v3515
    %v3521 = vmax.f32 %v3517, %v3519
    %v3522 = vmax.f32 %v3518, %v3520
    %v3523 = vadd.f32 %v3521, %v3230
    %v3524 = vadd.f32 %v3522, %v3230
    %v3525 = vmax.f32 %v3523, 0.0
    %v3526 = vmax.f32 %v3524, 0.0
    %v3527 = vpack.c.bf16 %v3526, %v3525
    %v3528 = vld [vmem:[#allocation7 + $0x40] sm:$0xf]
    %v3529 = vld [vmem:[#allocation7 + $0x44] sm:$0xf]
    %v3530 = vld [vmem:[#allocation7 + $0x48] sm:$0xf]
    %v3531 = vld [vmem:[#allocation7 + $0x4c] sm:$0xf]
    %v3532 = vld [vmem:[#allocation7 + $0x50] sm:$0xf]
    %v3533 = vld [vmem:[#allocation7 + $0x54] sm:$0xf]
    %v3534 = vld [vmem:[#allocation7 + $0x58] sm:$0xf]
    %v3535 = vld [vmem:[#allocation7 + $0x5c] sm:$0xf]
    %v3536 = vld [vmem:[#allocation7 + $0x60] sm:$0xf]
    %v3537 = vld [vmem:[#allocation7 + $0x64] sm:$0xf]
    %v3538 = vld [vmem:[#allocation7 + $0x68] sm:$0xf]
    %v3539 = vld [vmem:[#allocation7 + $0x6c] sm:$0xf]
    %v3540 = vld [vmem:[#allocation7 + $0x70] sm:$0xf]
    %v3541 = vld [vmem:[#allocation7 + $0x74] sm:$0xf]
    %v3542 = vld [vmem:[#allocation7 + $0x78] sm:$0xf]
    %v3543 = vld [vmem:[#allocation7 + $0x7c] sm:$0xf]
    %v3560 = vunpack.c.l.b16 %v3528
    %v3561 = vunpack.c.l.b16 %v3529
    %v3562 = vunpack.c.l.b16 %v3530
    %v3563 = vunpack.c.l.b16 %v3531
    %v3564 = vunpack.c.l.b16 %v3532
    %v3565 = vunpack.c.l.b16 %v3533
    %v3566 = vunpack.c.l.b16 %v3534
    %v3567 = vunpack.c.l.b16 %v3535
    %v3568 = vunpack.c.l.b16 %v3536
    %v3569 = vunpack.c.l.b16 %v3537
    %v3570 = vunpack.c.l.b16 %v3538
    %v3571 = vunpack.c.l.b16 %v3539
    %v3572 = vunpack.c.l.b16 %v3540
    %v3573 = vunpack.c.l.b16 %v3541
    %v3574 = vunpack.c.l.b16 %v3542
    %v3575 = vunpack.c.l.b16 %v3543
    %v3576 = vpack.c.b16 %v3561, %v3560
    %v3577 = vpack.c.b16 %v3563, %v3562
    %v3578 = vpack.c.b16 %v3565, %v3564
    %v3579 = vpack.c.b16 %v3567, %v3566
    %v3580 = vpack.c.b16 %v3569, %v3568
    %v3581 = vpack.c.b16 %v3571, %v3570
    %v3582 = vpack.c.b16 %v3573, %v3572
    %v3583 = vpack.c.b16 %v3575, %v3574
    %3592 = vmatprep.subr.bf16.mxu0 0
    %3593 = vmatpush1.bf16.msra.mxu0 %v3576
    %3594 = vmatprep.subr.bf16.mxu0 0
    %3595 = vmatpush1.bf16.msra.mxu0 %v3577
    %3596 = vmatprep.subr.bf16.mxu0 0
    %3597 = vmatpush1.bf16.msra.mxu0 %v3578
    %3598 = vmatprep.subr.bf16.mxu0 0
    %3599 = vmatpush1.bf16.msra.mxu0 %v3579
    %3600 = vmatprep.subr.bf16.mxu0 0
    %3601 = vmatpush1.bf16.msra.mxu0 %v3580
    %3602 = vmatprep.subr.bf16.mxu0 0
    %3603 = vmatpush1.bf16.msra.mxu0 %v3581
    %3604 = vmatprep.subr.bf16.mxu0 0
    %3605 = vmatpush1.bf16.msra.mxu0 %v3582
    %3606 = vmatprep.subr.bf16.mxu0 0
    %3607 = vmatpush1.bf16.msra.mxu0 %v3583
    %3608 = vmatprep.subr.bf16.mxu0 0
    %3609 = vmatpush1.bf16.msra.mxu0 0
    %3610 = vmatprep.subr.bf16.mxu0 0
    %3611 = vmatpush1.bf16.msra.mxu0 0
    %3612 = vmatprep.subr.bf16.mxu0 0
    %3613 = vmatpush1.bf16.msra.mxu0 0
    %3614 = vmatprep.subr.bf16.mxu0 0
    %3615 = vmatpush1.bf16.msra.mxu0 0
    %3616 = vmatprep.subr.bf16.mxu0 0
    %3617 = vmatpush1.bf16.msra.mxu0 0
    %3618 = vmatprep.subr.bf16.mxu0 0
    %3619 = vmatpush1.bf16.msra.mxu0 0
    %3620 = vmatprep.subr.bf16.mxu0 0
    %3621 = vmatpush1.bf16.msra.mxu0 0
    %3622 = vmatprep.subr.bf16.mxu0 0
    %3623 = vmatpush1.bf16.msra.mxu0 0
    %3624 = vmatprep.mubr.bf16.mxu0 0
    %3625 = vmatmul.mubr.bf16.gmra.mrb[0].mxu0 %v3527
    %v3626 = vpop.f32.mrb[0].mxu0
    %v3627 = vadd.f32 0.0, %v3626
    %v3628 = vpop.f32.mrb[0].mxu0
    %v3629 = vpop.f32.mrb[0].mxu0
    %v3630 = vadd.f32 0.0, %v3629
    %v3631 = vpop.f32.mrb[0].mxu0
    %3632 = vdwg.mxu0
    %v3649 = vunpack.c.l.b16 %v3237
    %v3650 = vunpack.c.l.b16 %v3238
    %v3651 = vunpack.c.l.b16 %v3239
    %v3652 = vunpack.c.l.b16 %v3240
    %v3653 = vunpack.c.l.b16 %v3241
    %v3654 = vunpack.c.l.b16 %v3242
    %v3655 = vunpack.c.l.b16 %v3243
    %v3656 = vunpack.c.l.b16 %v3244
    %v3657 = vunpack.c.l.b16 %v3245
    %v3658 = vunpack.c.l.b16 %v3246
    %v3659 = vunpack.c.l.b16 %v3247
    %v3660 = vunpack.c.l.b16 %v3248
    %v3661 = vunpack.c.l.b16 %v3249
    %v3662 = vunpack.c.l.b16 %v3250
    %v3663 = vunpack.c.l.b16 %v3251
    %v3664 = vunpack.c.l.b16 %v3252
    %v3665 = vpack.c.b16 %v3650, %v3649
    %v3666 = vpack.c.b16 %v3652, %v3651
    %v3667 = vpack.c.b16 %v3654, %v3653
    %v3668 = vpack.c.b16 %v3656, %v3655
    %v3669 = vpack.c.b16 %v3658, %v3657
    %v3670 = vpack.c.b16 %v3660, %v3659
    %v3671 = vpack.c.b16 %v3662, %v3661
    %v3672 = vpack.c.b16 %v3664, %v3663
    %3681 = vmatprep.subr.bf16.mxu0 0
    %3682 = vmatpush1.bf16.msra.mxu0 %v3665
    %3683 = vmatprep.subr.bf16.mxu0 0
    %3684 = vmatpush1.bf16.msra.mxu0 %v3666
    %3685 = vmatprep.subr.bf16.mxu0 0
    %3686 = vmatpush1.bf16.msra.mxu0 %v3667
    %3687 = vmatprep.subr.bf16.mxu0 0
    %3688 = vmatpush1.bf16.msra.mxu0 %v3668
    %3689 = vmatprep.subr.bf16.mxu0 0
    %3690 = vmatpush1.bf16.msra.mxu0 %v3669
    %3691 = vmatprep.subr.bf16.mxu0 0
    %3692 = vmatpush1.bf16.msra.mxu0 %v3670
    %3693 = vmatprep.subr.bf16.mxu0 0
    %3694 = vmatpush1.bf16.msra.mxu0 %v3671
    %3695 = vmatprep.subr.bf16.mxu0 0
    %3696 = vmatpush1.bf16.msra.mxu0 %v3672
    %3697 = vmatprep.subr.bf16.mxu0 0
    %3698 = vmatpush1.bf16.msra.mxu0 0
    %3699 = vmatprep.subr.bf16.mxu0 0
    %3700 = vmatpush1.bf16.msra.mxu0 0
    %3701 = vmatprep.subr.bf16.mxu0 0
    %3702 = vmatpush1.bf16.msra.mxu0 0
    %3703 = vmatprep.subr.bf16.mxu0 0
    %3704 = vmatpush1.bf16.msra.mxu0 0
    %3705 = vmatprep.subr.bf16.mxu0 0
    %3706 = vmatpush1.bf16.msra.mxu0 0
    %3707 = vmatprep.subr.bf16.mxu0 0
    %3708 = vmatpush1.bf16.msra.mxu0 0
    %3709 = vmatprep.subr.bf16.mxu0 0
    %3710 = vmatpush1.bf16.msra.mxu0 0
    %3711 = vmatprep.subr.bf16.mxu0 0
    %3712 = vmatpush1.bf16.msra.mxu0 0
    %3713 = vmatprep.mubr.bf16.mxu0 0
    %3714 = vmatmul.mubr.bf16.gmra.mrb[0].mxu0 %v3236
    %v3715 = vpop.f32.mrb[0].mxu0
    %v3716 = vadd.f32 %v3627, %v3715
    %v3717 = vpop.f32.mrb[0].mxu0
    %v3718 = vpop.f32.mrb[0].mxu0
    %v3719 = vadd.f32 %v3630, %v3718
    %v3720 = vpop.f32.mrb[0].mxu0
    %3721 = vdwg.mxu0
    %v3722 = vld [vmem:[#allocation2 + $0x20] sm:$0xff]
    %v3723 = vld [vmem:[#allocation2 + $0x28] sm:$0xff]
    %v3724 = vld [vmem:[#allocation2 + $0x30] sm:$0xff]
    %v3725 = vld [vmem:[#allocation2 + $0x38] sm:$0xff]
    %v3726 = vld [vmem:[#allocation2 + $0x40] sm:$0xff]
    %v3727 = vld [vmem:[#allocation2 + $0x48] sm:$0xff]
    %3728 = vmatprep.subr.bf16.mxu0 %v2579
    %3729 = vmatpush1.bf16.msra.mxu0 %v2578
    %3730 = vmatprep.subr.bf16.mxu0 %v2583
    %3731 = vmatpush1.bf16.msra.mxu0 %v2582
    %3732 = vmatprep.subr.bf16.mxu0 %v2587
    %3733 = vmatpush1.bf16.msra.mxu0 %v2586
    %3734 = vmatprep.subr.bf16.mxu0 %v2591
    %3735 = vmatpush1.bf16.msra.mxu0 %v2590
    %3736 = vmatprep.subr.bf16.mxu0 %v2595
    %3737 = vmatpush1.bf16.msra.mxu0 %v2594
    %3738 = vmatprep.subr.bf16.mxu0 %v2599
    %3739 = vmatpush1.bf16.msra.mxu0 %v2598
    %3740 = vmatprep.subr.bf16.mxu0 %v2603
    %3741 = vmatpush1.bf16.msra.mxu0 %v2602
    %3742 = vmatprep.subr.bf16.mxu0 %v2607
    %3743 = vmatpush1.bf16.msra.mxu0 %v2606
    %3744 = vmatprep.subr.bf16.mxu0 %v2611
    %3745 = vmatpush1.bf16.msra.mxu0 %v2610
    %3746 = vmatprep.subr.bf16.mxu0 %v2615
    %3747 = vmatpush1.bf16.msra.mxu0 %v2614
    %3748 = vmatprep.subr.bf16.mxu0 %v2619
    %3749 = vmatpush1.bf16.msra.mxu0 %v2618
    %3750 = vmatprep.subr.bf16.mxu0 %v2623
    %3751 = vmatpush1.bf16.msra.mxu0 %v2622
    %3752 = vmatprep.subr.bf16.mxu0 %v2627
    %3753 = vmatpush1.bf16.msra.mxu0 %v2626
    %3754 = vmatprep.subr.bf16.mxu0 %v2631
    %3755 = vmatpush1.bf16.msra.mxu0 %v2630
    %3756 = vmatprep.subr.bf16.mxu0 %v2635
    %3757 = vmatpush1.bf16.msra.mxu0 %v2634
    %3758 = vmatprep.subr.bf16.mxu0 %v2639
    %3759 = vmatpush1.bf16.msra.mxu0 %v2638
    %3760 = vmatprep.mubr.bf16.mxu0 %v3723
    %3761 = vmatmul.mubr.bf16.gmra.mrb[0].mxu0 %v3722
    %v3762 = vpop.f32.mrb[0].mxu0
    %v3763 = vadd.f32 0.0, %v3762
    %v3764 = vpop.f32.mrb[0].mxu0
    %v3765 = vadd.f32 0.0, %v3764
    %v3766 = vpop.f32.mrb[0].mxu0
    %v3767 = vadd.f32 0.0, %v3766
    %v3768 = vpop.f32.mrb[0].mxu0
    %v3769 = vadd.f32 0.0, %v3768
    %3770 = vdwg.mxu0
    %3771 = vmatprep.subr.bf16.mxu0 %v2643
    %3772 = vmatpush1.bf16.msra.mxu0 %v2642
    %3773 = vmatprep.subr.bf16.mxu0 %v2647
    %3774 = vmatpush1.bf16.msra.mxu0 %v2646
    %3775 = vmatprep.subr.bf16.mxu0 %v2651
    %3776 = vmatpush1.bf16.msra.mxu0 %v2650
    %3777 = vmatprep.subr.bf16.mxu0 %v2655
    %3778 = vmatpush1.bf16.msra.mxu0 %v2654
    %3779 = vmatprep.subr.bf16.mxu0 %v2659
    %3780 = vmatpush1.bf16.msra.mxu0 %v2658
    %3781 = vmatprep.subr.bf16.mxu0 %v2663
    %3782 = vmatpush1.bf16.msra.mxu0 %v2662
    %3783 = vmatprep.subr.bf16.mxu0 %v2667
    %3784 = vmatpush1.bf16.msra.mxu0 %v2666
    %3785 = vmatprep.subr.bf16.mxu0 %v2671
    %3786 = vmatpush1.bf16.msra.mxu0 %v2670
    %3787 = vmatprep.subr.bf16.mxu0 %v2675
    %3788 = vmatpush1.bf16.msra.mxu0 %v2674
    %3789 = vmatprep.subr.bf16.mxu0 %v2679
    %3790 = vmatpush1.bf16.msra.mxu0 %v2678
    %3791 = vmatprep.subr.bf16.mxu0 %v2683
    %3792 = vmatpush1.bf16.msra.mxu0 %v2682
    %3793 = vmatprep.subr.bf16.mxu0 %v2687
    %3794 = vmatpush1.bf16.msra.mxu0 %v2686
    %3795 = vmatprep.subr.bf16.mxu0 %v2691
    %3796 = vmatpush1.bf16.msra.mxu0 %v2690
    %3797 = vmatprep.subr.bf16.mxu0 %v2695
    %3798 = vmatpush1.bf16.msra.mxu0 %v2694
    %3799 = vmatprep.subr.bf16.mxu0 %v2699
    %3800 = vmatpush1.bf16.msra.mxu0 %v2698
    %3801 = vmatprep.subr.bf16.mxu0 %v2703
    %3802 = vmatpush1.bf16.msra.mxu0 %v2702
    %3803 = vmatprep.mubr.bf16.mxu0 %v3725
    %3804 = vmatmul.mubr.bf16.gmra.mrb[0].mxu0 %v3724
    %v3805 = vpop.f32.mrb[0].mxu0
    %v3806 = vadd.f32 %v3763, %v3805
    %v3807 = vpop.f32.mrb[0].mxu0
    %v3808 = vadd.f32 %v3765, %v3807
    %v3809 = vpop.f32.mrb[0].mxu0
    %v3810 = vadd.f32 %v3767, %v3809
    %v3811 = vpop.f32.mrb[0].mxu0
    %v3812 = vadd.f32 %v3769, %v3811
    %3813 = vdwg.mxu0
    %3814 = vmatprep.subr.bf16.mxu0 %v2707
    %3815 = vmatpush1.bf16.msra.mxu0 %v2706
    %3816 = vmatprep.subr.bf16.mxu0 %v2711
    %3817 = vmatpush1.bf16.msra.mxu0 %v2710
    %3818 = vmatprep.subr.bf16.mxu0 %v2715
    %3819 = vmatpush1.bf16.msra.mxu0 %v2714
    %3820 = vmatprep.subr.bf16.mxu0 %v2719
    %3821 = vmatpush1.bf16.msra.mxu0 %v2718
    %3822 = vmatprep.subr.bf16.mxu0 %v2723
    %3823 = vmatpush1.bf16.msra.mxu0 %v2722
    %3824 = vmatprep.subr.bf16.mxu0 %v2727
    %3825 = vmatpush1.bf16.msra.mxu0 %v2726
    %3826 = vmatprep.subr.bf16.mxu0 %v2731
    %3827 = vmatpush1.bf16.msra.mxu0 %v2730
    %3828 = vmatprep.subr.bf16.mxu0 %v2735
    %3829 = vmatpush1.bf16.msra.mxu0 %v2734
    %3830 = vmatprep.subr.bf16.mxu0 %v2739
    %3831 = vmatpush1.bf16.msra.mxu0 %v2738
    %3832 = vmatprep.subr.bf16.mxu0 %v2743
    %3833 = vmatpush1.bf16.msra.mxu0 %v2742
    %3834 = vmatprep.subr.bf16.mxu0 %v2747
    %3835 = vmatpush1.bf16.msra.mxu0 %v2746
    %3836 = vmatprep.subr.bf16.mxu0 %v2751
    %3837 = vmatpush1.bf16.msra.mxu0 %v2750
    %3838 = vmatprep.subr.bf16.mxu0 %v2755
    %3839 = vmatpush1.bf16.msra.mxu0 %v2754
    %3840 = vmatprep.subr.bf16.mxu0 %v2759
    %3841 = vmatpush1.bf16.msra.mxu0 %v2758
    %3842 = vmatprep.subr.bf16.mxu0 %v2763
    %3843 = vmatpush1.bf16.msra.mxu0 %v2762
    %3844 = vmatprep.subr.bf16.mxu0 %v2767
    %3845 = vmatpush1.bf16.msra.mxu0 %v2766
    %3846 = vmatprep.mubr.bf16.mxu0 %v3727
    %3847 = vmatmul.mubr.bf16.gmra.mrb[0].mxu0 %v3726
    %v3848 = vpop.f32.mrb[0].mxu0
    %v3849 = vadd.f32 %v3806, %v3848
    %v3850 = vpop.f32.mrb[0].mxu0
    %v3851 = vadd.f32 %v3808, %v3850
    %v3852 = vpop.f32.mrb[0].mxu0
    %v3853 = vadd.f32 %v3810, %v3852
    %v3854 = vpop.f32.mrb[0].mxu0
    %v3855 = vadd.f32 %v3812, %v3854
    %3856 = vdwg.mxu0
    %3857 = vmatprep.subr.bf16.mxu0 %v2581
    %3858 = vmatpush1.bf16.msra.mxu0 %v2580
    %3859 = vmatprep.subr.bf16.mxu0 %v2585
    %3860 = vmatpush1.bf16.msra.mxu0 %v2584
    %3861 = vmatprep.subr.bf16.mxu0 %v2589
    %3862 = vmatpush1.bf16.msra.mxu0 %v2588
    %3863 = vmatprep.subr.bf16.mxu0 %v2593
    %3864 = vmatpush1.bf16.msra.mxu0 %v2592
    %3865 = vmatprep.subr.bf16.mxu0 %v2597
    %3866 = vmatpush1.bf16.msra.mxu0 %v2596
    %3867 = vmatprep.subr.bf16.mxu0 %v2601
    %3868 = vmatpush1.bf16.msra.mxu0 %v2600
    %3869 = vmatprep.subr.bf16.mxu0 %v2605
    %3870 = vmatpush1.bf16.msra.mxu0 %v2604
    %3871 = vmatprep.subr.bf16.mxu0 %v2609
    %3872 = vmatpush1.bf16.msra.mxu0 %v2608
    %3873 = vmatprep.subr.bf16.mxu0 %v2613
    %3874 = vmatpush1.bf16.msra.mxu0 %v2612
    %3875 = vmatprep.subr.bf16.mxu0 %v2617
    %3876 = vmatpush1.bf16.msra.mxu0 %v2616
    %3877 = vmatprep.subr.bf16.mxu0 %v2621
    %3878 = vmatpush1.bf16.msra.mxu0 %v2620
    %3879 = vmatprep.subr.bf16.mxu0 %v2625
    %3880 = vmatpush1.bf16.msra.mxu0 %v2624
    %3881 = vmatprep.subr.bf16.mxu0 %v2629
    %3882 = vmatpush1.bf16.msra.mxu0 %v2628
    %3883 = vmatprep.subr.bf16.mxu0 %v2633
    %3884 = vmatpush1.bf16.msra.mxu0 %v2632
    %3885 = vmatprep.subr.bf16.mxu0 %v2637
    %3886 = vmatpush1.bf16.msra.mxu0 %v2636
    %3887 = vmatprep.subr.bf16.mxu0 %v2641
    %3888 = vmatpush1.bf16.msra.mxu0 %v2640
    %3889 = vmatprep.mubr.bf16.mxu0 %v3723
    %3890 = vmatmul.mubr.bf16.gmra.mrb[0].mxu0 %v3722
    %v3891 = vpop.f32.mrb[0].mxu0
    %v3892 = vadd.f32 0.0, %v3891
    %v3893 = vpop.f32.mrb[0].mxu0
    %v3894 = vadd.f32 0.0, %v3893
    %v3895 = vpop.f32.mrb[0].mxu0
    %v3896 = vadd.f32 0.0, %v3895
    %v3897 = vpop.f32.mrb[0].mxu0
    %v3898 = vadd.f32 0.0, %v3897
    %3899 = vdwg.mxu0
    %3900 = vmatprep.subr.bf16.mxu0 %v2645
    %3901 = vmatpush1.bf16.msra.mxu0 %v2644
    %3902 = vmatprep.subr.bf16.mxu0 %v2649
    %3903 = vmatpush1.bf16.msra.mxu0 %v2648
    %3904 = vmatprep.subr.bf16.mxu0 %v2653
    %3905 = vmatpush1.bf16.msra.mxu0 %v2652
    %3906 = vmatprep.subr.bf16.mxu0 %v2657
    %3907 = vmatpush1.bf16.msra.mxu0 %v2656
    %3908 = vmatprep.subr.bf16.mxu0 %v2661
    %3909 = vmatpush1.bf16.msra.mxu0 %v2660
    %3910 = vmatprep.subr.bf16.mxu0 %v2665
    %3911 = vmatpush1.bf16.msra.mxu0 %v2664
    %3912 = vmatprep.subr.bf16.mxu0 %v2669
    %3913 = vmatpush1.bf16.msra.mxu0 %v2668
    %3914 = vmatprep.subr.bf16.mxu0 %v2673
    %3915 = vmatpush1.bf16.msra.mxu0 %v2672
    %3916 = vmatprep.subr.bf16.mxu0 %v2677
    %3917 = vmatpush1.bf16.msra.mxu0 %v2676
    %3918 = vmatprep.subr.bf16.mxu0 %v2681
    %3919 = vmatpush1.bf16.msra.mxu0 %v2680
    %3920 = vmatprep.subr.bf16.mxu0 %v2685
    %3921 = vmatpush1.bf16.msra.mxu0 %v2684
    %3922 = vmatprep.subr.bf16.mxu0 %v2689
    %3923 = vmatpush1.bf16.msra.mxu0 %v2688
    %3924 = vmatprep.subr.bf16.mxu0 %v2693
    %3925 = vmatpush1.bf16.msra.mxu0 %v2692
    %3926 = vmatprep.subr.bf16.mxu0 %v2697
    %3927 = vmatpush1.bf16.msra.mxu0 %v2696
    %3928 = vmatprep.subr.bf16.mxu0 %v2701
    %3929 = vmatpush1.bf16.msra.mxu0 %v2700
    %3930 = vmatprep.subr.bf16.mxu0 %v2705
    %3931 = vmatpush1.bf16.msra.mxu0 %v2704
    %3932 = vmatprep.mubr.bf16.mxu0 %v3725
    %3933 = vmatmul.mubr.bf16.gmra.mrb[0].mxu0 %v3724
    %v3934 = vpop.f32.mrb[0].mxu0
    %v3935 = vadd.f32 %v3892, %v3934
    %v3936 = vpop.f32.mrb[0].mxu0
    %v3937 = vadd.f32 %v3894, %v3936
    %v3938 = vpop.f32.mrb[0].mxu0
    %v3939 = vadd.f32 %v3896, %v3938
    %v3940 = vpop.f32.mrb[0].mxu0
    %v3941 = vadd.f32 %v3898, %v3940
    %3942 = vdwg.mxu0
    %3943 = vmatprep.subr.bf16.mxu0 %v2709
    %3944 = vmatpush1.bf16.msra.mxu0 %v2708
    %3945 = vmatprep.subr.bf16.mxu0 %v2713
    %3946 = vmatpush1.bf16.msra.mxu0 %v2712
    %3947 = vmatprep.subr.bf16.mxu0 %v2717
    %3948 = vmatpush1.bf16.msra.mxu0 %v2716
    %3949 = vmatprep.subr.bf16.mxu0 %v2721
    %3950 = vmatpush1.bf16.msra.mxu0 %v2720
    %3951 = vmatprep.subr.bf16.mxu0 %v2725
    %3952 = vmatpush1.bf16.msra.mxu0 %v2724
    %3953 = vmatprep.subr.bf16.mxu0 %v2729
    %3954 = vmatpush1.bf16.msra.mxu0 %v2728
    %3955 = vmatprep.subr.bf16.mxu0 %v2733
    %3956 = vmatpush1.bf16.msra.mxu0 %v2732
    %3957 = vmatprep.subr.bf16.mxu0 %v2737
    %3958 = vmatpush1.bf16.msra.mxu0 %v2736
    %3959 = vmatprep.subr.bf16.mxu0 %v2741
    %3960 = vmatpush1.bf16.msra.mxu0 %v2740
    %3961 = vmatprep.subr.bf16.mxu0 %v2745
    %3962 = vmatpush1.bf16.msra.mxu0 %v2744
    %3963 = vmatprep.subr.bf16.mxu0 %v2749
    %3964 = vmatpush1.bf16.msra.mxu0 %v2748
    %3965 = vmatprep.subr.bf16.mxu0 %v2753
    %3966 = vmatpush1.bf16.msra.mxu0 %v2752
    %3967 = vmatprep.subr.bf16.mxu0 %v2757
    %3968 = vmatpush1.bf16.msra.mxu0 %v2756
    %3969 = vmatprep.subr.bf16.mxu0 %v2761
    %3970 = vmatpush1.bf16.msra.mxu0 %v2760
    %3971 = vmatprep.subr.bf16.mxu0 %v2765
    %3972 = vmatpush1.bf16.msra.mxu0 %v2764
    %3973 = vmatprep.subr.bf16.mxu0 %v2769
    %3974 = vmatpush1.bf16.msra.mxu0 %v2768
    %3975 = vmatprep.mubr.bf16.mxu0 %v3727
    %3976 = vmatmul.mubr.bf16.gmra.mrb[0].mxu0 %v3726
    %v3977 = vpop.f32.mrb[0].mxu0
    %v3978 = vadd.f32 %v3935, %v3977
    %v3979 = vpop.f32.mrb[0].mxu0
    %v3980 = vadd.f32 %v3937, %v3979
    %v3981 = vpop.f32.mrb[0].mxu0
    %v3982 = vadd.f32 %v3939, %v3981
    %v3983 = vpop.f32.mrb[0].mxu0
    %v3984 = vadd.f32 %v3941, %v3983
    %3985 = vdwg.mxu0
    %v3986 = vmax.f32 %v3849, %v3851
    %v3987 = vmax.f32 %v3853, %v3855
    %v3988 = vmax.f32 %v3978, %v3980
    %v3989 = vmax.f32 %v3982, %v3984
    %v3990 = vmax.f32 %v3986, %v3988
    %v3991 = vmax.f32 %v3987, %v3989
    %v3992 = vadd.f32 %v3990, %v3230
    %v3993 = vadd.f32 %v3991, %v3230
    %v3994 = vmax.f32 %v3992, 0.0
    %v3995 = vmax.f32 %v3993, 0.0
    %v3996 = vpack.c.bf16 %v3995, %v3994
    %v3997 = vld [vmem:[#allocation7 + $0x80] sm:$0xf]
    %v3998 = vld [vmem:[#allocation7 + $0x84] sm:$0xf]
    %v3999 = vld [vmem:[#allocation7 + $0x88] sm:$0xf]
    %v4000 = vld [vmem:[#allocation7 + $0x8c] sm:$0xf]
    %v4001 = vld [vmem:[#allocation7 + $0x90] sm:$0xf]
    %v4002 = vld [vmem:[#allocation7 + $0x94] sm:$0xf]
    %v4003 = vld [vmem:[#allocation7 + $0x98] sm:$0xf]
    %v4004 = vld [vmem:[#allocation7 + $0x9c] sm:$0xf]
    %v4005 = vld [vmem:[#allocation7 + $0xa0] sm:$0xf]
    %v4006 = vld [vmem:[#allocation7 + $0xa4] sm:$0xf]
    %v4007 = vld [vmem:[#allocation7 + $0xa8] sm:$0xf]
    %v4008 = vld [vmem:[#allocation7 + $0xac] sm:$0xf]
    %v4009 = vld [vmem:[#allocation7 + $0xb0] sm:$0xf]
    %v4010 = vld [vmem:[#allocation7 + $0xb4] sm:$0xf]
    %v4011 = vld [vmem:[#allocation7 + $0xb8] sm:$0xf]
    %v4012 = vld [vmem:[#allocation7 + $0xbc] sm:$0xf]
    %v4029 = vunpack.c.l.b16 %v3997
    %v4030 = vunpack.c.l.b16 %v3998
    %v4031 = vunpack.c.l.b16 %v3999
    %v4032 = vunpack.c.l.b16 %v4000
    %v4033 = vunpack.c.l.b16 %v4001
    %v4034 = vunpack.c.l.b16 %v4002
    %v4035 = vunpack.c.l.b16 %v4003
    %v4036 = vunpack.c.l.b16 %v4004
    %v4037 = vunpack.c.l.b16 %v4005
    %v4038 = vunpack.c.l.b16 %v4006
    %v4039 = vunpack.c.l.b16 %v4007
    %v4040 = vunpack.c.l.b16 %v4008
    %v4041 = vunpack.c.l.b16 %v4009
    %v4042 = vunpack.c.l.b16 %v4010
    %v4043 = vunpack.c.l.b16 %v4011
    %v4044 = vunpack.c.l.b16 %v4012
    %v4045 = vpack.c.b16 %v4030, %v4029
    %v4046 = vpack.c.b16 %v4032, %v4031
    %v4047 = vpack.c.b16 %v4034, %v4033
    %v4048 = vpack.c.b16 %v4036, %v4035
    %v4049 = vpack.c.b16 %v4038, %v4037
    %v4050 = vpack.c.b16 %v4040, %v4039
    %v4051 = vpack.c.b16 %v4042, %v4041
    %v4052 = vpack.c.b16 %v4044, %v4043
    %4061 = vmatprep.subr.bf16.mxu0 0
    %4062 = vmatpush1.bf16.msra.mxu0 %v4045
    %4063 = vmatprep.subr.bf16.mxu0 0
    %4064 = vmatpush1.bf16.msra.mxu0 %v4046
    %4065 = vmatprep.subr.bf16.mxu0 0
    %4066 = vmatpush1.bf16.msra.mxu0 %v4047
    %4067 = vmatprep.subr.bf16.mxu0 0
    %4068 = vmatpush1.bf16.msra.mxu0 %v4048
    %4069 = vmatprep.subr.bf16.mxu0 0
    %4070 = vmatpush1.bf16.msra.mxu0 %v4049
    %4071 = vmatprep.subr.bf16.mxu0 0
    %4072 = vmatpush1.bf16.msra.mxu0 %v4050
    %4073 = vmatprep.subr.bf16.mxu0 0
    %4074 = vmatpush1.bf16.msra.mxu0 %v4051
    %4075 = vmatprep.subr.bf16.mxu0 0
    %4076 = vmatpush1.bf16.msra.mxu0 %v4052
    %4077 = vmatprep.subr.bf16.mxu0 0
    %4078 = vmatpush1.bf16.msra.mxu0 0
    %4079 = vmatprep.subr.bf16.mxu0 0
    %4080 = vmatpush1.bf16.msra.mxu0 0
    %4081 = vmatprep.subr.bf16.mxu0 0
    %4082 = vmatpush1.bf16.msra.mxu0 0
    %4083 = vmatprep.subr.bf16.mxu0 0
    %4084 = vmatpush1.bf16.msra.mxu0 0
    %4085 = vmatprep.subr.bf16.mxu0 0
    %4086 = vmatpush1.bf16.msra.mxu0 0
    %4087 = vmatprep.subr.bf16.mxu0 0
    %4088 = vmatpush1.bf16.msra.mxu0 0
    %4089 = vmatprep.subr.bf16.mxu0 0
    %4090 = vmatpush1.bf16.msra.mxu0 0
    %4091 = vmatprep.subr.bf16.mxu0 0
    %4092 = vmatpush1.bf16.msra.mxu0 0
    %4093 = vmatprep.mubr.bf16.mxu0 0
    %4094 = vmatmul.mubr.bf16.gmra.mrb[0].mxu0 %v3996
    %v4095 = vpop.f32.mrb[0].mxu0
    %v4096 = vadd.f32 0.0, %v4095
    %v4097 = vpop.f32.mrb[0].mxu0
    %v4098 = vpop.f32.mrb[0].mxu0
    %v4099 = vadd.f32 0.0, %v4098
    %v4100 = vpop.f32.mrb[0].mxu0
    %4101 = vdwg.mxu0
    %v4102 = vadd.f32 %v3716, %v4096
    %v4103 = vadd.f32 %v3719, %v4099
    %v4104 = vld [vmem:[#allocation2 + $0x30] sm:$0xff]
    %v4105 = vld [vmem:[#allocation2 + $0x38] sm:$0xff]
    %v4106 = vld [vmem:[#allocation2 + $0x40] sm:$0xff]
    %v4107 = vld [vmem:[#allocation2 + $0x48] sm:$0xff]
    %v4108 = vld [vmem:[#allocation2 + $0x50] sm:$0xff]
    %v4109 = vld [vmem:[#allocation2 + $0x58] sm:$0xff]
    %4110 = vmatprep.subr.bf16.mxu0 %v2579
    %4111 = vmatpush1.bf16.msra.mxu0 %v2578
    %4112 = vmatprep.subr.bf16.mxu0 %v2583
    %4113 = vmatpush1.bf16.msra.mxu0 %v2582
    %4114 = vmatprep.subr.bf16.mxu0 %v2587
    %4115 = vmatpush1.bf16.msra.mxu0 %v2586
    %4116 = vmatprep.subr.bf16.mxu0 %v2591
    %4117 = vmatpush1.bf16.msra.mxu0 %v2590
    %4118 = vmatprep.subr.bf16.mxu0 %v2595
    %4119 = vmatpush1.bf16.msra.mxu0 %v2594
    %4120 = vmatprep.subr.bf16.mxu0 %v2599
    %4121 = vmatpush1.bf16.msra.mxu0 %v2598
    %4122 = vmatprep.subr.bf16.mxu0 %v2603
    %4123 = vmatpush1.bf16.msra.mxu0 %v2602
    %4124 = vmatprep.subr.bf16.mxu0 %v2607
    %4125 = vmatpush1.bf16.msra.mxu0 %v2606
    %4126 = vmatprep.subr.bf16.mxu0 %v2611
    %4127 = vmatpush1.bf16.msra.mxu0 %v2610
    %4128 = vmatprep.subr.bf16.mxu0 %v2615
    %4129 = vmatpush1.bf16.msra.mxu0 %v2614
    %4130 = vmatprep.subr.bf16.mxu0 %v2619
    %4131 = vmatpush1.bf16.msra.mxu0 %v2618
    %4132 = vmatprep.subr.bf16.mxu0 %v2623
    %4133 = vmatpush1.bf16.msra.mxu0 %v2622
    %4134 = vmatprep.subr.bf16.mxu0 %v2627
    %4135 = vmatpush1.bf16.msra.mxu0 %v2626
    %4136 = vmatprep.subr.bf16.mxu0 %v2631
    %4137 = vmatpush1.bf16.msra.mxu0 %v2630
    %4138 = vmatprep.subr.bf16.mxu0 %v2635
    %4139 = vmatpush1.bf16.msra.mxu0 %v2634
    %4140 = vmatprep.subr.bf16.mxu0 %v2639
    %4141 = vmatpush1.bf16.msra.mxu0 %v2638
    %4142 = vmatprep.mubr.bf16.mxu0 %v4105
    %4143 = vmatmul.mubr.bf16.gmra.mrb[0].mxu0 %v4104
    %v4144 = vpop.f32.mrb[0].mxu0
    %v4145 = vadd.f32 0.0, %v4144
    %v4146 = vpop.f32.mrb[0].mxu0
    %v4147 = vadd.f32 0.0, %v4146
    %v4148 = vpop.f32.mrb[0].mxu0
    %v4149 = vadd.f32 0.0, %v4148
    %v4150 = vpop.f32.mrb[0].mxu0
    %v4151 = vadd.f32 0.0, %v4150
    %4152 = vdwg.mxu0
    %4153 = vmatprep.subr.bf16.mxu0 %v2643
    %4154 = vmatpush1.bf16.msra.mxu0 %v2642
    %4155 = vmatprep.subr.bf16.mxu0 %v2647
    %4156 = vmatpush1.bf16.msra.mxu0 %v2646
    %4157 = vmatprep.subr.bf16.mxu0 %v2651
    %4158 = vmatpush1.bf16.msra.mxu0 %v2650
    %4159 = vmatprep.subr.bf16.mxu0 %v2655
    %4160 = vmatpush1.bf16.msra.mxu0 %v2654
    %4161 = vmatprep.subr.bf16.mxu0 %v2659
    %4162 = vmatpush1.bf16.msra.mxu0 %v2658
    %4163 = vmatprep.subr.bf16.mxu0 %v2663
    %4164 = vmatpush1.bf16.msra.mxu0 %v2662
    %4165 = vmatprep.subr.bf16.mxu0 %v2667
    %4166 = vmatpush1.bf16.msra.mxu0 %v2666
    %4167 = vmatprep.subr.bf16.mxu0 %v2671
    %4168 = vmatpush1.bf16.msra.mxu0 %v2670
    %4169 = vmatprep.subr.bf16.mxu0 %v2675
    %4170 = vmatpush1.bf16.msra.mxu0 %v2674
    %4171 = vmatprep.subr.bf16.mxu0 %v2679
    %4172 = vmatpush1.bf16.msra.mxu0 %v2678
    %4173 = vmatprep.subr.bf16.mxu0 %v2683
    %4174 = vmatpush1.bf16.msra.mxu0 %v2682
    %4175 = vmatprep.subr.bf16.mxu0 %v2687
    %4176 = vmatpush1.bf16.msra.mxu0 %v2686
    %4177 = vmatprep.subr.bf16.mxu0 %v2691
    %4178 = vmatpush1.bf16.msra.mxu0 %v2690
    %4179 = vmatprep.subr.bf16.mxu0 %v2695
    %4180 = vmatpush1.bf16.msra.mxu0 %v2694
    %4181 = vmatprep.subr.bf16.mxu0 %v2699
    %4182 = vmatpush1.bf16.msra.mxu0 %v2698
    %4183 = vmatprep.subr.bf16.mxu0 %v2703
    %4184 = vmatpush1.bf16.msra.mxu0 %v2702
    %4185 = vmatprep.mubr.bf16.mxu0 %v4107
    %4186 = vmatmul.mubr.bf16.gmra.mrb[0].mxu0 %v4106
    %v4187 = vpop.f32.mrb[0].mxu0
    %v4188 = vadd.f32 %v4145, %v4187
    %v4189 = vpop.f32.mrb[0].mxu0
    %v4190 = vadd.f32 %v4147, %v4189
    %v4191 = vpop.f32.mrb[0].mxu0
    %v4192 = vadd.f32 %v4149, %v4191
    %v4193 = vpop.f32.mrb[0].mxu0
    %v4194 = vadd.f32 %v4151, %v4193
    %4195 = vdwg.mxu0
    %4196 = vmatprep.subr.bf16.mxu0 %v2707
    %4197 = vmatpush1.bf16.msra.mxu0 %v2706
    %4198 = vmatprep.subr.bf16.mxu0 %v2711
    %4199 = vmatpush1.bf16.msra.mxu0 %v2710
    %4200 = vmatprep.subr.bf16.mxu0 %v2715
    %4201 = vmatpush1.bf16.msra.mxu0 %v2714
    %4202 = vmatprep.subr.bf16.mxu0 %v2719
    %4203 = vmatpush1.bf16.msra.mxu0 %v2718
    %4204 = vmatprep.subr.bf16.mxu0 %v2723
    %4205 = vmatpush1.bf16.msra.mxu0 %v2722
    %4206 = vmatprep.subr.bf16.mxu0 %v2727
    %4207 = vmatpush1.bf16.msra.mxu0 %v2726
    %4208 = vmatprep.subr.bf16.mxu0 %v2731
    %4209 = vmatpush1.bf16.msra.mxu0 %v2730
    %4210 = vmatprep.subr.bf16.mxu0 %v2735
    %4211 = vmatpush1.bf16.msra.mxu0 %v2734
    %4212 = vmatprep.subr.bf16.mxu0 %v2739
    %4213 = vmatpush1.bf16.msra.mxu0 %v2738
    %4214 = vmatprep.subr.bf16.mxu0 %v2743
    %4215 = vmatpush1.bf16.msra.mxu0 %v2742
    %4216 = vmatprep.subr.bf16.mxu0 %v2747
    %4217 = vmatpush1.bf16.msra.mxu0 %v2746
    %4218 = vmatprep.subr.bf16.mxu0 %v2751
    %4219 = vmatpush1.bf16.msra.mxu0 %v2750
    %4220 = vmatprep.subr.bf16.mxu0 %v2755
    %4221 = vmatpush1.bf16.msra.mxu0 %v2754
    %4222 = vmatprep.subr.bf16.mxu0 %v2759
    %4223 = vmatpush1.bf16.msra.mxu0 %v2758
    %4224 = vmatprep.subr.bf16.mxu0 %v2763
    %4225 = vmatpush1.bf16.msra.mxu0 %v2762
    %4226 = vmatprep.subr.bf16.mxu0 %v2767
    %4227 = vmatpush1.bf16.msra.mxu0 %v2766
    %4228 = vmatprep.mubr.bf16.mxu0 %v4109
    %4229 = vmatmul.mubr.bf16.gmra.mrb[0].mxu0 %v4108
    %v4230 = vpop.f32.mrb[0].mxu0
    %v4231 = vadd.f32 %v4188, %v4230
    %v4232 = vpop.f32.mrb[0].mxu0
    %v4233 = vadd.f32 %v4190, %v4232
    %v4234 = vpop.f32.mrb[0].mxu0
    %v4235 = vadd.f32 %v4192, %v4234
    %v4236 = vpop.f32.mrb[0].mxu0
    %v4237 = vadd.f32 %v4194, %v4236
    %4238 = vdwg.mxu0
    %4239 = vmatprep.subr.bf16.mxu0 %v2581
    %4240 = vmatpush1.bf16.msra.mxu0 %v2580
    %4241 = vmatprep.subr.bf16.mxu0 %v2585
    %4242 = vmatpush1.bf16.msra.mxu0 %v2584
    %4243 = vmatprep.subr.bf16.mxu0 %v2589
    %4244 = vmatpush1.bf16.msra.mxu0 %v2588
    %4245 = vmatprep.subr.bf16.mxu0 %v2593
    %4246 = vmatpush1.bf16.msra.mxu0 %v2592
    %4247 = vmatprep.subr.bf16.mxu0 %v2597
    %4248 = vmatpush1.bf16.msra.mxu0 %v2596
    %4249 = vmatprep.subr.bf16.mxu0 %v2601
    %4250 = vmatpush1.bf16.msra.mxu0 %v2600
    %4251 = vmatprep.subr.bf16.mxu0 %v2605
    %4252 = vmatpush1.bf16.msra.mxu0 %v2604
    %4253 = vmatprep.subr.bf16.mxu0 %v2609
    %4254 = vmatpush1.bf16.msra.mxu0 %v2608
    %4255 = vmatprep.subr.bf16.mxu0 %v2613
    %4256 = vmatpush1.bf16.msra.mxu0 %v2612
    %4257 = vmatprep.subr.bf16.mxu0 %v2617
    %4258 = vmatpush1.bf16.msra.mxu0 %v2616
    %4259 = vmatprep.subr.bf16.mxu0 %v2621
    %4260 = vmatpush1.bf16.msra.mxu0 %v2620
    %4261 = vmatprep.subr.bf16.mxu0 %v2625
    %4262 = vmatpush1.bf16.msra.mxu0 %v2624
    %4263 = vmatprep.subr.bf16.mxu0 %v2629
    %4264 = vmatpush1.bf16.msra.mxu0 %v2628
    %4265 = vmatprep.subr.bf16.mxu0 %v2633
    %4266 = vmatpush1.bf16.msra.mxu0 %v2632
    %4267 = vmatprep.subr.bf16.mxu0 %v2637
    %4268 = vmatpush1.bf16.msra.mxu0 %v2636
    %4269 = vmatprep.subr.bf16.mxu0 %v2641
    %4270 = vmatpush1.bf16.msra.mxu0 %v2640
    %4271 = vmatprep.mubr.bf16.mxu0 %v4105
    %4272 = vmatmul.mubr.bf16.gmra.mrb[0].mxu0 %v4104
    %v4273 = vpop.f32.mrb[0].mxu0
    %v4274 = vadd.f32 0.0, %v4273
    %v4275 = vpop.f32.mrb[0].mxu0
    %v4276 = vadd.f32 0.0, %v4275
    %v4277 = vpop.f32.mrb[0].mxu0
    %v4278 = vadd.f32 0.0, %v4277
    %v4279 = vpop.f32.mrb[0].mxu0
    %v4280 = vadd.f32 0.0, %v4279
    %4281 = vdwg.mxu0
    %4282 = vmatprep.subr.bf16.mxu0 %v2645
    %4283 = vmatpush1.bf16.msra.mxu0 %v2644
    %4284 = vmatprep.subr.bf16.mxu0 %v2649
    %4285 = vmatpush1.bf16.msra.mxu0 %v2648
    %4286 = vmatprep.subr.bf16.mxu0 %v2653
    %4287 = vmatpush1.bf16.msra.mxu0 %v2652
    %4288 = vmatprep.subr.bf16.mxu0 %v2657
    %4289 = vmatpush1.bf16.msra.mxu0 %v2656
    %4290 = vmatprep.subr.bf16.mxu0 %v2661
    %4291 = vmatpush1.bf16.msra.mxu0 %v2660
    %4292 = vmatprep.subr.bf16.mxu0 %v2665
    %4293 = vmatpush1.bf16.msra.mxu0 %v2664
    %4294 = vmatprep.subr.bf16.mxu0 %v2669
    %4295 = vmatpush1.bf16.msra.mxu0 %v2668
    %4296 = vmatprep.subr.bf16.mxu0 %v2673
    %4297 = vmatpush1.bf16.msra.mxu0 %v2672
    %4298 = vmatprep.subr.bf16.mxu0 %v2677
    %4299 = vmatpush1.bf16.msra.mxu0 %v2676
    %4300 = vmatprep.subr.bf16.mxu0 %v2681
    %4301 = vmatpush1.bf16.msra.mxu0 %v2680
    %4302 = vmatprep.subr.bf16.mxu0 %v2685
    %4303 = vmatpush1.bf16.msra.mxu0 %v2684
    %4304 = vmatprep.subr.bf16.mxu0 %v2689
    %4305 = vmatpush1.bf16.msra.mxu0 %v2688
    %4306 = vmatprep.subr.bf16.mxu0 %v2693
    %4307 = vmatpush1.bf16.msra.mxu0 %v2692
    %4308 = vmatprep.subr.bf16.mxu0 %v2697
    %4309 = vmatpush1.bf16.msra.mxu0 %v2696
    %4310 = vmatprep.subr.bf16.mxu0 %v2701
    %4311 = vmatpush1.bf16.msra.mxu0 %v2700
    %4312 = vmatprep.subr.bf16.mxu0 %v2705
    %4313 = vmatpush1.bf16.msra.mxu0 %v2704
    %4314 = vmatprep.mubr.bf16.mxu0 %v4107
    %4315 = vmatmul.mubr.bf16.gmra.mrb[0].mxu0 %v4106
    %v4316 = vpop.f32.mrb[0].mxu0
    %v4317 = vadd.f32 %v4274, %v4316
    %v4318 = vpop.f32.mrb[0].mxu0
    %v4319 = vadd.f32 %v4276, %v4318
    %v4320 = vpop.f32.mrb[0].mxu0
    %v4321 = vadd.f32 %v4278, %v4320
    %v4322 = vpop.f32.mrb[0].mxu0
    %v4323 = vadd.f32 %v4280, %v4322
    %4324 = vdwg.mxu0
    %4325 = vmatprep.subr.bf16.mxu0 %v2709
    %4326 = vmatpush1.bf16.msra.mxu0 %v2708
    %4327 = vmatprep.subr.bf16.mxu0 %v2713
    %4328 = vmatpush1.bf16.msra.mxu0 %v2712
    %4329 = vmatprep.subr.bf16.mxu0 %v2717
    %4330 = vmatpush1.bf16.msra.mxu0 %v2716
    %4331 = vmatprep.subr.bf16.mxu0 %v2721
    %4332 = vmatpush1.bf16.msra.mxu0 %v2720
    %4333 = vmatprep.subr.bf16.mxu0 %v2725
    %4334 = vmatpush1.bf16.msra.mxu0 %v2724
    %4335 = vmatprep.subr.bf16.mxu0 %v2729
    %4336 = vmatpush1.bf16.msra.mxu0 %v2728
    %4337 = vmatprep.subr.bf16.mxu0 %v2733
    %4338 = vmatpush1.bf16.msra.mxu0 %v2732
    %4339 = vmatprep.subr.bf16.mxu0 %v2737
    %4340 = vmatpush1.bf16.msra.mxu0 %v2736
    %4341 = vmatprep.subr.bf16.mxu0 %v2741
    %4342 = vmatpush1.bf16.msra.mxu0 %v2740
    %4343 = vmatprep.subr.bf16.mxu0 %v2745
    %4344 = vmatpush1.bf16.msra.mxu0 %v2744
    %4345 = vmatprep.subr.bf16.mxu0 %v2749
    %4346 = vmatpush1.bf16.msra.mxu0 %v2748
    %4347 = vmatprep.subr.bf16.mxu0 %v2753
    %4348 = vmatpush1.bf16.msra.mxu0 %v2752
    %4349 = vmatprep.subr.bf16.mxu0 %v2757
    %4350 = vmatpush1.bf16.msra.mxu0 %v2756
    %4351 = vmatprep.subr.bf16.mxu0 %v2761
    %4352 = vmatpush1.bf16.msra.mxu0 %v2760
    %4353 = vmatprep.subr.bf16.mxu0 %v2765
    %4354 = vmatpush1.bf16.msra.mxu0 %v2764
    %4355 = vmatprep.subr.bf16.mxu0 %v2769
    %4356 = vmatpush1.bf16.msra.mxu0 %v2768
    %4357 = vmatprep.mubr.bf16.mxu0 %v4109
    %4358 = vmatmul.mubr.bf16.gmra.mrb[0].mxu0 %v4108
    %v4359 = vpop.f32.mrb[0].mxu0
    %v4360 = vadd.f32 %v4317, %v4359
    %v4361 = vpop.f32.mrb[0].mxu0
    %v4362 = vadd.f32 %v4319, %v4361
    %v4363 = vpop.f32.mrb[0].mxu0
    %v4364 = vadd.f32 %v4321, %v4363
    %v4365 = vpop.f32.mrb[0].mxu0
    %v4366 = vadd.f32 %v4323, %v4365
    %4367 = vdwg.mxu0
    %v4368 = vmax.f32 %v4231, %v4233
    %v4369 = vmax.f32 %v4235, %v4237
    %v4370 = vmax.f32 %v4360, %v4362
    %v4371 = vmax.f32 %v4364, %v4366
    %v4372 = vmax.f32 %v4368, %v4370
    %v4373 = vmax.f32 %v4369, %v4371
    %v4374 = vadd.f32 %v4372, %v3230
    %v4375 = vadd.f32 %v4373, %v3230
    %v4376 = vmax.f32 %v4374, 0.0
    %v4377 = vmax.f32 %v4375, 0.0
    %v4378 = vpack.c.bf16 %v4377, %v4376
    %v4379 = vld [vmem:[#allocation7 + $0xc0] sm:$0xf]
    %v4380 = vld [vmem:[#allocation7 + $0xc4] sm:$0xf]
    %v4381 = vld [vmem:[#allocation7 + $0xc8] sm:$0xf]
    %v4382 = vld [vmem:[#allocation7 + $0xcc] sm:$0xf]
    %v4383 = vld [vmem:[#allocation7 + $0xd0] sm:$0xf]
    %v4384 = vld [vmem:[#allocation7 + $0xd4] sm:$0xf]
    %v4385 = vld [vmem:[#allocation7 + $0xd8] sm:$0xf]
    %v4386 = vld [vmem:[#allocation7 + $0xdc] sm:$0xf]
    %v4387 = vld [vmem:[#allocation7 + $0xe0] sm:$0xf]
    %v4388 = vld [vmem:[#allocation7 + $0xe4] sm:$0xf]
    %v4389 = vld [vmem:[#allocation7 + $0xe8] sm:$0xf]
    %v4390 = vld [vmem:[#allocation7 + $0xec] sm:$0xf]
    %v4391 = vld [vmem:[#allocation7 + $0xf0] sm:$0xf]
    %v4392 = vld [vmem:[#allocation7 + $0xf4] sm:$0xf]
    %v4393 = vld [vmem:[#allocation7 + $0xf8] sm:$0xf]
    %v4394 = vld [vmem:[#allocation7 + $0xfc] sm:$0xf]
    %v4411 = vunpack.c.l.b16 %v4379
    %v4412 = vunpack.c.l.b16 %v4380
    %v4413 = vunpack.c.l.b16 %v4381
    %v4414 = vunpack.c.l.b16 %v4382
    %v4415 = vunpack.c.l.b16 %v4383
    %v4416 = vunpack.c.l.b16 %v4384
    %v4417 = vunpack.c.l.b16 %v4385
    %v4418 = vunpack.c.l.b16 %v4386
    %v4419 = vunpack.c.l.b16 %v4387
    %v4420 = vunpack.c.l.b16 %v4388
    %v4421 = vunpack.c.l.b16 %v4389
    %v4422 = vunpack.c.l.b16 %v4390
    %v4423 = vunpack.c.l.b16 %v4391
    %v4424 = vunpack.c.l.b16 %v4392
    %v4425 = vunpack.c.l.b16 %v4393
    %v4426 = vunpack.c.l.b16 %v4394
    %v4427 = vpack.c.b16 %v4412, %v4411
    %v4428 = vpack.c.b16 %v4414, %v4413
    %v4429 = vpack.c.b16 %v4416, %v4415
    %v4430 = vpack.c.b16 %v4418, %v4417
    %v4431 = vpack.c.b16 %v4420, %v4419
    %v4432 = vpack.c.b16 %v4422, %v4421
    %v4433 = vpack.c.b16 %v4424, %v4423
    %v4434 = vpack.c.b16 %v4426, %v4425
    %4443 = vmatprep.subr.bf16.mxu0 0
    %4444 = vmatpush1.bf16.msra.mxu0 %v4427
    %4445 = vmatprep.subr.bf16.mxu0 0
    %4446 = vmatpush1.bf16.msra.mxu0 %v4428
    %4447 = vmatprep.subr.bf16.mxu0 0
    %4448 = vmatpush1.bf16.msra.mxu0 %v4429
    %4449 = vmatprep.subr.bf16.mxu0 0
    %4450 = vmatpush1.bf16.msra.mxu0 %v4430
    %4451 = vmatprep.subr.bf16.mxu0 0
    %4452 = vmatpush1.bf16.msra.mxu0 %v4431
    %4453 = vmatprep.subr.bf16.mxu0 0
    %4454 = vmatpush1.bf16.msra.mxu0 %v4432
    %4455 = vmatprep.subr.bf16.mxu0 0
    %4456 = vmatpush1.bf16.msra.mxu0 %v4433
    %4457 = vmatprep.subr.bf16.mxu0 0
    %4458 = vmatpush1.bf16.msra.mxu0 %v4434
    %4459 = vmatprep.subr.bf16.mxu0 0
    %4460 = vmatpush1.bf16.msra.mxu0 0
    %4461 = vmatprep.subr.bf16.mxu0 0
    %4462 = vmatpush1.bf16.msra.mxu0 0
    %4463 = vmatprep.subr.bf16.mxu0 0
    %4464 = vmatpush1.bf16.msra.mxu0 0
    %4465 = vmatprep.subr.bf16.mxu0 0
    %4466 = vmatpush1.bf16.msra.mxu0 0
    %4467 = vmatprep.subr.bf16.mxu0 0
    %4468 = vmatpush1.bf16.msra.mxu0 0
    %4469 = vmatprep.subr.bf16.mxu0 0
    %4470 = vmatpush1.bf16.msra.mxu0 0
    %4471 = vmatprep.subr.bf16.mxu0 0
    %4472 = vmatpush1.bf16.msra.mxu0 0
    %4473 = vmatprep.subr.bf16.mxu0 0
    %4474 = vmatpush1.bf16.msra.mxu0 0
    %4475 = vmatprep.mubr.bf16.mxu0 0
    %4476 = vmatmul.mubr.bf16.gmra.mrb[0].mxu0 %v4378
    %v4477 = vpop.f32.mrb[0].mxu0
    %v4478 = vadd.f32 0.0, %v4477
    %v4479 = vpop.f32.mrb[0].mxu0
    %v4480 = vpop.f32.mrb[0].mxu0
    %v4481 = vadd.f32 0.0, %v4480
    %v4482 = vpop.f32.mrb[0].mxu0
    %4483 = vdwg.mxu0
    %v4484 = vadd.f32 %v4102, %v4478
    %v4485 = vadd.f32 %v4103, %v4481
    %v4486 = vld [vmem:[%s6] sm:$0x1]
    %v4488 = vlaneseq
    %v4489 = vshrl.u32 %v4488, 7
    %v4490 = vsub.s32 0, %v4489
    %v4491 = vrot.slane %v4486, %v4490
    %v4493 = vadd.f32 %v4484, %v4491
    %v4494 = vadd.f32 %v4485, %v4491
    %v4495 = vmax.f32 %v4493, 0.0
    %v4496 = vmax.f32 %v4494, 0.0
    %v4497 = vpack.c.bf16 %v4496, %v4495
    %v4498 = vld [vmem:[%s7] sm:$0xf]
    %v4499 = vld [vmem:[%s7 + $0x4] sm:$0xf]
    %v4500 = vld [vmem:[%s7 + $0x8] sm:$0xf]
    %v4501 = vld [vmem:[%s7 + $0xc] sm:$0xf]
    %v4502 = vld [vmem:[%s7 + $0x10] sm:$0xf]
    %v4503 = vld [vmem:[%s7 + $0x14] sm:$0xf]
    %v4504 = vld [vmem:[%s7 + $0x18] sm:$0xf]
    %v4505 = vld [vmem:[%s7 + $0x1c] sm:$0xf]
    %v4506 = vld [vmem:[%s7 + $0x20] sm:$0xf]
    %v4507 = vld [vmem:[%s7 + $0x24] sm:$0xf]
    %v4508 = vld [vmem:[%s7 + $0x28] sm:$0xf]
    %v4509 = vld [vmem:[%s7 + $0x2c] sm:$0xf]
    %v4510 = vld [vmem:[%s7 + $0x30] sm:$0xf]
    %v4511 = vld [vmem:[%s7 + $0x34] sm:$0xf]
    %v4512 = vld [vmem:[%s7 + $0x38] sm:$0xf]
    %v4513 = vld [vmem:[%s7 + $0x3c] sm:$0xf]
    %v4514 = vld [vmem:[%s8] sm:$0x1]
    %v4516 = vlaneseq
    %v4517 = vshrl.u32 %v4516, 7
    %v4518 = vsub.s32 0, %v4517
    %v4519 = vrot.slane %v4514, %v4518
    %v4537 = vunpack.c.l.b16 %v4498
    %v4538 = vunpack.c.l.b16 %v4499
    %v4539 = vunpack.c.l.b16 %v4500
    %v4540 = vunpack.c.l.b16 %v4501
    %v4541 = vunpack.c.l.b16 %v4502
    %v4542 = vunpack.c.l.b16 %v4503
    %v4543 = vunpack.c.l.b16 %v4504
    %v4544 = vunpack.c.l.b16 %v4505
    %v4545 = vunpack.c.l.b16 %v4506
    %v4546 = vunpack.c.l.b16 %v4507
    %v4547 = vunpack.c.l.b16 %v4508
    %v4548 = vunpack.c.l.b16 %v4509
    %v4549 = vunpack.c.l.b16 %v4510
    %v4550 = vunpack.c.l.b16 %v4511
    %v4551 = vunpack.c.l.b16 %v4512
    %v4552 = vunpack.c.l.b16 %v4513
    %v4553 = vpack.c.b16 %v4538, %v4537
    %v4554 = vpack.c.b16 %v4540, %v4539
    %v4555 = vpack.c.b16 %v4542, %v4541
    %v4556 = vpack.c.b16 %v4544, %v4543
    %v4557 = vpack.c.b16 %v4546, %v4545
    %v4558 = vpack.c.b16 %v4548, %v4547
    %v4559 = vpack.c.b16 %v4550, %v4549
    %v4560 = vpack.c.b16 %v4552, %v4551
    %4569 = vmatprep.subr.bf16.mxu0 0
    %4570 = vmatpush1.bf16.msra.mxu0 %v4553
    %4571 = vmatprep.subr.bf16.mxu0 0
    %4572 = vmatpush1.bf16.msra.mxu0 %v4554
    %4573 = vmatprep.subr.bf16.mxu0 0
    %4574 = vmatpush1.bf16.msra.mxu0 %v4555
    %4575 = vmatprep.subr.bf16.mxu0 0
    %4576 = vmatpush1.bf16.msra.mxu0 %v4556
    %4577 = vmatprep.subr.bf16.mxu0 0
    %4578 = vmatpush1.bf16.msra.mxu0 %v4557
    %4579 = vmatprep.subr.bf16.mxu0 0
    %4580 = vmatpush1.bf16.msra.mxu0 %v4558
    %4581 = vmatprep.subr.bf16.mxu0 0
    %4582 = vmatpush1.bf16.msra.mxu0 %v4559
    %4583 = vmatprep.subr.bf16.mxu0 0
    %4584 = vmatpush1.bf16.msra.mxu0 %v4560
    %4585 = vmatprep.subr.bf16.mxu0 0
    %4586 = vmatpush1.bf16.msra.mxu0 0
    %4587 = vmatprep.subr.bf16.mxu0 0
    %4588 = vmatpush1.bf16.msra.mxu0 0
    %4589 = vmatprep.subr.bf16.mxu0 0
    %4590 = vmatpush1.bf16.msra.mxu0 0
    %4591 = vmatprep.subr.bf16.mxu0 0
    %4592 = vmatpush1.bf16.msra.mxu0 0
    %4593 = vmatprep.subr.bf16.mxu0 0
    %4594 = vmatpush1.bf16.msra.mxu0 0
    %4595 = vmatprep.subr.bf16.mxu0 0
    %4596 = vmatpush1.bf16.msra.mxu0 0
    %4597 = vmatprep.subr.bf16.mxu0 0
    %4598 = vmatpush1.bf16.msra.mxu0 0
    %4599 = vmatprep.subr.bf16.mxu0 0
    %4600 = vmatpush1.bf16.msra.mxu0 0
    %4601 = vmatprep.mubr.bf16.mxu0 0
    %4602 = vmatmul.mubr.bf16.gmra.mrb[0].mxu0 %v4497
    %v4603 = vpop.f32.mrb[0].mxu0
    %v4604 = vadd.f32 %v4519, %v4603
    %v4605 = vpop.f32.mrb[0].mxu0
    %v4606 = vpop.f32.mrb[0].mxu0
    %v4607 = vadd.f32 %v4519, %v4606
    %v4608 = vpop.f32.mrb[0].mxu0
    %4609 = vdwg.mxu0
    %v4610 = vmax.f32 %v4604, 0.0
    %v4611 = vmax.f32 %v4607, 0.0
    %v4612 = vpack.c.bf16 %v4611, %v4610
    %v4613 = vld [vmem:[%s9] sm:$0xf]
    %v4614 = vld [vmem:[%s9 + $0x4] sm:$0xf]
    %v4615 = vld [vmem:[%s9 + $0x8] sm:$0xf]
    %v4616 = vld [vmem:[%s9 + $0xc] sm:$0xf]
    %v4617 = vld [vmem:[%s9 + $0x10] sm:$0xf]
    %v4618 = vld [vmem:[%s9 + $0x14] sm:$0xf]
    %v4619 = vld [vmem:[%s9 + $0x18] sm:$0xf]
    %v4620 = vld [vmem:[%s9 + $0x1c] sm:$0xf]
    %v4621 = vld [vmem:[%s9 + $0x20] sm:$0xf]
    %v4622 = vld [vmem:[%s9 + $0x24] sm:$0xf]
    %v4623 = vld [vmem:[%s9 + $0x28] sm:$0xf]
    %v4624 = vld [vmem:[%s9 + $0x2c] sm:$0xf]
    %v4625 = vld [vmem:[%s9 + $0x30] sm:$0xf]
    %v4626 = vld [vmem:[%s9 + $0x34] sm:$0xf]
    %v4627 = vld [vmem:[%s9 + $0x38] sm:$0xf]
    %v4628 = vld [vmem:[%s9 + $0x3c] sm:$0xf]
    %v4629 = vld [vmem:[%s10] sm:$0x1]
    %v4631 = vlaneseq
    %v4632 = vshrl.u32 %v4631, 7
    %v4633 = vsub.s32 0, %v4632
    %v4634 = vrot.slane %v4629, %v4633
    %v4652 = vunpack.c.l.b16 %v4613
    %v4653 = vunpack.c.l.b16 %v4614
    %v4654 = vunpack.c.l.b16 %v4615
    %v4655 = vunpack.c.l.b16 %v4616
    %v4656 = vunpack.c.l.b16 %v4617
    %v4657 = vunpack.c.l.b16 %v4618
    %v4658 = vunpack.c.l.b16 %v4619
    %v4659 = vunpack.c.l.b16 %v4620
    %v4660 = vunpack.c.l.b16 %v4621
    %v4661 = vunpack.c.l.b16 %v4622
    %v4662 = vunpack.c.l.b16 %v4623
    %v4663 = vunpack.c.l.b16 %v4624
    %v4664 = vunpack.c.l.b16 %v4625
    %v4665 = vunpack.c.l.b16 %v4626
    %v4666 = vunpack.c.l.b16 %v4627
    %v4667 = vunpack.c.l.b16 %v4628
    %v4668 = vpack.c.b16 %v4653, %v4652
    %v4669 = vpack.c.b16 %v4655, %v4654
    %v4670 = vpack.c.b16 %v4657, %v4656
    %v4671 = vpack.c.b16 %v4659, %v4658
    %v4672 = vpack.c.b16 %v4661, %v4660
    %v4673 = vpack.c.b16 %v4663, %v4662
    %v4674 = vpack.c.b16 %v4665, %v4664
    %v4675 = vpack.c.b16 %v4667, %v4666
    %4684 = vmatprep.subr.bf16.mxu0 0
    %4685 = vmatpush1.bf16.msra.mxu0 %v4668
    %4686 = vmatprep.subr.bf16.mxu0 0
    %4687 = vmatpush1.bf16.msra.mxu0 %v4669
    %4688 = vmatprep.subr.bf16.mxu0 0
    %4689 = vmatpush1.bf16.msra.mxu0 %v4670
    %4690 = vmatprep.subr.bf16.mxu0 0
    %4691 = vmatpush1.bf16.msra.mxu0 %v4671
    %4692 = vmatprep.subr.bf16.mxu0 0
    %4693 = vmatpush1.bf16.msra.mxu0 %v4672
    %4694 = vmatprep.subr.bf16.mxu0 0
    %4695 = vmatpush1.bf16.msra.mxu0 %v4673
    %4696 = vmatprep.subr.bf16.mxu0 0
    %4697 = vmatpush1.bf16.msra.mxu0 %v4674
    %4698 = vmatprep.subr.bf16.mxu0 0
    %4699 = vmatpush1.bf16.msra.mxu0 %v4675
    %4700 = vmatprep.subr.bf16.mxu0 0
    %4701 = vmatpush1.bf16.msra.mxu0 0
    %4702 = vmatprep.subr.bf16.mxu0 0
    %4703 = vmatpush1.bf16.msra.mxu0 0
    %4704 = vmatprep.subr.bf16.mxu0 0
    %4705 = vmatpush1.bf16.msra.mxu0 0
    %4706 = vmatprep.subr.bf16.mxu0 0
    %4707 = vmatpush1.bf16.msra.mxu0 0
    %4708 = vmatprep.subr.bf16.mxu0 0
    %4709 = vmatpush1.bf16.msra.mxu0 0
    %4710 = vmatprep.subr.bf16.mxu0 0
    %4711 = vmatpush1.bf16.msra.mxu0 0
    %4712 = vmatprep.subr.bf16.mxu0 0
    %4713 = vmatpush1.bf16.msra.mxu0 0
    %4714 = vmatprep.subr.bf16.mxu0 0
    %4715 = vmatpush1.bf16.msra.mxu0 0
    %4716 = vmatprep.mubr.bf16.mxu0 0
    %4717 = vmatmul.mubr.bf16.gmra.mrb[0].mxu0 %v4612
    %v4718 = vpop.f32.mrb[0].mxu0
    %v4719 = vadd.f32 %v4634, %v4718
    %v4720 = vpop.f32.mrb[0].mxu0
    %v4721 = vpop.f32.mrb[0].mxu0
    %v4722 = vadd.f32 %v4634, %v4721
    %v4723 = vpop.f32.mrb[0].mxu0
    %4724 = vdwg.mxu0
    %4725 = vst [vmem:[%s11] sm:$0xff] %v4719
    %4726 = vst [vmem:[%s11 + $0x8] sm:$0xff] %v4722
    // Predicated region
    $region58: #{lenet_forward.1} parent=1 // pred_check
      _
    $region59: #{lenet_forward.1} parent=1 // pred_check_branch
      %4728 = sbr.rel (0) target = $region61
    $region60: #{lenet_forward.1} parent=1 // pred_region
      _
    $region61: #{lenet_forward.1} parent=1 // pred_fallthru
      _
    // Predicated region
    $region62: #{lenet_forward.1} parent=1 // pred_check
      _
    $region63: #{lenet_forward.1} parent=1 // pred_check_branch
      %4730 = sbr.rel (0) target = $region65
    $region64: #{lenet_forward.1} parent=1 // pred_region
      _
    $region65: #{lenet_forward.1} parent=1 // pred_fallthru
      _
    %4731 = vsyncpa [#allocation4], 1
    %4732 = vsyncpa [#allocation6], 1

</llo_original>
